<compile_context>
chip_gen: v6e
topology: v6e:2x2x1
jax: 0.10.0
libtpu: 0.0.40
codegen_flags: <defaults>
</compile_context>

<pallas_src>
import functools

import jax
import jax.numpy as jnp
from jax.experimental import pallas as pl
from jax.experimental.pallas import tpu as pltpu


# ----------------------------------------------------------------------------
# Hardware heuristics
# ----------------------------------------------------------------------------
_MAX_WEIGHT_TILE_BYTES = 4 * 1024 * 1024      # per weight buffer (double-buffered)
_PER_TC_VMEM_CAP = 64 * 1024 * 1024           # safe per-TensorCore VMEM ceiling


def _num_tensorcores_per_chip():
    """Best-effort detection of multi-TensorCore (megacore-style) chips."""
    try:
        kind = jax.devices()[0].device_kind.lower()
    except Exception:
        return 1
    if "v7" in kind or "v4" in kind or "v5p" in kind:
        return 2
    return 1


def _pick_tiles(K, N, *, n_tc, itemsize):
    """Pick (tn, tk) for the streamed weight tile.

    - tn is lane-dense (multiple of 128).  N is split in two only when more
      than one TensorCore can shard the "parallel" axis; otherwise full-N
      tiles give contiguous weight DMAs and fewer grid steps.
    - tk keeps the weight tile under _MAX_WEIGHT_TILE_BYTES.  A block equal to
      the full array dim is always legal, so tk falls back to K whenever K
      cannot be split into 128-multiples (general inp_size = 2*N*D).
    """
    tn = N
    if n_tc > 1 and N >= 1024 and (N // 2) % 128 == 0:
        tn = N // 2

    def fits(tk_, tn_):
        return tk_ * tn_ * itemsize <= _MAX_WEIGHT_TILE_BYTES

    tk = K
    while (not fits(tk, tn)) and tk % 2 == 0 and (tk // 2) % 128 == 0:
        tk //= 2
    while (not fits(tk, tn)) and tn % 2 == 0 and (tn // 2) % 128 == 0 and tn // 2 >= 512:
        tn //= 2
    return tn, tk


# ----------------------------------------------------------------------------
# Kernel 1: tiled Linear (+ optional ReLU):  out = relu(x @ W + b)
# grid = (N_tiles, K_tiles); K is the reduction axis (last, "arbitrary").
# Weights stream as bf16; accumulation is f32 on the MXU.
# ----------------------------------------------------------------------------
def _linear_kernel(x_ref, w_ref, b_ref, o_ref, acc_ref, *, relu):
    k = pl.program_id(1)

    @pl.when(k == 0)
    def _():
        acc_ref[...] = jnp.zeros_like(acc_ref)

    acc_ref[...] += jnp.dot(
        x_ref[...].astype(w_ref.dtype),
        w_ref[...],
        preferred_element_type=jnp.float32,
    )

    @pl.when(k == pl.num_programs(1) - 1)
    def _():
        out = acc_ref[...] + b_ref[...]          # b is (1, tn) -> broadcast
        if relu:
            out = jnp.maximum(out, 0.0)
        o_ref[...] = out.astype(o_ref.dtype)


def linear(x, w, b, *, relu, n_tc):
    M, K = x.shape
    Kw, Nout = w.shape
    assert K == Kw and b.shape == (1, Nout)

    w_itemsize = w.dtype.itemsize
    tn, tk = _pick_tiles(K, Nout, n_tc=n_tc, itemsize=w_itemsize)

    # Derive the VMEM limit from the actual buffer plan (double-buffered
    # inputs/outputs + resident accumulator), with slack, clamped per-TC.
    w_tile = tk * tn * w_itemsize
    x_tile = M * tk * x.dtype.itemsize
    b_tile = tn * b.dtype.itemsize
    o_tile = M * tn * 4
    plan = 2 * (w_tile + x_tile + b_tile + o_tile) + M * tn * 4
    vmem_limit = int(min(_PER_TC_VMEM_CAP,
                         max(plan * 3 // 2 + (4 << 20), 16 << 20)))

    kernel = functools.partial(_linear_kernel, relu=relu)
    return pl.pallas_call(
        kernel,
        out_shape=jax.ShapeDtypeStruct((M, Nout), jnp.float32),
        grid_spec=pltpu.PrefetchScalarGridSpec(
            num_scalar_prefetch=0,
            grid=(Nout // tn, K // tk),
            in_specs=[
                pl.BlockSpec((M, tk), lambda j, k: (0, k)),
                pl.BlockSpec((tk, tn), lambda j, k: (k, j)),
                pl.BlockSpec((1, tn), lambda j, k: (0, j)),
            ],
            out_specs=pl.BlockSpec((M, tn), lambda j, k: (0, j)),
            scratch_shapes=[pltpu.VMEM((M, tn), jnp.float32)],
        ),
        compiler_params=pltpu.CompilerParams(
            dimension_semantics=("parallel", "arbitrary"),
            vmem_limit_bytes=vmem_limit,
        ),
    )(x, w, b)


# ----------------------------------------------------------------------------
# Kernel 2: fused tail: (Linear+ReLU) x 4  ->  Linear  ->  Softmax(dim=1)
# All tail weights (<3 MiB f32) + the tiny activation live whole in VMEM; the
# call has no grid so nothing is double-buffered.
# ----------------------------------------------------------------------------
def _tail_kernel(*refs):
    # refs = (h_ref, w1, b1, ..., wL, bL, wc, bc, o_ref)
    h_ref = refs[0]
    o_ref = refs[-1]
    wb = refs[1:-1]
    n_pairs = len(wb) // 2

    h = h_ref[...]
    for i in range(n_pairs - 1):  # feature layers: Linear + ReLU
        w_ref, b_ref = wb[2 * i], wb[2 * i + 1]
        h = jnp.maximum(
            jnp.dot(h, w_ref[...], preferred_element_type=jnp.float32)
            + b_ref[...],
            0.0,
        )
    wc_ref, bc_ref = wb[-2], wb[-1]
    logits = (
        jnp.dot(h, wc_ref[...], preferred_element_type=jnp.float32)
        + bc_ref[...]
    )
    m = jnp.max(logits, axis=-1, keepdims=True)
    e = jnp.exp(logits - m)
    o_ref[...] = (e / jnp.sum(e, axis=-1, keepdims=True)).astype(o_ref.dtype)


def fused_tail(h, tail_layers, wc, bc):
    M, _ = h.shape
    args = [h]
    for w, b in list(tail_layers) + [(wc, bc)]:
        assert b.shape == (1, w.shape[1])
        args += [w, b]
    Nc = wc.shape[1]

    arg_bytes = sum(int(a.size) * a.dtype.itemsize for a in args)
    vmem_limit = int(min(_PER_TC_VMEM_CAP, arg_bytes + M * Nc * 4 + (8 << 20)))

    return pl.pallas_call(
        _tail_kernel,
        out_shape=jax.ShapeDtypeStruct((M, Nc), jnp.float32),
        in_specs=[pl.BlockSpec(memory_space=pltpu.MemorySpace.VMEM)
                  for _ in args],
        out_specs=pl.BlockSpec(memory_space=pltpu.MemorySpace.VMEM),
        compiler_params=pltpu.CompilerParams(vmem_limit_bytes=vmem_limit),
    )(*args)


# ----------------------------------------------------------------------------
# BaseMLP parameters + forward
# ----------------------------------------------------------------------------
def init_params(key, N, D):
    inp_size = 2 * N * D
    hidden_size = 128
    widths = [inp_size, 8192, 4096, 2048, 1024, 512, 256, 128, hidden_size]
    params = {"features": [], "classifier": None}
    for fan_in, fan_out in zip(widths[:-1], widths[1:]):
        key, kw, kb = jax.random.split(key, 3)
        w = jax.random.normal(kw, (fan_in, fan_out), jnp.float32) / jnp.sqrt(
            jnp.float32(fan_in)
        )
        b = 0.01 * jax.random.normal(kb, (fan_out,), jnp.float32)
        params["features"].append((w, b))
    key, kw, kb = jax.random.split(key, 3)
    wc = jax.random.normal(kw, (hidden_size, N), jnp.float32) / jnp.sqrt(
        jnp.float32(hidden_size)
    )
    bc = 0.01 * jax.random.normal(kb, (N,), jnp.float32)
    params["classifier"] = (wc, bc)
    return params


def prepare_params(params):
    """One-time layout/precision prep: bf16 weights for the 4 streamed layers,
    biases reshaped to (1, out) for clean 2-D BlockSpecs."""
    prepared = {"big": [], "tail": [], "classifier": None}
    for i, (w, b) in enumerate(params["features"]):
        b2 = b.reshape(1, -1)
        if i < 4:
            prepared["big"].append((w.astype(jnp.bfloat16), b2))
        else:
            prepared["tail"].append((w, b2))
    wc, bc = params["classifier"]
    prepared["classifier"] = (wc, bc.reshape(1, -1))
    return prepared


def base_mlp_forward(prepared, x, N, D, *, n_tc=None):
    if n_tc is None:
        n_tc = _num_tensorcores_per_chip()
    inp_size = 2 * N * D
    h = x.reshape(-1, inp_size)  # x.view(-1, inp_size)

    # Big, HBM-bound layers: inp -> 8192 -> 4096 -> 2048 -> 1024 (bf16 stream)
    for w, b in prepared["big"]:
        h = linear(h, w, b, relu=True, n_tc=n_tc)

    # Tiny tail: 1024 -> 512 -> 256 -> 128 -> 128 -> classifier -> softmax
    wc, bc = prepared["classifier"]
    return fused_tail(h, prepared["tail"], wc, bc)


# ----------------------------------------------------------------------------
# Pure-JAX references
# ----------------------------------------------------------------------------
def base_mlp_reference_f32(params, x, N, D):
    inp_size = 2 * N * D
    h = x.reshape(-1, inp_size)
    for w, b in params["features"]:
        h = jnp.maximum(h @ w + b, 0.0)
    wc, bc = params["classifier"]
    logits = h @ wc + bc
    return jax.nn.softmax(logits, axis=1)


def base_mlp_reference_bf16(params, x, N, D):
    """Matches the kernel's math: bf16 weights / bf16 activations into the
    first 4 matmuls, f32 accumulation, f32 everywhere else."""
    inp_size = 2 * N * D
    h = x.reshape(-1, inp_size)
    for i, (w, b) in enumerate(params["features"]):
        if i < 4:
            y = jnp.dot(h.astype(jnp.bfloat16), w.astype(jnp.bfloat16),
                        preferred_element_type=jnp.float32) + b
        else:
            y = h @ w + b
        h = jnp.maximum(y, 0.0)
    wc, bc = params["classifier"]
    logits = h @ wc + bc
    return jax.nn.softmax(logits, axis=1)


if __name__ == "__main__":
    N, D = 8, 8          # inp_size = 2*N*D = 128
    B = 8                # batch

    key = jax.random.PRNGKey(0)
    key, kx = jax.random.split(key)
    # x shaped like a (B, 2, N, D) pair tensor, flattened inside forward().
    x = jax.random.normal(kx, (B, 2, N, D), jnp.float32)

    params = init_params(key, N, D)
    prepared = prepare_params(params)

    out = base_mlp_forward(prepared, x, N, D)
    out = jax.block_until_ready(out)

    assert out.shape == (B, N)
    # Softmax rows sum to 1.
    assert jnp.allclose(jnp.sum(out, axis=1), 1.0, atol=1e-5)

    # Tight check against a reference that uses the same bf16 weight stream.
    ref_bf16 = base_mlp_reference_bf16(params, x, N, D)
    assert jnp.allclose(out, ref_bf16, atol=2e-3, rtol=2e-3), (
        float(jnp.max(jnp.abs(out - ref_bf16))))

    # Loose check against the exact f32 module semantics (bf16 weight
    # streaming intentionally perturbs numerics slightly).
    ref_f32 = base_mlp_reference_f32(params, x, N, D)
    assert jnp.allclose(out, ref_f32, atol=5e-2), (
        float(jnp.max(jnp.abs(out - ref_f32))))

    print("KERNEL_OK")
</pallas_src>

<mosaic_0001>
module attributes {stable_mosaic.version = 11 : i64} {
  func.func @_linear_kernel(%arg0: i32, %arg1: i32, %arg2: memref<8x128xf32, #tpu.memory_space<vmem>>, %arg3: memref<128x8192xbf16, #tpu.memory_space<vmem>>, %arg4: memref<1x8192xf32, #tpu.memory_space<vmem>>, %arg5: memref<8x8192xf32, #tpu.memory_space<vmem>>, %arg6: memref<8x8192xf32, #tpu.memory_space<vmem>>) attributes {dimension_semantics = [#tpu.dimension_semantics<parallel>, #tpu.dimension_semantics<arbitrary>], iteration_bounds = array<i64: 1, 1>, scalar_prefetch = 0 : i64, scratch_operands = 1 : i64, tpu.core_type = #tpu.core_type<tc>, window_params = [{transform_indices = @transform_0, window_bounds = array<i64: 8, 128>}, {transform_indices = @transform_1, window_bounds = array<i64: 128, 8192>}, {transform_indices = @transform_2, window_bounds = array<i64: 1, 8192>}, {transform_indices = @transform_3, window_bounds = array<i64: 8, 8192>}]} {
    %c0_i32 = arith.constant 0 : i32
    %0 = arith.cmpi eq, %arg1, %c0_i32 : i32
    %1 = arith.extui %0 : i1 to i32
    %c0_i32_0 = arith.constant 0 : i32
    %2 = arith.cmpi ne, %1, %c0_i32_0 : i32
    scf.if %2 {
      %cst_10 = arith.constant 0.000000e+00 : f32
      %13 = vector.broadcast %cst_10 : f32 to vector<8x8192xf32>
      %c0_11 = arith.constant 0 : index
      %c0_12 = arith.constant 0 : index
      %14 = vector.load %arg6[%c0_11, %c0_12] : memref<8x8192xf32, #tpu.memory_space<vmem>>, vector<8x8192xf32>
      tpu.vector_store %arg6[%c0_11, %c0_12], %13 {strides = array<i32>} : memref<8x8192xf32, #tpu.memory_space<vmem>>, vector<8x8192xf32>,
    } else {
    }
    %c0 = arith.constant 0 : index
    %c0_1 = arith.constant 0 : index
    %3 = vector.load %arg6[%c0, %c0_1] : memref<8x8192xf32, #tpu.memory_space<vmem>>, vector<8x8192xf32>
    %c0_2 = arith.constant 0 : index
    %c0_3 = arith.constant 0 : index
    %4 = vector.load %arg2[%c0_2, %c0_3] : memref<8x128xf32, #tpu.memory_space<vmem>>, vector<8x128xf32>
    %5 = arith.truncf %4 : vector<8x128xf32> to vector<8x128xbf16>
    %c0_4 = arith.constant 0 : index
    %c0_5 = arith.constant 0 : index
    %6 = vector.load %arg3[%c0_4, %c0_5] : memref<128x8192xbf16, #tpu.memory_space<vmem>>, vector<128x8192xbf16>
    %cst = arith.constant dense<0.000000e+00> : vector<8x8192xf32>
    %7 = tpu.matmul %5, %6, %cst {dimension_numbers = #tpu.dot_dimension_numbers<[1], [0], [0], [1], [0, 0, 1, 1], [], []>} : vector<8x128xbf16>, vector<128x8192xbf16>, vector<8x8192xf32> -> vector<8x8192xf32>
    %8 = arith.addf %3, %7 : vector<8x8192xf32>
    %c0_6 = arith.constant 0 : index
    %c0_7 = arith.constant 0 : index
    %9 = vector.load %arg6[%c0_6, %c0_7] : memref<8x8192xf32, #tpu.memory_space<vmem>>, vector<8x8192xf32>
    tpu.vector_store %arg6[%c0_6, %c0_7], %8 {strides = array<i32>} : memref<8x8192xf32, #tpu.memory_space<vmem>>, vector<8x8192xf32>,
    %c0_i32_8 = arith.constant 0 : i32
    %10 = arith.cmpi eq, %arg1, %c0_i32_8 : i32
    %11 = arith.extui %10 : i1 to i32
    %c0_i32_9 = arith.constant 0 : i32
    %12 = arith.cmpi ne, %11, %c0_i32_9 : i32
    scf.if %12 {
      %c0_10 = arith.constant 0 : index
      %c0_11 = arith.constant 0 : index
      %13 = vector.load %arg6[%c0_10, %c0_11] : memref<8x8192xf32, #tpu.memory_space<vmem>>, vector<8x8192xf32>
      %c0_12 = arith.constant 0 : index
      %c0_13 = arith.constant 0 : index
      %14 = vector.load %arg4[%c0_12, %c0_13] : memref<1x8192xf32, #tpu.memory_space<vmem>>, vector<1x8192xf32>
      %15 = vector.broadcast %14 : vector<1x8192xf32> to vector<8x8192xf32>
      %16 = arith.addf %13, %15 : vector<8x8192xf32>
      %cst_14 = arith.constant 0.000000e+00 : f32
      %17 = vector.broadcast %cst_14 : f32 to vector<8x8192xf32>
      %18 = arith.maximumf %16, %17 : vector<8x8192xf32>
      %c0_15 = arith.constant 0 : index
      %c0_16 = arith.constant 0 : index
      %19 = vector.load %arg5[%c0_15, %c0_16] : memref<8x8192xf32, #tpu.memory_space<vmem>>, vector<8x8192xf32>
      tpu.vector_store %arg5[%c0_15, %c0_16], %18 {strides = array<i32>} : memref<8x8192xf32, #tpu.memory_space<vmem>>, vector<8x8192xf32>,
    } else {
    }
    return
  }
  func.func @transform_0(%arg0: i32, %arg1: i32) -> (i32, i32) {
    %c0_i32 = arith.constant 0 : i32
    %c0_i32_0 = arith.constant 0 : i32
    return %c0_i32, %arg1 : i32, i32
  }
  func.func @transform_1(%arg0: i32, %arg1: i32) -> (i32, i32) {
    %c0_i32 = arith.constant 0 : i32
    return %arg1, %arg0 : i32, i32
  }
  func.func @transform_2(%arg0: i32, %arg1: i32) -> (i32, i32) {
    %c0_i32 = arith.constant 0 : i32
    %c0_i32_0 = arith.constant 0 : i32
    return %c0_i32, %arg0 : i32, i32
  }
  func.func @transform_3(%arg0: i32, %arg1: i32) -> (i32, i32) {
    %c0_i32 = arith.constant 0 : i32
    %c0_i32_0 = arith.constant 0 : i32
    return %c0_i32, %arg0 : i32, i32
  }
}

</mosaic_0001>

<llo_original>
// kernel: tpu_custom_call.1
$region0: #{tpu_custom_call.1}
  #allocation0 [shape = 'u32[]', space=smem, size = 0x4, offset = 0x4, fixed_abs, tag = 'smem constant byte address 0x4 - core index']
  #allocation1 [shape = 'u32[144,128]{1,0:T(1,128)}', space=vmem, size = 0x12000, scoped, tag = 'internal scratch']
  #allocation2 [shape = 'f32[8,8192]{1,0:T(8,128)}', space=vmem, size = 0x40000, scoped, tag = 'scratch operand']
  %s0 = inlined_call_operand.hbm [shape: f32[8,128], index: 0, kind: input, shape index: {}]
  %s1 = inlined_call_operand.hbm [shape: bf16[128,8192], index: 1, kind: input, shape index: {}]
  %s2 = inlined_call_operand.hbm [shape: f32[1,8192], index: 2, kind: input, shape index: {}]
  %s3 = inlined_call_operand.hbm [shape: f32[8,8192], index: 3, kind: output, shape index: {}]
  %s4 = sld [smem:[#allocation0]]
  $region42: #{tpu_custom_call.1} parent=0
    _
  %s6 = ssub.s32 1, %s4
  %s7 = scalar_select 0, %s6, %s4
  $region1: #{tpu_custom_call.1} parent=0
    #allocation3 [shape = 'u8[4096]{0}', space=vmem, size = 0x1000, scoped, tag = 'input window, operand 0, single buffered']
    #allocation4 [shape = 's32[1]{0}', space=sflag, size = 0x4, scoped, tag = 'scoped memory for tpu_custom_call.1']
    #allocation5 [shape = 's32[1]{0}', space=sflag, size = 0x4, scoped, tag = 'scoped memory for tpu_custom_call.1']
    #allocation6 [shape = 'u8[2097152]{0}', space=vmem, size = 0x200000, scoped, tag = 'input window, operand 1, single buffered']
    #allocation7 [shape = 's32[1]{0}', space=sflag, size = 0x4, scoped, tag = 'scoped memory for tpu_custom_call.1']
    #allocation8 [shape = 'u8[32768]{0}', space=vmem, size = 0x8000, scoped, tag = 'input window, operand 2, single buffered']
    #allocation9 [shape = 'u8[262144]{0}', space=vmem, size = 0x40000, scoped, tag = 'output window, operand 0, single buffered']
    %8 = vsyncpa [#allocation4], 0
    %9 = vsyncpa [#allocation7], 0
    %10 = vsyncpa [#allocation5], 0
    // Predicated region
    $region2: #{tpu_custom_call.1} parent=1 // pred_check
      _
    $region3: #{tpu_custom_call.1} parent=1 // pred_check_branch
      %12 = sbr.rel (0) target = $region5
    $region4: #{tpu_custom_call.1} parent=1 // pred_region
      %s14 = ssub.s32 128, 128
      %15 = vsyncadd [#allocation4], %s14
      %s17 = sshll.u32 [#allocation3], 4
      %s18 = int_to_ptr.vmem [resolvable:$true] %s17
      %20 = dma.hbm_to_vmem [thread:$0]  %s0, 128, %s18, [#allocation4]
    $region5: #{tpu_custom_call.1} parent=1 // pred_fallthru
      _
    // Predicated region
    $region6: #{tpu_custom_call.1} parent=1 // pred_check
      _
    $region7: #{tpu_custom_call.1} parent=1 // pred_check_branch
      %22 = sbr.rel (0) target = $region9
    $region8: #{tpu_custom_call.1} parent=1 // pred_region
      %s24 = ssub.s32 65536, 65536
      %25 = vsyncadd [#allocation7], %s24
      %s26 = sshll.u32 [#allocation6], 4
      %s27 = int_to_ptr.vmem [resolvable:$true] %s26
      %32 = dma.hbm_to_vmem [thread:$0]  %s1, 65536, %s27, [#allocation7], 4096, 4096, 256
    $region9: #{tpu_custom_call.1} parent=1 // pred_fallthru
      _
    // Predicated region
    $region10: #{tpu_custom_call.1} parent=1 // pred_check
      _
    $region11: #{tpu_custom_call.1} parent=1 // pred_check_branch
      %34 = sbr.rel (0) target = $region13
    $region12: #{tpu_custom_call.1} parent=1 // pred_region
      %s36 = ssub.s32 1024, 1024
      %37 = vsyncadd [#allocation7], %s36
      %s39 = sshll.u32 [#allocation8], 4
      %s40 = int_to_ptr.vmem [resolvable:$true] %s39
      %42 = dma.hbm_to_vmem [thread:$0]  %s2, 1024, %s40, [#allocation7]
    $region13: #{tpu_custom_call.1} parent=1 // pred_fallthru
      _
    // Predicated region
    $region14: #{tpu_custom_call.1} parent=1 // pred_check
      _
    $region15: #{tpu_custom_call.1} parent=1 // pred_check_branch
      %44 = sbr.rel (0) target = $region17
    $region16: #{tpu_custom_call.1} parent=1 // pred_region
      %45 = dma.done [#allocation4], 128
    $region17: #{tpu_custom_call.1} parent=1 // pred_fallthru
      _
    // Predicated region
    $region18: #{tpu_custom_call.1} parent=1 // pred_check
      _
    $region19: #{tpu_custom_call.1} parent=1 // pred_check_branch
      %47 = sbr.rel (0) target = $region21
    $region20: #{tpu_custom_call.1} parent=1 // pred_region
      %48 = dma.done [#allocation7], 65536
    $region21: #{tpu_custom_call.1} parent=1 // pred_fallthru
      _
    // Predicated region
    $region22: #{tpu_custom_call.1} parent=1 // pred_check
      _
    $region23: #{tpu_custom_call.1} parent=1 // pred_check_branch
      %50 = sbr.rel (0) target = $region25
    $region24: #{tpu_custom_call.1} parent=1 // pred_region
      %51 = dma.done [#allocation7], 1024
    $region25: #{tpu_custom_call.1} parent=1 // pred_fallthru
      _
    %p53 = scmp.eq.s32.totalorder 0, 0
    // Predicated region
    $region26: #{tpu_custom_call.1} parent=1 // pred_check
      %p54 = pneg %p53
    $region27: #{tpu_custom_call.1} parent=1 // pred_check_branch
      %56 = sbr.rel (%p54) target = $region29
    $region28: #{tpu_custom_call.1} parent=1 // pred_region
      %57 = vst [vmem:[#allocation2] sm:$0xff] 0.0
      %58 = vst [vmem:[#allocation2 + $0x8] sm:$0xff] 0.0
      %59 = vst [vmem:[#allocation2 + $0x10] sm:$0xff] 0.0
      %60 = vst [vmem:[#allocation2 + $0x18] sm:$0xff] 0.0
      %61 = vst [vmem:[#allocation2 + $0x20] sm:$0xff] 0.0
      %62 = vst [vmem:[#allocation2 + $0x28] sm:$0xff] 0.0
      %63 = vst [vmem:[#allocation2 + $0x30] sm:$0xff] 0.0
      %64 = vst [vmem:[#allocation2 + $0x38] sm:$0xff] 0.0
      %65 = vst [vmem:[#allocation2 + $0x40] sm:$0xff] 0.0
      %66 = vst [vmem:[#allocation2 + $0x48] sm:$0xff] 0.0
      %67 = vst [vmem:[#allocation2 + $0x50] sm:$0xff] 0.0
      %68 = vst [vmem:[#allocation2 + $0x58] sm:$0xff] 0.0
      %69 = vst [vmem:[#allocation2 + $0x60] sm:$0xff] 0.0
      %70 = vst [vmem:[#allocation2 + $0x68] sm:$0xff] 0.0
      %71 = vst [vmem:[#allocation2 + $0x70] sm:$0xff] 0.0
      %72 = vst [vmem:[#allocation2 + $0x78] sm:$0xff] 0.0
      %73 = vst [vmem:[#allocation2 + $0x80] sm:$0xff] 0.0
      %74 = vst [vmem:[#allocation2 + $0x88] sm:$0xff] 0.0
      %75 = vst [vmem:[#allocation2 + $0x90] sm:$0xff] 0.0
      %76 = vst [vmem:[#allocation2 + $0x98] sm:$0xff] 0.0
      %77 = vst [vmem:[#allocation2 + $0xa0] sm:$0xff] 0.0
      %78 = vst [vmem:[#allocation2 + $0xa8] sm:$0xff] 0.0
      %79 = vst [vmem:[#allocation2 + $0xb0] sm:$0xff] 0.0
      %80 = vst [vmem:[#allocation2 + $0xb8] sm:$0xff] 0.0
      %81 = vst [vmem:[#allocation2 + $0xc0] sm:$0xff] 0.0
      %82 = vst [vmem:[#allocation2 + $0xc8] sm:$0xff] 0.0
      %83 = vst [vmem:[#allocation2 + $0xd0] sm:$0xff] 0.0
      %84 = vst [vmem:[#allocation2 + $0xd8] sm:$0xff] 0.0
      %85 = vst [vmem:[#allocation2 + $0xe0] sm:$0xff] 0.0
      %86 = vst [vmem:[#allocation2 + $0xe8] sm:$0xff] 0.0
      %87 = vst [vmem:[#allocation2 + $0xf0] sm:$0xff] 0.0
      %88 = vst [vmem:[#allocation2 + $0xf8] sm:$0xff] 0.0
      %89 = vst [vmem:[#allocation2 + $0x100] sm:$0xff] 0.0
      %90 = vst [vmem:[#allocation2 + $0x108] sm:$0xff] 0.0
      %91 = vst [vmem:[#allocation2 + $0x110] sm:$0xff] 0.0
      %92 = vst [vmem:[#allocation2 + $0x118] sm:$0xff] 0.0
      %93 = vst [vmem:[#allocation2 + $0x120] sm:$0xff] 0.0
      %94 = vst [vmem:[#allocation2 + $0x128] sm:$0xff] 0.0
      %95 = vst [vmem:[#allocation2 + $0x130] sm:$0xff] 0.0
      %96 = vst [vmem:[#allocation2 + $0x138] sm:$0xff] 0.0
      %97 = vst [vmem:[#allocation2 + $0x140] sm:$0xff] 0.0
      %98 = vst [vmem:[#allocation2 + $0x148] sm:$0xff] 0.0
      %99 = vst [vmem:[#allocation2 + $0x150] sm:$0xff] 0.0
      %100 = vst [vmem:[#allocation2 + $0x158] sm:$0xff] 0.0
      %101 = vst [vmem:[#allocation2 + $0x160] sm:$0xff] 0.0
      %102 = vst [vmem:[#allocation2 + $0x168] sm:$0xff] 0.0
      %103 = vst [vmem:[#allocation2 + $0x170] sm:$0xff] 0.0
      %104 = vst [vmem:[#allocation2 + $0x178] sm:$0xff] 0.0
      %105 = vst [vmem:[#allocation2 + $0x180] sm:$0xff] 0.0
      %106 = vst [vmem:[#allocation2 + $0x188] sm:$0xff] 0.0
      %107 = vst [vmem:[#allocation2 + $0x190] sm:$0xff] 0.0
      %108 = vst [vmem:[#allocation2 + $0x198] sm:$0xff] 0.0
      %109 = vst [vmem:[#allocation2 + $0x1a0] sm:$0xff] 0.0
      %110 = vst [vmem:[#allocation2 + $0x1a8] sm:$0xff] 0.0
      %111 = vst [vmem:[#allocation2 + $0x1b0] sm:$0xff] 0.0
      %112 = vst [vmem:[#allocation2 + $0x1b8] sm:$0xff] 0.0
      %113 = vst [vmem:[#allocation2 + $0x1c0] sm:$0xff] 0.0
      %114 = vst [vmem:[#allocation2 + $0x1c8] sm:$0xff] 0.0
      %115 = vst [vmem:[#allocation2 + $0x1d0] sm:$0xff] 0.0
      %116 = vst [vmem:[#allocation2 + $0x1d8] sm:$0xff] 0.0
      %117 = vst [vmem:[#allocation2 + $0x1e0] sm:$0xff] 0.0
      %118 = vst [vmem:[#allocation2 + $0x1e8] sm:$0xff] 0.0
      %119 = vst [vmem:[#allocation2 + $0x1f0] sm:$0xff] 0.0
      %120 = vst [vmem:[#allocation2 + $0x1f8] sm:$0xff] 0.0
    $region29: #{tpu_custom_call.1} parent=1 // pred_fallthru
      _
    %v121 = vld [vmem:[#allocation2] sm:$0xff]
    %v122 = vld [vmem:[#allocation2 + $0x8] sm:$0xff]
    %v123 = vld [vmem:[#allocation2 + $0x10] sm:$0xff]
    %v124 = vld [vmem:[#allocation2 + $0x18] sm:$0xff]
    %v125 = vld [vmem:[#allocation2 + $0x20] sm:$0xff]
    %v126 = vld [vmem:[#allocation2 + $0x28] sm:$0xff]
    %v127 = vld [vmem:[#allocation2 + $0x30] sm:$0xff]
    %v128 = vld [vmem:[#allocation2 + $0x38] sm:$0xff]
    %v129 = vld [vmem:[#allocation2 + $0x40] sm:$0xff]
    %v130 = vld [vmem:[#allocation2 + $0x48] sm:$0xff]
    %v131 = vld [vmem:[#allocation2 + $0x50] sm:$0xff]
    %v132 = vld [vmem:[#allocation2 + $0x58] sm:$0xff]
    %v133 = vld [vmem:[#allocation2 + $0x60] sm:$0xff]
    %v134 = vld [vmem:[#allocation2 + $0x68] sm:$0xff]
    %v135 = vld [vmem:[#allocation2 + $0x70] sm:$0xff]
    %v136 = vld [vmem:[#allocation2 + $0x78] sm:$0xff]
    %v137 = vld [vmem:[#allocation2 + $0x80] sm:$0xff]
    %v138 = vld [vmem:[#allocation2 + $0x88] sm:$0xff]
    %v139 = vld [vmem:[#allocation2 + $0x90] sm:$0xff]
    %v140 = vld [vmem:[#allocation2 + $0x98] sm:$0xff]
    %v141 = vld [vmem:[#allocation2 + $0xa0] sm:$0xff]
    %v142 = vld [vmem:[#allocation2 + $0xa8] sm:$0xff]
    %v143 = vld [vmem:[#allocation2 + $0xb0] sm:$0xff]
    %v144 = vld [vmem:[#allocation2 + $0xb8] sm:$0xff]
    %v145 = vld [vmem:[#allocation2 + $0xc0] sm:$0xff]
    %v146 = vld [vmem:[#allocation2 + $0xc8] sm:$0xff]
    %v147 = vld [vmem:[#allocation2 + $0xd0] sm:$0xff]
    %v148 = vld [vmem:[#allocation2 + $0xd8] sm:$0xff]
    %v149 = vld [vmem:[#allocation2 + $0xe0] sm:$0xff]
    %v150 = vld [vmem:[#allocation2 + $0xe8] sm:$0xff]
    %v151 = vld [vmem:[#allocation2 + $0xf0] sm:$0xff]
    %v152 = vld [vmem:[#allocation2 + $0xf8] sm:$0xff]
    %v153 = vld [vmem:[#allocation2 + $0x100] sm:$0xff]
    %v154 = vld [vmem:[#allocation2 + $0x108] sm:$0xff]
    %v155 = vld [vmem:[#allocation2 + $0x110] sm:$0xff]
    %v156 = vld [vmem:[#allocation2 + $0x118] sm:$0xff]
    %v157 = vld [vmem:[#allocation2 + $0x120] sm:$0xff]
    %v158 = vld [vmem:[#allocation2 + $0x128] sm:$0xff]
    %v159 = vld [vmem:[#allocation2 + $0x130] sm:$0xff]
    %v160 = vld [vmem:[#allocation2 + $0x138] sm:$0xff]
    %v161 = vld [vmem:[#allocation2 + $0x140] sm:$0xff]
    %v162 = vld [vmem:[#allocation2 + $0x148] sm:$0xff]
    %v163 = vld [vmem:[#allocation2 + $0x150] sm:$0xff]
    %v164 = vld [vmem:[#allocation2 + $0x158] sm:$0xff]
    %v165 = vld [vmem:[#allocation2 + $0x160] sm:$0xff]
    %v166 = vld [vmem:[#allocation2 + $0x168] sm:$0xff]
    %v167 = vld [vmem:[#allocation2 + $0x170] sm:$0xff]
    %v168 = vld [vmem:[#allocation2 + $0x178] sm:$0xff]
    %v169 = vld [vmem:[#allocation2 + $0x180] sm:$0xff]
    %v170 = vld [vmem:[#allocation2 + $0x188] sm:$0xff]
    %v171 = vld [vmem:[#allocation2 + $0x190] sm:$0xff]
    %v172 = vld [vmem:[#allocation2 + $0x198] sm:$0xff]
    %v173 = vld [vmem:[#allocation2 + $0x1a0] sm:$0xff]
    %v174 = vld [vmem:[#allocation2 + $0x1a8] sm:$0xff]
    %v175 = vld [vmem:[#allocation2 + $0x1b0] sm:$0xff]
    %v176 = vld [vmem:[#allocation2 + $0x1b8] sm:$0xff]
    %v177 = vld [vmem:[#allocation2 + $0x1c0] sm:$0xff]
    %v178 = vld [vmem:[#allocation2 + $0x1c8] sm:$0xff]
    %v179 = vld [vmem:[#allocation2 + $0x1d0] sm:$0xff]
    %v180 = vld [vmem:[#allocation2 + $0x1d8] sm:$0xff]
    %v181 = vld [vmem:[#allocation2 + $0x1e0] sm:$0xff]
    %v182 = vld [vmem:[#allocation2 + $0x1e8] sm:$0xff]
    %v183 = vld [vmem:[#allocation2 + $0x1f0] sm:$0xff]
    %v184 = vld [vmem:[#allocation2 + $0x1f8] sm:$0xff]
    %v185 = vld [vmem:[#allocation3] sm:$0xff]
    %v186 = vpack.c.bf16 %v185, %v185
    %v187 = vld [vmem:[#allocation6] sm:$0xff]
    %v188 = vld [vmem:[#allocation6 + $0x8] sm:$0xff]
    %v189 = vld [vmem:[#allocation6 + $0x10] sm:$0xff]
    %v190 = vld [vmem:[#allocation6 + $0x18] sm:$0xff]
    %v191 = vld [vmem:[#allocation6 + $0x20] sm:$0xff]
    %v192 = vld [vmem:[#allocation6 + $0x28] sm:$0xff]
    %v193 = vld [vmem:[#allocation6 + $0x30] sm:$0xff]
    %v194 = vld [vmem:[#allocation6 + $0x38] sm:$0xff]
    %v195 = vld [vmem:[#allocation6 + $0x40] sm:$0xff]
    %v196 = vld [vmem:[#allocation6 + $0x48] sm:$0xff]
    %v197 = vld [vmem:[#allocation6 + $0x50] sm:$0xff]
    %v198 = vld [vmem:[#allocation6 + $0x58] sm:$0xff]
    %v199 = vld [vmem:[#allocation6 + $0x60] sm:$0xff]
    %v200 = vld [vmem:[#allocation6 + $0x68] sm:$0xff]
    %v201 = vld [vmem:[#allocation6 + $0x70] sm:$0xff]
    %v202 = vld [vmem:[#allocation6 + $0x78] sm:$0xff]
    %v203 = vld [vmem:[#allocation6 + $0x80] sm:$0xff]
    %v204 = vld [vmem:[#allocation6 + $0x88] sm:$0xff]
    %v205 = vld [vmem:[#allocation6 + $0x90] sm:$0xff]
    %v206 = vld [vmem:[#allocation6 + $0x98] sm:$0xff]
    %v207 = vld [vmem:[#allocation6 + $0xa0] sm:$0xff]
    %v208 = vld [vmem:[#allocation6 + $0xa8] sm:$0xff]
    %v209 = vld [vmem:[#allocation6 + $0xb0] sm:$0xff]
    %v210 = vld [vmem:[#allocation6 + $0xb8] sm:$0xff]
    %v211 = vld [vmem:[#allocation6 + $0xc0] sm:$0xff]
    %v212 = vld [vmem:[#allocation6 + $0xc8] sm:$0xff]
    %v213 = vld [vmem:[#allocation6 + $0xd0] sm:$0xff]
    %v214 = vld [vmem:[#allocation6 + $0xd8] sm:$0xff]
    %v215 = vld [vmem:[#allocation6 + $0xe0] sm:$0xff]
    %v216 = vld [vmem:[#allocation6 + $0xe8] sm:$0xff]
    %v217 = vld [vmem:[#allocation6 + $0xf0] sm:$0xff]
    %v218 = vld [vmem:[#allocation6 + $0xf8] sm:$0xff]
    %v219 = vld [vmem:[#allocation6 + $0x100] sm:$0xff]
    %v220 = vld [vmem:[#allocation6 + $0x108] sm:$0xff]
    %v221 = vld [vmem:[#allocation6 + $0x110] sm:$0xff]
    %v222 = vld [vmem:[#allocation6 + $0x118] sm:$0xff]
    %v223 = vld [vmem:[#allocation6 + $0x120] sm:$0xff]
    %v224 = vld [vmem:[#allocation6 + $0x128] sm:$0xff]
    %v225 = vld [vmem:[#allocation6 + $0x130] sm:$0xff]
    %v226 = vld [vmem:[#allocation6 + $0x138] sm:$0xff]
    %v227 = vld [vmem:[#allocation6 + $0x140] sm:$0xff]
    %v228 = vld [vmem:[#allocation6 + $0x148] sm:$0xff]
    %v229 = vld [vmem:[#allocation6 + $0x150] sm:$0xff]
    %v230 = vld [vmem:[#allocation6 + $0x158] sm:$0xff]
    %v231 = vld [vmem:[#allocation6 + $0x160] sm:$0xff]
    %v232 = vld [vmem:[#allocation6 + $0x168] sm:$0xff]
    %v233 = vld [vmem:[#allocation6 + $0x170] sm:$0xff]
    %v234 = vld [vmem:[#allocation6 + $0x178] sm:$0xff]
    %v235 = vld [vmem:[#allocation6 + $0x180] sm:$0xff]
    %v236 = vld [vmem:[#allocation6 + $0x188] sm:$0xff]
    %v237 = vld [vmem:[#allocation6 + $0x190] sm:$0xff]
    %v238 = vld [vmem:[#allocation6 + $0x198] sm:$0xff]
    %v239 = vld [vmem:[#allocation6 + $0x1a0] sm:$0xff]
    %v240 = vld [vmem:[#allocation6 + $0x1a8] sm:$0xff]
    %v241 = vld [vmem:[#allocation6 + $0x1b0] sm:$0xff]
    %v242 = vld [vmem:[#allocation6 + $0x1b8] sm:$0xff]
    %v243 = vld [vmem:[#allocation6 + $0x1c0] sm:$0xff]
    %v244 = vld [vmem:[#allocation6 + $0x1c8] sm:$0xff]
    %v245 = vld [vmem:[#allocation6 + $0x1d0] sm:$0xff]
    %v246 = vld [vmem:[#allocation6 + $0x1d8] sm:$0xff]
    %v247 = vld [vmem:[#allocation6 + $0x1e0] sm:$0xff]
    %v248 = vld [vmem:[#allocation6 + $0x1e8] sm:$0xff]
    %v249 = vld [vmem:[#allocation6 + $0x1f0] sm:$0xff]
    %v250 = vld [vmem:[#allocation6 + $0x1f8] sm:$0xff]
    %v251 = vld [vmem:[#allocation6 + $0x200] sm:$0xff]
    %v252 = vld [vmem:[#allocation6 + $0x208] sm:$0xff]
    %v253 = vld [vmem:[#allocation6 + $0x210] sm:$0xff]
    %v254 = vld [vmem:[#allocation6 + $0x218] sm:$0xff]
    %v255 = vld [vmem:[#allocation6 + $0x220] sm:$0xff]
    %v256 = vld [vmem:[#allocation6 + $0x228] sm:$0xff]
    %v257 = vld [vmem:[#allocation6 + $0x230] sm:$0xff]
    %v258 = vld [vmem:[#allocation6 + $0x238] sm:$0xff]
    %v259 = vld [vmem:[#allocation6 + $0x240] sm:$0xff]
    %v260 = vld [vmem:[#allocation6 + $0x248] sm:$0xff]
    %v261 = vld [vmem:[#allocation6 + $0x250] sm:$0xff]
    %v262 = vld [vmem:[#allocation6 + $0x258] sm:$0xff]
    %v263 = vld [vmem:[#allocation6 + $0x260] sm:$0xff]
    %v264 = vld [vmem:[#allocation6 + $0x268] sm:$0xff]
    %v265 = vld [vmem:[#allocation6 + $0x270] sm:$0xff]
    %v266 = vld [vmem:[#allocation6 + $0x278] sm:$0xff]
    %v267 = vld [vmem:[#allocation6 + $0x280] sm:$0xff]
    %v268 = vld [vmem:[#allocation6 + $0x288] sm:$0xff]
    %v269 = vld [vmem:[#allocation6 + $0x290] sm:$0xff]
    %v270 = vld [vmem:[#allocation6 + $0x298] sm:$0xff]
    %v271 = vld [vmem:[#allocation6 + $0x2a0] sm:$0xff]
    %v272 = vld [vmem:[#allocation6 + $0x2a8] sm:$0xff]
    %v273 = vld [vmem:[#allocation6 + $0x2b0] sm:$0xff]
    %v274 = vld [vmem:[#allocation6 + $0x2b8] sm:$0xff]
    %v275 = vld [vmem:[#allocation6 + $0x2c0] sm:$0xff]
    %v276 = vld [vmem:[#allocation6 + $0x2c8] sm:$0xff]
    %v277 = vld [vmem:[#allocation6 + $0x2d0] sm:$0xff]
    %v278 = vld [vmem:[#allocation6 + $0x2d8] sm:$0xff]
    %v279 = vld [vmem:[#allocation6 + $0x2e0] sm:$0xff]
    %v280 = vld [vmem:[#allocation6 + $0x2e8] sm:$0xff]
    %v281 = vld [vmem:[#allocation6 + $0x2f0] sm:$0xff]
    %v282 = vld [vmem:[#allocation6 + $0x2f8] sm:$0xff]
    %v283 = vld [vmem:[#allocation6 + $0x300] sm:$0xff]
    %v284 = vld [vmem:[#allocation6 + $0x308] sm:$0xff]
    %v285 = vld [vmem:[#allocation6 + $0x310] sm:$0xff]
    %v286 = vld [vmem:[#allocation6 + $0x318] sm:$0xff]
    %v287 = vld [vmem:[#allocation6 + $0x320] sm:$0xff]
    %v288 = vld [vmem:[#allocation6 + $0x328] sm:$0xff]
    %v289 = vld [vmem:[#allocation6 + $0x330] sm:$0xff]
    %v290 = vld [vmem:[#allocation6 + $0x338] sm:$0xff]
    %v291 = vld [vmem:[#allocation6 + $0x340] sm:$0xff]
    %v292 = vld [vmem:[#allocation6 + $0x348] sm:$0xff]
    %v293 = vld [vmem:[#allocation6 + $0x350] sm:$0xff]
    %v294 = vld [vmem:[#allocation6 + $0x358] sm:$0xff]
    %v295 = vld [vmem:[#allocation6 + $0x360] sm:$0xff]
    %v296 = vld [vmem:[#allocation6 + $0x368] sm:$0xff]
    %v297 = vld [vmem:[#allocation6 + $0x370] sm:$0xff]
    %v298 = vld [vmem:[#allocation6 + $0x378] sm:$0xff]
    %v299 = vld [vmem:[#allocation6 + $0x380] sm:$0xff]
    %v300 = vld [vmem:[#allocation6 + $0x388] sm:$0xff]
    %v301 = vld [vmem:[#allocation6 + $0x390] sm:$0xff]
    %v302 = vld [vmem:[#allocation6 + $0x398] sm:$0xff]
    %v303 = vld [vmem:[#allocation6 + $0x3a0] sm:$0xff]
    %v304 = vld [vmem:[#allocation6 + $0x3a8] sm:$0xff]
    %v305 = vld [vmem:[#allocation6 + $0x3b0] sm:$0xff]
    %v306 = vld [vmem:[#allocation6 + $0x3b8] sm:$0xff]
    %v307 = vld [vmem:[#allocation6 + $0x3c0] sm:$0xff]
    %v308 = vld [vmem:[#allocation6 + $0x3c8] sm:$0xff]
    %v309 = vld [vmem:[#allocation6 + $0x3d0] sm:$0xff]
    %v310 = vld [vmem:[#allocation6 + $0x3d8] sm:$0xff]
    %v311 = vld [vmem:[#allocation6 + $0x3e0] sm:$0xff]
    %v312 = vld [vmem:[#allocation6 + $0x3e8] sm:$0xff]
    %v313 = vld [vmem:[#allocation6 + $0x3f0] sm:$0xff]
    %v314 = vld [vmem:[#allocation6 + $0x3f8] sm:$0xff]
    %v315 = vld [vmem:[#allocation6 + $0x400] sm:$0xff]
    %v316 = vld [vmem:[#allocation6 + $0x408] sm:$0xff]
    %v317 = vld [vmem:[#allocation6 + $0x410] sm:$0xff]
    %v318 = vld [vmem:[#allocation6 + $0x418] sm:$0xff]
    %v319 = vld [vmem:[#allocation6 + $0x420] sm:$0xff]
    %v320 = vld [vmem:[#allocation6 + $0x428] sm:$0xff]
    %v321 = vld [vmem:[#allocation6 + $0x430] sm:$0xff]
    %v322 = vld [vmem:[#allocation6 + $0x438] sm:$0xff]
    %v323 = vld [vmem:[#allocation6 + $0x440] sm:$0xff]
    %v324 = vld [vmem:[#allocation6 + $0x448] sm:$0xff]
    %v325 = vld [vmem:[#allocation6 + $0x450] sm:$0xff]
    %v326 = vld [vmem:[#allocation6 + $0x458] sm:$0xff]
    %v327 = vld [vmem:[#allocation6 + $0x460] sm:$0xff]
    %v328 = vld [vmem:[#allocation6 + $0x468] sm:$0xff]
    %v329 = vld [vmem:[#allocation6 + $0x470] sm:$0xff]
    %v330 = vld [vmem:[#allocation6 + $0x478] sm:$0xff]
    %v331 = vld [vmem:[#allocation6 + $0x480] sm:$0xff]
    %v332 = vld [vmem:[#allocation6 + $0x488] sm:$0xff]
    %v333 = vld [vmem:[#allocation6 + $0x490] sm:$0xff]
    %v334 = vld [vmem:[#allocation6 + $0x498] sm:$0xff]
    %v335 = vld [vmem:[#allocation6 + $0x4a0] sm:$0xff]
    %v336 = vld [vmem:[#allocation6 + $0x4a8] sm:$0xff]
    %v337 = vld [vmem:[#allocation6 + $0x4b0] sm:$0xff]
    %v338 = vld [vmem:[#allocation6 + $0x4b8] sm:$0xff]
    %v339 = vld [vmem:[#allocation6 + $0x4c0] sm:$0xff]
    %v340 = vld [vmem:[#allocation6 + $0x4c8] sm:$0xff]
    %v341 = vld [vmem:[#allocation6 + $0x4d0] sm:$0xff]
    %v342 = vld [vmem:[#allocation6 + $0x4d8] sm:$0xff]
    %v343 = vld [vmem:[#allocation6 + $0x4e0] sm:$0xff]
    %v344 = vld [vmem:[#allocation6 + $0x4e8] sm:$0xff]
    %v345 = vld [vmem:[#allocation6 + $0x4f0] sm:$0xff]
    %v346 = vld [vmem:[#allocation6 + $0x4f8] sm:$0xff]
    %v347 = vld [vmem:[#allocation6 + $0x500] sm:$0xff]
    %v348 = vld [vmem:[#allocation6 + $0x508] sm:$0xff]
    %v349 = vld [vmem:[#allocation6 + $0x510] sm:$0xff]
    %v350 = vld [vmem:[#allocation6 + $0x518] sm:$0xff]
    %v351 = vld [vmem:[#allocation6 + $0x520] sm:$0xff]
    %v352 = vld [vmem:[#allocation6 + $0x528] sm:$0xff]
    %v353 = vld [vmem:[#allocation6 + $0x530] sm:$0xff]
    %v354 = vld [vmem:[#allocation6 + $0x538] sm:$0xff]
    %v355 = vld [vmem:[#allocation6 + $0x540] sm:$0xff]
    %v356 = vld [vmem:[#allocation6 + $0x548] sm:$0xff]
    %v357 = vld [vmem:[#allocation6 + $0x550] sm:$0xff]
    %v358 = vld [vmem:[#allocation6 + $0x558] sm:$0xff]
    %v359 = vld [vmem:[#allocation6 + $0x560] sm:$0xff]
    %v360 = vld [vmem:[#allocation6 + $0x568] sm:$0xff]
    %v361 = vld [vmem:[#allocation6 + $0x570] sm:$0xff]
    %v362 = vld [vmem:[#allocation6 + $0x578] sm:$0xff]
    %v363 = vld [vmem:[#allocation6 + $0x580] sm:$0xff]
    %v364 = vld [vmem:[#allocation6 + $0x588] sm:$0xff]
    %v365 = vld [vmem:[#allocation6 + $0x590] sm:$0xff]
    %v366 = vld [vmem:[#allocation6 + $0x598] sm:$0xff]
    %v367 = vld [vmem:[#allocation6 + $0x5a0] sm:$0xff]
    %v368 = vld [vmem:[#allocation6 + $0x5a8] sm:$0xff]
    %v369 = vld [vmem:[#allocation6 + $0x5b0] sm:$0xff]
    %v370 = vld [vmem:[#allocation6 + $0x5b8] sm:$0xff]
    %v371 = vld [vmem:[#allocation6 + $0x5c0] sm:$0xff]
    %v372 = vld [vmem:[#allocation6 + $0x5c8] sm:$0xff]
    %v373 = vld [vmem:[#allocation6 + $0x5d0] sm:$0xff]
    %v374 = vld [vmem:[#allocation6 + $0x5d8] sm:$0xff]
    %v375 = vld [vmem:[#allocation6 + $0x5e0] sm:$0xff]
    %v376 = vld [vmem:[#allocation6 + $0x5e8] sm:$0xff]
    %v377 = vld [vmem:[#allocation6 + $0x5f0] sm:$0xff]
    %v378 = vld [vmem:[#allocation6 + $0x5f8] sm:$0xff]
    %v379 = vld [vmem:[#allocation6 + $0x600] sm:$0xff]
    %v380 = vld [vmem:[#allocation6 + $0x608] sm:$0xff]
    %v381 = vld [vmem:[#allocation6 + $0x610] sm:$0xff]
    %v382 = vld [vmem:[#allocation6 + $0x618] sm:$0xff]
    %v383 = vld [vmem:[#allocation6 + $0x620] sm:$0xff]
    %v384 = vld [vmem:[#allocation6 + $0x628] sm:$0xff]
    %v385 = vld [vmem:[#allocation6 + $0x630] sm:$0xff]
    %v386 = vld [vmem:[#allocation6 + $0x638] sm:$0xff]
    %v387 = vld [vmem:[#allocation6 + $0x640] sm:$0xff]
    %v388 = vld [vmem:[#allocation6 + $0x648] sm:$0xff]
    %v389 = vld [vmem:[#allocation6 + $0x650] sm:$0xff]
    %v390 = vld [vmem:[#allocation6 + $0x658] sm:$0xff]
    %v391 = vld [vmem:[#allocation6 + $0x660] sm:$0xff]
    %v392 = vld [vmem:[#allocation6 + $0x668] sm:$0xff]
    %v393 = vld [vmem:[#allocation6 + $0x670] sm:$0xff]
    %v394 = vld [vmem:[#allocation6 + $0x678] sm:$0xff]
    %v395 = vld [vmem:[#allocation6 + $0x680] sm:$0xff]
    %v396 = vld [vmem:[#allocation6 + $0x688] sm:$0xff]
    %v397 = vld [vmem:[#allocation6 + $0x690] sm:$0xff]
    %v398 = vld [vmem:[#allocation6 + $0x698] sm:$0xff]
    %v399 = vld [vmem:[#allocation6 + $0x6a0] sm:$0xff]
    %v400 = vld [vmem:[#allocation6 + $0x6a8] sm:$0xff]
    %v401 = vld [vmem:[#allocation6 + $0x6b0] sm:$0xff]
    %v402 = vld [vmem:[#allocation6 + $0x6b8] sm:$0xff]
    %v403 = vld [vmem:[#allocation6 + $0x6c0] sm:$0xff]
    %v404 = vld [vmem:[#allocation6 + $0x6c8] sm:$0xff]
    %v405 = vld [vmem:[#allocation6 + $0x6d0] sm:$0xff]
    %v406 = vld [vmem:[#allocation6 + $0x6d8] sm:$0xff]
    %v407 = vld [vmem:[#allocation6 + $0x6e0] sm:$0xff]
    %v408 = vld [vmem:[#allocation6 + $0x6e8] sm:$0xff]
    %v409 = vld [vmem:[#allocation6 + $0x6f0] sm:$0xff]
    %v410 = vld [vmem:[#allocation6 + $0x6f8] sm:$0xff]
    %v411 = vld [vmem:[#allocation6 + $0x700] sm:$0xff]
    %v412 = vld [vmem:[#allocation6 + $0x708] sm:$0xff]
    %v413 = vld [vmem:[#allocation6 + $0x710] sm:$0xff]
    %v414 = vld [vmem:[#allocation6 + $0x718] sm:$0xff]
    %v415 = vld [vmem:[#allocation6 + $0x720] sm:$0xff]
    %v416 = vld [vmem:[#allocation6 + $0x728] sm:$0xff]
    %v417 = vld [vmem:[#allocation6 + $0x730] sm:$0xff]
    %v418 = vld [vmem:[#allocation6 + $0x738] sm:$0xff]
    %v419 = vld [vmem:[#allocation6 + $0x740] sm:$0xff]
    %v420 = vld [vmem:[#allocation6 + $0x748] sm:$0xff]
    %v421 = vld [vmem:[#allocation6 + $0x750] sm:$0xff]
    %v422 = vld [vmem:[#allocation6 + $0x758] sm:$0xff]
    %v423 = vld [vmem:[#allocation6 + $0x760] sm:$0xff]
    %v424 = vld [vmem:[#allocation6 + $0x768] sm:$0xff]
    %v425 = vld [vmem:[#allocation6 + $0x770] sm:$0xff]
    %v426 = vld [vmem:[#allocation6 + $0x778] sm:$0xff]
    %v427 = vld [vmem:[#allocation6 + $0x780] sm:$0xff]
    %v428 = vld [vmem:[#allocation6 + $0x788] sm:$0xff]
    %v429 = vld [vmem:[#allocation6 + $0x790] sm:$0xff]
    %v430 = vld [vmem:[#allocation6 + $0x798] sm:$0xff]
    %v431 = vld [vmem:[#allocation6 + $0x7a0] sm:$0xff]
    %v432 = vld [vmem:[#allocation6 + $0x7a8] sm:$0xff]
    %v433 = vld [vmem:[#allocation6 + $0x7b0] sm:$0xff]
    %v434 = vld [vmem:[#allocation6 + $0x7b8] sm:$0xff]
    %v435 = vld [vmem:[#allocation6 + $0x7c0] sm:$0xff]
    %v436 = vld [vmem:[#allocation6 + $0x7c8] sm:$0xff]
    %v437 = vld [vmem:[#allocation6 + $0x7d0] sm:$0xff]
    %v438 = vld [vmem:[#allocation6 + $0x7d8] sm:$0xff]
    %v439 = vld [vmem:[#allocation6 + $0x7e0] sm:$0xff]
    %v440 = vld [vmem:[#allocation6 + $0x7e8] sm:$0xff]
    %v441 = vld [vmem:[#allocation6 + $0x7f0] sm:$0xff]
    %v442 = vld [vmem:[#allocation6 + $0x7f8] sm:$0xff]
    %v443 = vld [vmem:[#allocation6 + $0x800] sm:$0xff]
    %v444 = vld [vmem:[#allocation6 + $0x808] sm:$0xff]
    %v445 = vld [vmem:[#allocation6 + $0x810] sm:$0xff]
    %v446 = vld [vmem:[#allocation6 + $0x818] sm:$0xff]
    %v447 = vld [vmem:[#allocation6 + $0x820] sm:$0xff]
    %v448 = vld [vmem:[#allocation6 + $0x828] sm:$0xff]
    %v449 = vld [vmem:[#allocation6 + $0x830] sm:$0xff]
    %v450 = vld [vmem:[#allocation6 + $0x838] sm:$0xff]
    %v451 = vld [vmem:[#allocation6 + $0x840] sm:$0xff]
    %v452 = vld [vmem:[#allocation6 + $0x848] sm:$0xff]
    %v453 = vld [vmem:[#allocation6 + $0x850] sm:$0xff]
    %v454 = vld [vmem:[#allocation6 + $0x858] sm:$0xff]
    %v455 = vld [vmem:[#allocation6 + $0x860] sm:$0xff]
    %v456 = vld [vmem:[#allocation6 + $0x868] sm:$0xff]
    %v457 = vld [vmem:[#allocation6 + $0x870] sm:$0xff]
    %v458 = vld [vmem:[#allocation6 + $0x878] sm:$0xff]
    %v459 = vld [vmem:[#allocation6 + $0x880] sm:$0xff]
    %v460 = vld [vmem:[#allocation6 + $0x888] sm:$0xff]
    %v461 = vld [vmem:[#allocation6 + $0x890] sm:$0xff]
    %v462 = vld [vmem:[#allocation6 + $0x898] sm:$0xff]
    %v463 = vld [vmem:[#allocation6 + $0x8a0] sm:$0xff]
    %v464 = vld [vmem:[#allocation6 + $0x8a8] sm:$0xff]
    %v465 = vld [vmem:[#allocation6 + $0x8b0] sm:$0xff]
    %v466 = vld [vmem:[#allocation6 + $0x8b8] sm:$0xff]
    %v467 = vld [vmem:[#allocation6 + $0x8c0] sm:$0xff]
    %v468 = vld [vmem:[#allocation6 + $0x8c8] sm:$0xff]
    %v469 = vld [vmem:[#allocation6 + $0x8d0] sm:$0xff]
    %v470 = vld [vmem:[#allocation6 + $0x8d8] sm:$0xff]
    %v471 = vld [vmem:[#allocation6 + $0x8e0] sm:$0xff]
    %v472 = vld [vmem:[#allocation6 + $0x8e8] sm:$0xff]
    %v473 = vld [vmem:[#allocation6 + $0x8f0] sm:$0xff]
    %v474 = vld [vmem:[#allocation6 + $0x8f8] sm:$0xff]
    %v475 = vld [vmem:[#allocation6 + $0x900] sm:$0xff]
    %v476 = vld [vmem:[#allocation6 + $0x908] sm:$0xff]
    %v477 = vld [vmem:[#allocation6 + $0x910] sm:$0xff]
    %v478 = vld [vmem:[#allocation6 + $0x918] sm:$0xff]
    %v479 = vld [vmem:[#allocation6 + $0x920] sm:$0xff]
    %v480 = vld [vmem:[#allocation6 + $0x928] sm:$0xff]
    %v481 = vld [vmem:[#allocation6 + $0x930] sm:$0xff]
    %v482 = vld [vmem:[#allocation6 + $0x938] sm:$0xff]
    %v483 = vld [vmem:[#allocation6 + $0x940] sm:$0xff]
    %v484 = vld [vmem:[#allocation6 + $0x948] sm:$0xff]
    %v485 = vld [vmem:[#allocation6 + $0x950] sm:$0xff]
    %v486 = vld [vmem:[#allocation6 + $0x958] sm:$0xff]
    %v487 = vld [vmem:[#allocation6 + $0x960] sm:$0xff]
    %v488 = vld [vmem:[#allocation6 + $0x968] sm:$0xff]
    %v489 = vld [vmem:[#allocation6 + $0x970] sm:$0xff]
    %v490 = vld [vmem:[#allocation6 + $0x978] sm:$0xff]
    %v491 = vld [vmem:[#allocation6 + $0x980] sm:$0xff]
    %v492 = vld [vmem:[#allocation6 + $0x988] sm:$0xff]
    %v493 = vld [vmem:[#allocation6 + $0x990] sm:$0xff]
    %v494 = vld [vmem:[#allocation6 + $0x998] sm:$0xff]
    %v495 = vld [vmem:[#allocation6 + $0x9a0] sm:$0xff]
    %v496 = vld [vmem:[#allocation6 + $0x9a8] sm:$0xff]
    %v497 = vld [vmem:[#allocation6 + $0x9b0] sm:$0xff]
    %v498 = vld [vmem:[#allocation6 + $0x9b8] sm:$0xff]
    %v499 = vld [vmem:[#allocation6 + $0x9c0] sm:$0xff]
    %v500 = vld [vmem:[#allocation6 + $0x9c8] sm:$0xff]
    %v501 = vld [vmem:[#allocation6 + $0x9d0] sm:$0xff]
    %v502 = vld [vmem:[#allocation6 + $0x9d8] sm:$0xff]
    %v503 = vld [vmem:[#allocation6 + $0x9e0] sm:$0xff]
    %v504 = vld [vmem:[#allocation6 + $0x9e8] sm:$0xff]
    %v505 = vld [vmem:[#allocation6 + $0x9f0] sm:$0xff]
    %v506 = vld [vmem:[#allocation6 + $0x9f8] sm:$0xff]
    %v507 = vld [vmem:[#allocation6 + $0xa00] sm:$0xff]
    %v508 = vld [vmem:[#allocation6 + $0xa08] sm:$0xff]
    %v509 = vld [vmem:[#allocation6 + $0xa10] sm:$0xff]
    %v510 = vld [vmem:[#allocation6 + $0xa18] sm:$0xff]
    %v511 = vld [vmem:[#allocation6 + $0xa20] sm:$0xff]
    %v512 = vld [vmem:[#allocation6 + $0xa28] sm:$0xff]
    %v513 = vld [vmem:[#allocation6 + $0xa30] sm:$0xff]
    %v514 = vld [vmem:[#allocation6 + $0xa38] sm:$0xff]
    %v515 = vld [vmem:[#allocation6 + $0xa40] sm:$0xff]
    %v516 = vld [vmem:[#allocation6 + $0xa48] sm:$0xff]
    %v517 = vld [vmem:[#allocation6 + $0xa50] sm:$0xff]
    %v518 = vld [vmem:[#allocation6 + $0xa58] sm:$0xff]
    %v519 = vld [vmem:[#allocation6 + $0xa60] sm:$0xff]
    %v520 = vld [vmem:[#allocation6 + $0xa68] sm:$0xff]
    %v521 = vld [vmem:[#allocation6 + $0xa70] sm:$0xff]
    %v522 = vld [vmem:[#allocation6 + $0xa78] sm:$0xff]
    %v523 = vld [vmem:[#allocation6 + $0xa80] sm:$0xff]
    %v524 = vld [vmem:[#allocation6 + $0xa88] sm:$0xff]
    %v525 = vld [vmem:[#allocation6 + $0xa90] sm:$0xff]
    %v526 = vld [vmem:[#allocation6 + $0xa98] sm:$0xff]
    %v527 = vld [vmem:[#allocation6 + $0xaa0] sm:$0xff]
    %v528 = vld [vmem:[#allocation6 + $0xaa8] sm:$0xff]
    %v529 = vld [vmem:[#allocation6 + $0xab0] sm:$0xff]
    %v530 = vld [vmem:[#allocation6 + $0xab8] sm:$0xff]
    %v531 = vld [vmem:[#allocation6 + $0xac0] sm:$0xff]
    %v532 = vld [vmem:[#allocation6 + $0xac8] sm:$0xff]
    %v533 = vld [vmem:[#allocation6 + $0xad0] sm:$0xff]
    %v534 = vld [vmem:[#allocation6 + $0xad8] sm:$0xff]
    %v535 = vld [vmem:[#allocation6 + $0xae0] sm:$0xff]
    %v536 = vld [vmem:[#allocation6 + $0xae8] sm:$0xff]
    %v537 = vld [vmem:[#allocation6 + $0xaf0] sm:$0xff]
    %v538 = vld [vmem:[#allocation6 + $0xaf8] sm:$0xff]
    %v539 = vld [vmem:[#allocation6 + $0xb00] sm:$0xff]
    %v540 = vld [vmem:[#allocation6 + $0xb08] sm:$0xff]
    %v541 = vld [vmem:[#allocation6 + $0xb10] sm:$0xff]
    %v542 = vld [vmem:[#allocation6 + $0xb18] sm:$0xff]
    %v543 = vld [vmem:[#allocation6 + $0xb20] sm:$0xff]
    %v544 = vld [vmem:[#allocation6 + $0xb28] sm:$0xff]
    %v545 = vld [vmem:[#allocation6 + $0xb30] sm:$0xff]
    %v546 = vld [vmem:[#allocation6 + $0xb38] sm:$0xff]
    %v547 = vld [vmem:[#allocation6 + $0xb40] sm:$0xff]
    %v548 = vld [vmem:[#allocation6 + $0xb48] sm:$0xff]
    %v549 = vld [vmem:[#allocation6 + $0xb50] sm:$0xff]
    %v550 = vld [vmem:[#allocation6 + $0xb58] sm:$0xff]
    %v551 = vld [vmem:[#allocation6 + $0xb60] sm:$0xff]
    %v552 = vld [vmem:[#allocation6 + $0xb68] sm:$0xff]
    %v553 = vld [vmem:[#allocation6 + $0xb70] sm:$0xff]
    %v554 = vld [vmem:[#allocation6 + $0xb78] sm:$0xff]
    %v555 = vld [vmem:[#allocation6 + $0xb80] sm:$0xff]
    %v556 = vld [vmem:[#allocation6 + $0xb88] sm:$0xff]
    %v557 = vld [vmem:[#allocation6 + $0xb90] sm:$0xff]
    %v558 = vld [vmem:[#allocation6 + $0xb98] sm:$0xff]
    %v559 = vld [vmem:[#allocation6 + $0xba0] sm:$0xff]
    %v560 = vld [vmem:[#allocation6 + $0xba8] sm:$0xff]
    %v561 = vld [vmem:[#allocation6 + $0xbb0] sm:$0xff]
    %v562 = vld [vmem:[#allocation6 + $0xbb8] sm:$0xff]
    %v563 = vld [vmem:[#allocation6 + $0xbc0] sm:$0xff]
    %v564 = vld [vmem:[#allocation6 + $0xbc8] sm:$0xff]
    %v565 = vld [vmem:[#allocation6 + $0xbd0] sm:$0xff]
    %v566 = vld [vmem:[#allocation6 + $0xbd8] sm:$0xff]
    %v567 = vld [vmem:[#allocation6 + $0xbe0] sm:$0xff]
    %v568 = vld [vmem:[#allocation6 + $0xbe8] sm:$0xff]
    %v569 = vld [vmem:[#allocation6 + $0xbf0] sm:$0xff]
    %v570 = vld [vmem:[#allocation6 + $0xbf8] sm:$0xff]
    %v571 = vld [vmem:[#allocation6 + $0xc00] sm:$0xff]
    %v572 = vld [vmem:[#allocation6 + $0xc08] sm:$0xff]
    %v573 = vld [vmem:[#allocation6 + $0xc10] sm:$0xff]
    %v574 = vld [vmem:[#allocation6 + $0xc18] sm:$0xff]
    %v575 = vld [vmem:[#allocation6 + $0xc20] sm:$0xff]
    %v576 = vld [vmem:[#allocation6 + $0xc28] sm:$0xff]
    %v577 = vld [vmem:[#allocation6 + $0xc30] sm:$0xff]
    %v578 = vld [vmem:[#allocation6 + $0xc38] sm:$0xff]
    %v579 = vld [vmem:[#allocation6 + $0xc40] sm:$0xff]
    %v580 = vld [vmem:[#allocation6 + $0xc48] sm:$0xff]
    %v581 = vld [vmem:[#allocation6 + $0xc50] sm:$0xff]
    %v582 = vld [vmem:[#allocation6 + $0xc58] sm:$0xff]
    %v583 = vld [vmem:[#allocation6 + $0xc60] sm:$0xff]
    %v584 = vld [vmem:[#allocation6 + $0xc68] sm:$0xff]
    %v585 = vld [vmem:[#allocation6 + $0xc70] sm:$0xff]
    %v586 = vld [vmem:[#allocation6 + $0xc78] sm:$0xff]
    %v587 = vld [vmem:[#allocation6 + $0xc80] sm:$0xff]
    %v588 = vld [vmem:[#allocation6 + $0xc88] sm:$0xff]
    %v589 = vld [vmem:[#allocation6 + $0xc90] sm:$0xff]
    %v590 = vld [vmem:[#allocation6 + $0xc98] sm:$0xff]
    %v591 = vld [vmem:[#allocation6 + $0xca0] sm:$0xff]
    %v592 = vld [vmem:[#allocation6 + $0xca8] sm:$0xff]
    %v593 = vld [vmem:[#allocation6 + $0xcb0] sm:$0xff]
    %v594 = vld [vmem:[#allocation6 + $0xcb8] sm:$0xff]
    %v595 = vld [vmem:[#allocation6 + $0xcc0] sm:$0xff]
    %v596 = vld [vmem:[#allocation6 + $0xcc8] sm:$0xff]
    %v597 = vld [vmem:[#allocation6 + $0xcd0] sm:$0xff]
    %v598 = vld [vmem:[#allocation6 + $0xcd8] sm:$0xff]
    %v599 = vld [vmem:[#allocation6 + $0xce0] sm:$0xff]
    %v600 = vld [vmem:[#allocation6 + $0xce8] sm:$0xff]
    %v601 = vld [vmem:[#allocation6 + $0xcf0] sm:$0xff]
    %v602 = vld [vmem:[#allocation6 + $0xcf8] sm:$0xff]
    %v603 = vld [vmem:[#allocation6 + $0xd00] sm:$0xff]
    %v604 = vld [vmem:[#allocation6 + $0xd08] sm:$0xff]
    %v605 = vld [vmem:[#allocation6 + $0xd10] sm:$0xff]
    %v606 = vld [vmem:[#allocation6 + $0xd18] sm:$0xff]
    %v607 = vld [vmem:[#allocation6 + $0xd20] sm:$0xff]
    %v608 = vld [vmem:[#allocation6 + $0xd28] sm:$0xff]
    %v609 = vld [vmem:[#allocation6 + $0xd30] sm:$0xff]
    %v610 = vld [vmem:[#allocation6 + $0xd38] sm:$0xff]
    %v611 = vld [vmem:[#allocation6 + $0xd40] sm:$0xff]
    %v612 = vld [vmem:[#allocation6 + $0xd48] sm:$0xff]
    %v613 = vld [vmem:[#allocation6 + $0xd50] sm:$0xff]
    %v614 = vld [vmem:[#allocation6 + $0xd58] sm:$0xff]
    %v615 = vld [vmem:[#allocation6 + $0xd60] sm:$0xff]
    %v616 = vld [vmem:[#allocation6 + $0xd68] sm:$0xff]
    %v617 = vld [vmem:[#allocation6 + $0xd70] sm:$0xff]
    %v618 = vld [vmem:[#allocation6 + $0xd78] sm:$0xff]
    %v619 = vld [vmem:[#allocation6 + $0xd80] sm:$0xff]
    %v620 = vld [vmem:[#allocation6 + $0xd88] sm:$0xff]
    %v621 = vld [vmem:[#allocation6 + $0xd90] sm:$0xff]
    %v622 = vld [vmem:[#allocation6 + $0xd98] sm:$0xff]
    %v623 = vld [vmem:[#allocation6 + $0xda0] sm:$0xff]
    %v624 = vld [vmem:[#allocation6 + $0xda8] sm:$0xff]
    %v625 = vld [vmem:[#allocation6 + $0xdb0] sm:$0xff]
    %v626 = vld [vmem:[#allocation6 + $0xdb8] sm:$0xff]
    %v627 = vld [vmem:[#allocation6 + $0xdc0] sm:$0xff]
    %v628 = vld [vmem:[#allocation6 + $0xdc8] sm:$0xff]
    %v629 = vld [vmem:[#allocation6 + $0xdd0] sm:$0xff]
    %v630 = vld [vmem:[#allocation6 + $0xdd8] sm:$0xff]
    %v631 = vld [vmem:[#allocation6 + $0xde0] sm:$0xff]
    %v632 = vld [vmem:[#allocation6 + $0xde8] sm:$0xff]
    %v633 = vld [vmem:[#allocation6 + $0xdf0] sm:$0xff]
    %v634 = vld [vmem:[#allocation6 + $0xdf8] sm:$0xff]
    %v635 = vld [vmem:[#allocation6 + $0xe00] sm:$0xff]
    %v636 = vld [vmem:[#allocation6 + $0xe08] sm:$0xff]
    %v637 = vld [vmem:[#allocation6 + $0xe10] sm:$0xff]
    %v638 = vld [vmem:[#allocation6 + $0xe18] sm:$0xff]
    %v639 = vld [vmem:[#allocation6 + $0xe20] sm:$0xff]
    %v640 = vld [vmem:[#allocation6 + $0xe28] sm:$0xff]
    %v641 = vld [vmem:[#allocation6 + $0xe30] sm:$0xff]
    %v642 = vld [vmem:[#allocation6 + $0xe38] sm:$0xff]
    %v643 = vld [vmem:[#allocation6 + $0xe40] sm:$0xff]
    %v644 = vld [vmem:[#allocation6 + $0xe48] sm:$0xff]
    %v645 = vld [vmem:[#allocation6 + $0xe50] sm:$0xff]
    %v646 = vld [vmem:[#allocation6 + $0xe58] sm:$0xff]
    %v647 = vld [vmem:[#allocation6 + $0xe60] sm:$0xff]
    %v648 = vld [vmem:[#allocation6 + $0xe68] sm:$0xff]
    %v649 = vld [vmem:[#allocation6 + $0xe70] sm:$0xff]
    %v650 = vld [vmem:[#allocation6 + $0xe78] sm:$0xff]
    %v651 = vld [vmem:[#allocation6 + $0xe80] sm:$0xff]
    %v652 = vld [vmem:[#allocation6 + $0xe88] sm:$0xff]
    %v653 = vld [vmem:[#allocation6 + $0xe90] sm:$0xff]
    %v654 = vld [vmem:[#allocation6 + $0xe98] sm:$0xff]
    %v655 = vld [vmem:[#allocation6 + $0xea0] sm:$0xff]
    %v656 = vld [vmem:[#allocation6 + $0xea8] sm:$0xff]
    %v657 = vld [vmem:[#allocation6 + $0xeb0] sm:$0xff]
    %v658 = vld [vmem:[#allocation6 + $0xeb8] sm:$0xff]
    %v659 = vld [vmem:[#allocation6 + $0xec0] sm:$0xff]
    %v660 = vld [vmem:[#allocation6 + $0xec8] sm:$0xff]
    %v661 = vld [vmem:[#allocation6 + $0xed0] sm:$0xff]
    %v662 = vld [vmem:[#allocation6 + $0xed8] sm:$0xff]
    %v663 = vld [vmem:[#allocation6 + $0xee0] sm:$0xff]
    %v664 = vld [vmem:[#allocation6 + $0xee8] sm:$0xff]
    %v665 = vld [vmem:[#allocation6 + $0xef0] sm:$0xff]
    %v666 = vld [vmem:[#allocation6 + $0xef8] sm:$0xff]
    %v667 = vld [vmem:[#allocation6 + $0xf00] sm:$0xff]
    %v668 = vld [vmem:[#allocation6 + $0xf08] sm:$0xff]
    %v669 = vld [vmem:[#allocation6 + $0xf10] sm:$0xff]
    %v670 = vld [vmem:[#allocation6 + $0xf18] sm:$0xff]
    %v671 = vld [vmem:[#allocation6 + $0xf20] sm:$0xff]
    %v672 = vld [vmem:[#allocation6 + $0xf28] sm:$0xff]
    %v673 = vld [vmem:[#allocation6 + $0xf30] sm:$0xff]
    %v674 = vld [vmem:[#allocation6 + $0xf38] sm:$0xff]
    %v675 = vld [vmem:[#allocation6 + $0xf40] sm:$0xff]
    %v676 = vld [vmem:[#allocation6 + $0xf48] sm:$0xff]
    %v677 = vld [vmem:[#allocation6 + $0xf50] sm:$0xff]
    %v678 = vld [vmem:[#allocation6 + $0xf58] sm:$0xff]
    %v679 = vld [vmem:[#allocation6 + $0xf60] sm:$0xff]
    %v680 = vld [vmem:[#allocation6 + $0xf68] sm:$0xff]
    %v681 = vld [vmem:[#allocation6 + $0xf70] sm:$0xff]
    %v682 = vld [vmem:[#allocation6 + $0xf78] sm:$0xff]
    %v683 = vld [vmem:[#allocation6 + $0xf80] sm:$0xff]
    %v684 = vld [vmem:[#allocation6 + $0xf88] sm:$0xff]
    %v685 = vld [vmem:[#allocation6 + $0xf90] sm:$0xff]
    %v686 = vld [vmem:[#allocation6 + $0xf98] sm:$0xff]
    %v687 = vld [vmem:[#allocation6 + $0xfa0] sm:$0xff]
    %v688 = vld [vmem:[#allocation6 + $0xfa8] sm:$0xff]
    %v689 = vld [vmem:[#allocation6 + $0xfb0] sm:$0xff]
    %v690 = vld [vmem:[#allocation6 + $0xfb8] sm:$0xff]
    %v691 = vld [vmem:[#allocation6 + $0xfc0] sm:$0xff]
    %v692 = vld [vmem:[#allocation6 + $0xfc8] sm:$0xff]
    %v693 = vld [vmem:[#allocation6 + $0xfd0] sm:$0xff]
    %v694 = vld [vmem:[#allocation6 + $0xfd8] sm:$0xff]
    %v695 = vld [vmem:[#allocation6 + $0xfe0] sm:$0xff]
    %v696 = vld [vmem:[#allocation6 + $0xfe8] sm:$0xff]
    %v697 = vld [vmem:[#allocation6 + $0xff0] sm:$0xff]
    %v698 = vld [vmem:[#allocation6 + $0xff8] sm:$0xff]
    %v1211 = vunpack.c.l.b16 %v187
    %v1212 = vunpack.c.h.b16 %v187
    %v1213 = vunpack.c.l.b16 %v188
    %v1214 = vunpack.c.h.b16 %v188
    %v1215 = vunpack.c.l.b16 %v189
    %v1216 = vunpack.c.h.b16 %v189
    %v1217 = vunpack.c.l.b16 %v190
    %v1218 = vunpack.c.h.b16 %v190
    %v1219 = vunpack.c.l.b16 %v191
    %v1220 = vunpack.c.h.b16 %v191
    %v1221 = vunpack.c.l.b16 %v192
    %v1222 = vunpack.c.h.b16 %v192
    %v1223 = vunpack.c.l.b16 %v193
    %v1224 = vunpack.c.h.b16 %v193
    %v1225 = vunpack.c.l.b16 %v194
    %v1226 = vunpack.c.h.b16 %v194
    %v1227 = vunpack.c.l.b16 %v195
    %v1228 = vunpack.c.h.b16 %v195
    %v1229 = vunpack.c.l.b16 %v196
    %v1230 = vunpack.c.h.b16 %v196
    %v1231 = vunpack.c.l.b16 %v197
    %v1232 = vunpack.c.h.b16 %v197
    %v1233 = vunpack.c.l.b16 %v198
    %v1234 = vunpack.c.h.b16 %v198
    %v1235 = vunpack.c.l.b16 %v199
    %v1236 = vunpack.c.h.b16 %v199
    %v1237 = vunpack.c.l.b16 %v200
    %v1238 = vunpack.c.h.b16 %v200
    %v1239 = vunpack.c.l.b16 %v201
    %v1240 = vunpack.c.h.b16 %v201
    %v1241 = vunpack.c.l.b16 %v202
    %v1242 = vunpack.c.h.b16 %v202
    %v1243 = vunpack.c.l.b16 %v203
    %v1244 = vunpack.c.h.b16 %v203
    %v1245 = vunpack.c.l.b16 %v204
    %v1246 = vunpack.c.h.b16 %v204
    %v1247 = vunpack.c.l.b16 %v205
    %v1248 = vunpack.c.h.b16 %v205
    %v1249 = vunpack.c.l.b16 %v206
    %v1250 = vunpack.c.h.b16 %v206
    %v1251 = vunpack.c.l.b16 %v207
    %v1252 = vunpack.c.h.b16 %v207
    %v1253 = vunpack.c.l.b16 %v208
    %v1254 = vunpack.c.h.b16 %v208
    %v1255 = vunpack.c.l.b16 %v209
    %v1256 = vunpack.c.h.b16 %v209
    %v1257 = vunpack.c.l.b16 %v210
    %v1258 = vunpack.c.h.b16 %v210
    %v1259 = vunpack.c.l.b16 %v211
    %v1260 = vunpack.c.h.b16 %v211
    %v1261 = vunpack.c.l.b16 %v212
    %v1262 = vunpack.c.h.b16 %v212
    %v1263 = vunpack.c.l.b16 %v213
    %v1264 = vunpack.c.h.b16 %v213
    %v1265 = vunpack.c.l.b16 %v214
    %v1266 = vunpack.c.h.b16 %v214
    %v1267 = vunpack.c.l.b16 %v215
    %v1268 = vunpack.c.h.b16 %v215
    %v1269 = vunpack.c.l.b16 %v216
    %v1270 = vunpack.c.h.b16 %v216
    %v1271 = vunpack.c.l.b16 %v217
    %v1272 = vunpack.c.h.b16 %v217
    %v1273 = vunpack.c.l.b16 %v218
    %v1274 = vunpack.c.h.b16 %v218
    %v1275 = vunpack.c.l.b16 %v219
    %v1276 = vunpack.c.h.b16 %v219
    %v1277 = vunpack.c.l.b16 %v220
    %v1278 = vunpack.c.h.b16 %v220
    %v1279 = vunpack.c.l.b16 %v221
    %v1280 = vunpack.c.h.b16 %v221
    %v1281 = vunpack.c.l.b16 %v222
    %v1282 = vunpack.c.h.b16 %v222
    %v1283 = vunpack.c.l.b16 %v223
    %v1284 = vunpack.c.h.b16 %v223
    %v1285 = vunpack.c.l.b16 %v224
    %v1286 = vunpack.c.h.b16 %v224
    %v1287 = vunpack.c.l.b16 %v225
    %v1288 = vunpack.c.h.b16 %v225
    %v1289 = vunpack.c.l.b16 %v226
    %v1290 = vunpack.c.h.b16 %v226
    %v1291 = vunpack.c.l.b16 %v227
    %v1292 = vunpack.c.h.b16 %v227
    %v1293 = vunpack.c.l.b16 %v228
    %v1294 = vunpack.c.h.b16 %v228
    %v1295 = vunpack.c.l.b16 %v229
    %v1296 = vunpack.c.h.b16 %v229
    %v1297 = vunpack.c.l.b16 %v230
    %v1298 = vunpack.c.h.b16 %v230
    %v1299 = vunpack.c.l.b16 %v231
    %v1300 = vunpack.c.h.b16 %v231
    %v1301 = vunpack.c.l.b16 %v232
    %v1302 = vunpack.c.h.b16 %v232
    %v1303 = vunpack.c.l.b16 %v233
    %v1304 = vunpack.c.h.b16 %v233
    %v1305 = vunpack.c.l.b16 %v234
    %v1306 = vunpack.c.h.b16 %v234
    %v1307 = vunpack.c.l.b16 %v235
    %v1308 = vunpack.c.h.b16 %v235
    %v1309 = vunpack.c.l.b16 %v236
    %v1310 = vunpack.c.h.b16 %v236
    %v1311 = vunpack.c.l.b16 %v237
    %v1312 = vunpack.c.h.b16 %v237
    %v1313 = vunpack.c.l.b16 %v238
    %v1314 = vunpack.c.h.b16 %v238
    %v1315 = vunpack.c.l.b16 %v239
    %v1316 = vunpack.c.h.b16 %v239
    %v1317 = vunpack.c.l.b16 %v240
    %v1318 = vunpack.c.h.b16 %v240
    %v1319 = vunpack.c.l.b16 %v241
    %v1320 = vunpack.c.h.b16 %v241
    %v1321 = vunpack.c.l.b16 %v242
    %v1322 = vunpack.c.h.b16 %v242
    %v1323 = vunpack.c.l.b16 %v243
    %v1324 = vunpack.c.h.b16 %v243
    %v1325 = vunpack.c.l.b16 %v244
    %v1326 = vunpack.c.h.b16 %v244
    %v1327 = vunpack.c.l.b16 %v245
    %v1328 = vunpack.c.h.b16 %v245
    %v1329 = vunpack.c.l.b16 %v246
    %v1330 = vunpack.c.h.b16 %v246
    %v1331 = vunpack.c.l.b16 %v247
    %v1332 = vunpack.c.h.b16 %v247
    %v1333 = vunpack.c.l.b16 %v248
    %v1334 = vunpack.c.h.b16 %v248
    %v1335 = vunpack.c.l.b16 %v249
    %v1336 = vunpack.c.h.b16 %v249
    %v1337 = vunpack.c.l.b16 %v250
    %v1338 = vunpack.c.h.b16 %v250
    %v1339 = vunpack.c.l.b16 %v251
    %v1340 = vunpack.c.h.b16 %v251
    %v1341 = vunpack.c.l.b16 %v252
    %v1342 = vunpack.c.h.b16 %v252
    %v1343 = vunpack.c.l.b16 %v253
    %v1344 = vunpack.c.h.b16 %v253
    %v1345 = vunpack.c.l.b16 %v254
    %v1346 = vunpack.c.h.b16 %v254
    %v1347 = vunpack.c.l.b16 %v255
    %v1348 = vunpack.c.h.b16 %v255
    %v1349 = vunpack.c.l.b16 %v256
    %v1350 = vunpack.c.h.b16 %v256
    %v1351 = vunpack.c.l.b16 %v257
    %v1352 = vunpack.c.h.b16 %v257
    %v1353 = vunpack.c.l.b16 %v258
    %v1354 = vunpack.c.h.b16 %v258
    %v1355 = vunpack.c.l.b16 %v259
    %v1356 = vunpack.c.h.b16 %v259
    %v1357 = vunpack.c.l.b16 %v260
    %v1358 = vunpack.c.h.b16 %v260
    %v1359 = vunpack.c.l.b16 %v261
    %v1360 = vunpack.c.h.b16 %v261
    %v1361 = vunpack.c.l.b16 %v262
    %v1362 = vunpack.c.h.b16 %v262
    %v1363 = vunpack.c.l.b16 %v263
    %v1364 = vunpack.c.h.b16 %v263
    %v1365 = vunpack.c.l.b16 %v264
    %v1366 = vunpack.c.h.b16 %v264
    %v1367 = vunpack.c.l.b16 %v265
    %v1368 = vunpack.c.h.b16 %v265
    %v1369 = vunpack.c.l.b16 %v266
    %v1370 = vunpack.c.h.b16 %v266
    %v1371 = vunpack.c.l.b16 %v267
    %v1372 = vunpack.c.h.b16 %v267
    %v1373 = vunpack.c.l.b16 %v268
    %v1374 = vunpack.c.h.b16 %v268
    %v1375 = vunpack.c.l.b16 %v269
    %v1376 = vunpack.c.h.b16 %v269
    %v1377 = vunpack.c.l.b16 %v270
    %v1378 = vunpack.c.h.b16 %v270
    %v1379 = vunpack.c.l.b16 %v271
    %v1380 = vunpack.c.h.b16 %v271
    %v1381 = vunpack.c.l.b16 %v272
    %v1382 = vunpack.c.h.b16 %v272
    %v1383 = vunpack.c.l.b16 %v273
    %v1384 = vunpack.c.h.b16 %v273
    %v1385 = vunpack.c.l.b16 %v274
    %v1386 = vunpack.c.h.b16 %v274
    %v1387 = vunpack.c.l.b16 %v275
    %v1388 = vunpack.c.h.b16 %v275
    %v1389 = vunpack.c.l.b16 %v276
    %v1390 = vunpack.c.h.b16 %v276
    %v1391 = vunpack.c.l.b16 %v277
    %v1392 = vunpack.c.h.b16 %v277
    %v1393 = vunpack.c.l.b16 %v278
    %v1394 = vunpack.c.h.b16 %v278
    %v1395 = vunpack.c.l.b16 %v279
    %v1396 = vunpack.c.h.b16 %v279
    %v1397 = vunpack.c.l.b16 %v280
    %v1398 = vunpack.c.h.b16 %v280
    %v1399 = vunpack.c.l.b16 %v281
    %v1400 = vunpack.c.h.b16 %v281
    %v1401 = vunpack.c.l.b16 %v282
    %v1402 = vunpack.c.h.b16 %v282
    %v1403 = vunpack.c.l.b16 %v283
    %v1404 = vunpack.c.h.b16 %v283
    %v1405 = vunpack.c.l.b16 %v284
    %v1406 = vunpack.c.h.b16 %v284
    %v1407 = vunpack.c.l.b16 %v285
    %v1408 = vunpack.c.h.b16 %v285
    %v1409 = vunpack.c.l.b16 %v286
    %v1410 = vunpack.c.h.b16 %v286
    %v1411 = vunpack.c.l.b16 %v287
    %v1412 = vunpack.c.h.b16 %v287
    %v1413 = vunpack.c.l.b16 %v288
    %v1414 = vunpack.c.h.b16 %v288
    %v1415 = vunpack.c.l.b16 %v289
    %v1416 = vunpack.c.h.b16 %v289
    %v1417 = vunpack.c.l.b16 %v290
    %v1418 = vunpack.c.h.b16 %v290
    %v1419 = vunpack.c.l.b16 %v291
    %v1420 = vunpack.c.h.b16 %v291
    %v1421 = vunpack.c.l.b16 %v292
    %v1422 = vunpack.c.h.b16 %v292
    %v1423 = vunpack.c.l.b16 %v293
    %v1424 = vunpack.c.h.b16 %v293
    %v1425 = vunpack.c.l.b16 %v294
    %v1426 = vunpack.c.h.b16 %v294
    %v1427 = vunpack.c.l.b16 %v295
    %v1428 = vunpack.c.h.b16 %v295
    %v1429 = vunpack.c.l.b16 %v296
    %v1430 = vunpack.c.h.b16 %v296
    %v1431 = vunpack.c.l.b16 %v297
    %v1432 = vunpack.c.h.b16 %v297
    %v1433 = vunpack.c.l.b16 %v298
    %v1434 = vunpack.c.h.b16 %v298
    %v1435 = vunpack.c.l.b16 %v299
    %v1436 = vunpack.c.h.b16 %v299
    %v1437 = vunpack.c.l.b16 %v300
    %v1438 = vunpack.c.h.b16 %v300
    %v1439 = vunpack.c.l.b16 %v301
    %v1440 = vunpack.c.h.b16 %v301
    %v1441 = vunpack.c.l.b16 %v302
    %v1442 = vunpack.c.h.b16 %v302
    %v1443 = vunpack.c.l.b16 %v303
    %v1444 = vunpack.c.h.b16 %v303
    %v1445 = vunpack.c.l.b16 %v304
    %v1446 = vunpack.c.h.b16 %v304
    %v1447 = vunpack.c.l.b16 %v305
    %v1448 = vunpack.c.h.b16 %v305
    %v1449 = vunpack.c.l.b16 %v306
    %v1450 = vunpack.c.h.b16 %v306
    %v1451 = vunpack.c.l.b16 %v307
    %v1452 = vunpack.c.h.b16 %v307
    %v1453 = vunpack.c.l.b16 %v308
    %v1454 = vunpack.c.h.b16 %v308
    %v1455 = vunpack.c.l.b16 %v309
    %v1456 = vunpack.c.h.b16 %v309
    %v1457 = vunpack.c.l.b16 %v310
    %v1458 = vunpack.c.h.b16 %v310
    %v1459 = vunpack.c.l.b16 %v311
    %v1460 = vunpack.c.h.b16 %v311
    %v1461 = vunpack.c.l.b16 %v312
    %v1462 = vunpack.c.h.b16 %v312
    %v1463 = vunpack.c.l.b16 %v313
    %v1464 = vunpack.c.h.b16 %v313
    %v1465 = vunpack.c.l.b16 %v314
    %v1466 = vunpack.c.h.b16 %v314
    %v1467 = vunpack.c.l.b16 %v315
    %v1468 = vunpack.c.h.b16 %v315
    %v1469 = vunpack.c.l.b16 %v316
    %v1470 = vunpack.c.h.b16 %v316
    %v1471 = vunpack.c.l.b16 %v317
    %v1472 = vunpack.c.h.b16 %v317
    %v1473 = vunpack.c.l.b16 %v318
    %v1474 = vunpack.c.h.b16 %v318
    %v1475 = vunpack.c.l.b16 %v319
    %v1476 = vunpack.c.h.b16 %v319
    %v1477 = vunpack.c.l.b16 %v320
    %v1478 = vunpack.c.h.b16 %v320
    %v1479 = vunpack.c.l.b16 %v321
    %v1480 = vunpack.c.h.b16 %v321
    %v1481 = vunpack.c.l.b16 %v322
    %v1482 = vunpack.c.h.b16 %v322
    %v1483 = vunpack.c.l.b16 %v323
    %v1484 = vunpack.c.h.b16 %v323
    %v1485 = vunpack.c.l.b16 %v324
    %v1486 = vunpack.c.h.b16 %v324
    %v1487 = vunpack.c.l.b16 %v325
    %v1488 = vunpack.c.h.b16 %v325
    %v1489 = vunpack.c.l.b16 %v326
    %v1490 = vunpack.c.h.b16 %v326
    %v1491 = vunpack.c.l.b16 %v327
    %v1492 = vunpack.c.h.b16 %v327
    %v1493 = vunpack.c.l.b16 %v328
    %v1494 = vunpack.c.h.b16 %v328
    %v1495 = vunpack.c.l.b16 %v329
    %v1496 = vunpack.c.h.b16 %v329
    %v1497 = vunpack.c.l.b16 %v330
    %v1498 = vunpack.c.h.b16 %v330
    %v1499 = vunpack.c.l.b16 %v331
    %v1500 = vunpack.c.h.b16 %v331
    %v1501 = vunpack.c.l.b16 %v332
    %v1502 = vunpack.c.h.b16 %v332
    %v1503 = vunpack.c.l.b16 %v333
    %v1504 = vunpack.c.h.b16 %v333
    %v1505 = vunpack.c.l.b16 %v334
    %v1506 = vunpack.c.h.b16 %v334
    %v1507 = vunpack.c.l.b16 %v335
    %v1508 = vunpack.c.h.b16 %v335
    %v1509 = vunpack.c.l.b16 %v336
    %v1510 = vunpack.c.h.b16 %v336
    %v1511 = vunpack.c.l.b16 %v337
    %v1512 = vunpack.c.h.b16 %v337
    %v1513 = vunpack.c.l.b16 %v338
    %v1514 = vunpack.c.h.b16 %v338
    %v1515 = vunpack.c.l.b16 %v339
    %v1516 = vunpack.c.h.b16 %v339
    %v1517 = vunpack.c.l.b16 %v340
    %v1518 = vunpack.c.h.b16 %v340
    %v1519 = vunpack.c.l.b16 %v341
    %v1520 = vunpack.c.h.b16 %v341
    %v1521 = vunpack.c.l.b16 %v342
    %v1522 = vunpack.c.h.b16 %v342
    %v1523 = vunpack.c.l.b16 %v343
    %v1524 = vunpack.c.h.b16 %v343
    %v1525 = vunpack.c.l.b16 %v344
    %v1526 = vunpack.c.h.b16 %v344
    %v1527 = vunpack.c.l.b16 %v345
    %v1528 = vunpack.c.h.b16 %v345
    %v1529 = vunpack.c.l.b16 %v346
    %v1530 = vunpack.c.h.b16 %v346
    %v1531 = vunpack.c.l.b16 %v347
    %v1532 = vunpack.c.h.b16 %v347
    %v1533 = vunpack.c.l.b16 %v348
    %v1534 = vunpack.c.h.b16 %v348
    %v1535 = vunpack.c.l.b16 %v349
    %v1536 = vunpack.c.h.b16 %v349
    %v1537 = vunpack.c.l.b16 %v350
    %v1538 = vunpack.c.h.b16 %v350
    %v1539 = vunpack.c.l.b16 %v351
    %v1540 = vunpack.c.h.b16 %v351
    %v1541 = vunpack.c.l.b16 %v352
    %v1542 = vunpack.c.h.b16 %v352
    %v1543 = vunpack.c.l.b16 %v353
    %v1544 = vunpack.c.h.b16 %v353
    %v1545 = vunpack.c.l.b16 %v354
    %v1546 = vunpack.c.h.b16 %v354
    %v1547 = vunpack.c.l.b16 %v355
    %v1548 = vunpack.c.h.b16 %v355
    %v1549 = vunpack.c.l.b16 %v356
    %v1550 = vunpack.c.h.b16 %v356
    %v1551 = vunpack.c.l.b16 %v357
    %v1552 = vunpack.c.h.b16 %v357
    %v1553 = vunpack.c.l.b16 %v358
    %v1554 = vunpack.c.h.b16 %v358
    %v1555 = vunpack.c.l.b16 %v359
    %v1556 = vunpack.c.h.b16 %v359
    %v1557 = vunpack.c.l.b16 %v360
    %v1558 = vunpack.c.h.b16 %v360
    %v1559 = vunpack.c.l.b16 %v361
    %v1560 = vunpack.c.h.b16 %v361
    %v1561 = vunpack.c.l.b16 %v362
    %v1562 = vunpack.c.h.b16 %v362
    %v1563 = vunpack.c.l.b16 %v363
    %v1564 = vunpack.c.h.b16 %v363
    %v1565 = vunpack.c.l.b16 %v364
    %v1566 = vunpack.c.h.b16 %v364
    %v1567 = vunpack.c.l.b16 %v365
    %v1568 = vunpack.c.h.b16 %v365
    %v1569 = vunpack.c.l.b16 %v366
    %v1570 = vunpack.c.h.b16 %v366
    %v1571 = vunpack.c.l.b16 %v367
    %v1572 = vunpack.c.h.b16 %v367
    %v1573 = vunpack.c.l.b16 %v368
    %v1574 = vunpack.c.h.b16 %v368
    %v1575 = vunpack.c.l.b16 %v369
    %v1576 = vunpack.c.h.b16 %v369
    %v1577 = vunpack.c.l.b16 %v370
    %v1578 = vunpack.c.h.b16 %v370
    %v1579 = vunpack.c.l.b16 %v371
    %v1580 = vunpack.c.h.b16 %v371
    %v1581 = vunpack.c.l.b16 %v372
    %v1582 = vunpack.c.h.b16 %v372
    %v1583 = vunpack.c.l.b16 %v373
    %v1584 = vunpack.c.h.b16 %v373
    %v1585 = vunpack.c.l.b16 %v374
    %v1586 = vunpack.c.h.b16 %v374
    %v1587 = vunpack.c.l.b16 %v375
    %v1588 = vunpack.c.h.b16 %v375
    %v1589 = vunpack.c.l.b16 %v376
    %v1590 = vunpack.c.h.b16 %v376
    %v1591 = vunpack.c.l.b16 %v377
    %v1592 = vunpack.c.h.b16 %v377
    %v1593 = vunpack.c.l.b16 %v378
    %v1594 = vunpack.c.h.b16 %v378
    %v1595 = vunpack.c.l.b16 %v379
    %v1596 = vunpack.c.h.b16 %v379
    %v1597 = vunpack.c.l.b16 %v380
    %v1598 = vunpack.c.h.b16 %v380
    %v1599 = vunpack.c.l.b16 %v381
    %v1600 = vunpack.c.h.b16 %v381
    %v1601 = vunpack.c.l.b16 %v382
    %v1602 = vunpack.c.h.b16 %v382
    %v1603 = vunpack.c.l.b16 %v383
    %v1604 = vunpack.c.h.b16 %v383
    %v1605 = vunpack.c.l.b16 %v384
    %v1606 = vunpack.c.h.b16 %v384
    %v1607 = vunpack.c.l.b16 %v385
    %v1608 = vunpack.c.h.b16 %v385
    %v1609 = vunpack.c.l.b16 %v386
    %v1610 = vunpack.c.h.b16 %v386
    %v1611 = vunpack.c.l.b16 %v387
    %v1612 = vunpack.c.h.b16 %v387
    %v1613 = vunpack.c.l.b16 %v388
    %v1614 = vunpack.c.h.b16 %v388
    %v1615 = vunpack.c.l.b16 %v389
    %v1616 = vunpack.c.h.b16 %v389
    %v1617 = vunpack.c.l.b16 %v390
    %v1618 = vunpack.c.h.b16 %v390
    %v1619 = vunpack.c.l.b16 %v391
    %v1620 = vunpack.c.h.b16 %v391
    %v1621 = vunpack.c.l.b16 %v392
    %v1622 = vunpack.c.h.b16 %v392
    %v1623 = vunpack.c.l.b16 %v393
    %v1624 = vunpack.c.h.b16 %v393
    %v1625 = vunpack.c.l.b16 %v394
    %v1626 = vunpack.c.h.b16 %v394
    %v1627 = vunpack.c.l.b16 %v395
    %v1628 = vunpack.c.h.b16 %v395
    %v1629 = vunpack.c.l.b16 %v396
    %v1630 = vunpack.c.h.b16 %v396
    %v1631 = vunpack.c.l.b16 %v397
    %v1632 = vunpack.c.h.b16 %v397
    %v1633 = vunpack.c.l.b16 %v398
    %v1634 = vunpack.c.h.b16 %v398
    %v1635 = vunpack.c.l.b16 %v399
    %v1636 = vunpack.c.h.b16 %v399
    %v1637 = vunpack.c.l.b16 %v400
    %v1638 = vunpack.c.h.b16 %v400
    %v1639 = vunpack.c.l.b16 %v401
    %v1640 = vunpack.c.h.b16 %v401
    %v1641 = vunpack.c.l.b16 %v402
    %v1642 = vunpack.c.h.b16 %v402
    %v1643 = vunpack.c.l.b16 %v403
    %v1644 = vunpack.c.h.b16 %v403
    %v1645 = vunpack.c.l.b16 %v404
    %v1646 = vunpack.c.h.b16 %v404
    %v1647 = vunpack.c.l.b16 %v405
    %v1648 = vunpack.c.h.b16 %v405
    %v1649 = vunpack.c.l.b16 %v406
    %v1650 = vunpack.c.h.b16 %v406
    %v1651 = vunpack.c.l.b16 %v407
    %v1652 = vunpack.c.h.b16 %v407
    %v1653 = vunpack.c.l.b16 %v408
    %v1654 = vunpack.c.h.b16 %v408
    %v1655 = vunpack.c.l.b16 %v409
    %v1656 = vunpack.c.h.b16 %v409
    %v1657 = vunpack.c.l.b16 %v410
    %v1658 = vunpack.c.h.b16 %v410
    %v1659 = vunpack.c.l.b16 %v411
    %v1660 = vunpack.c.h.b16 %v411
    %v1661 = vunpack.c.l.b16 %v412
    %v1662 = vunpack.c.h.b16 %v412
    %v1663 = vunpack.c.l.b16 %v413
    %v1664 = vunpack.c.h.b16 %v413
    %v1665 = vunpack.c.l.b16 %v414
    %v1666 = vunpack.c.h.b16 %v414
    %v1667 = vunpack.c.l.b16 %v415
    %v1668 = vunpack.c.h.b16 %v415
    %v1669 = vunpack.c.l.b16 %v416
    %v1670 = vunpack.c.h.b16 %v416
    %v1671 = vunpack.c.l.b16 %v417
    %v1672 = vunpack.c.h.b16 %v417
    %v1673 = vunpack.c.l.b16 %v418
    %v1674 = vunpack.c.h.b16 %v418
    %v1675 = vunpack.c.l.b16 %v419
    %v1676 = vunpack.c.h.b16 %v419
    %v1677 = vunpack.c.l.b16 %v420
    %v1678 = vunpack.c.h.b16 %v420
    %v1679 = vunpack.c.l.b16 %v421
    %v1680 = vunpack.c.h.b16 %v421
    %v1681 = vunpack.c.l.b16 %v422
    %v1682 = vunpack.c.h.b16 %v422
    %v1683 = vunpack.c.l.b16 %v423
    %v1684 = vunpack.c.h.b16 %v423
    %v1685 = vunpack.c.l.b16 %v424
    %v1686 = vunpack.c.h.b16 %v424
    %v1687 = vunpack.c.l.b16 %v425
    %v1688 = vunpack.c.h.b16 %v425
    %v1689 = vunpack.c.l.b16 %v426
    %v1690 = vunpack.c.h.b16 %v426
    %v1691 = vunpack.c.l.b16 %v427
    %v1692 = vunpack.c.h.b16 %v427
    %v1693 = vunpack.c.l.b16 %v428
    %v1694 = vunpack.c.h.b16 %v428
    %v1695 = vunpack.c.l.b16 %v429
    %v1696 = vunpack.c.h.b16 %v429
    %v1697 = vunpack.c.l.b16 %v430
    %v1698 = vunpack.c.h.b16 %v430
    %v1699 = vunpack.c.l.b16 %v431
    %v1700 = vunpack.c.h.b16 %v431
    %v1701 = vunpack.c.l.b16 %v432
    %v1702 = vunpack.c.h.b16 %v432
    %v1703 = vunpack.c.l.b16 %v433
    %v1704 = vunpack.c.h.b16 %v433
    %v1705 = vunpack.c.l.b16 %v434
    %v1706 = vunpack.c.h.b16 %v434
    %v1707 = vunpack.c.l.b16 %v435
    %v1708 = vunpack.c.h.b16 %v435
    %v1709 = vunpack.c.l.b16 %v436
    %v1710 = vunpack.c.h.b16 %v436
    %v1711 = vunpack.c.l.b16 %v437
    %v1712 = vunpack.c.h.b16 %v437
    %v1713 = vunpack.c.l.b16 %v438
    %v1714 = vunpack.c.h.b16 %v438
    %v1715 = vunpack.c.l.b16 %v439
    %v1716 = vunpack.c.h.b16 %v439
    %v1717 = vunpack.c.l.b16 %v440
    %v1718 = vunpack.c.h.b16 %v440
    %v1719 = vunpack.c.l.b16 %v441
    %v1720 = vunpack.c.h.b16 %v441
    %v1721 = vunpack.c.l.b16 %v442
    %v1722 = vunpack.c.h.b16 %v442
    %v1723 = vunpack.c.l.b16 %v443
    %v1724 = vunpack.c.h.b16 %v443
    %v1725 = vunpack.c.l.b16 %v444
    %v1726 = vunpack.c.h.b16 %v444
    %v1727 = vunpack.c.l.b16 %v445
    %v1728 = vunpack.c.h.b16 %v445
    %v1729 = vunpack.c.l.b16 %v446
    %v1730 = vunpack.c.h.b16 %v446
    %v1731 = vunpack.c.l.b16 %v447
    %v1732 = vunpack.c.h.b16 %v447
    %v1733 = vunpack.c.l.b16 %v448
    %v1734 = vunpack.c.h.b16 %v448
    %v1735 = vunpack.c.l.b16 %v449
    %v1736 = vunpack.c.h.b16 %v449
    %v1737 = vunpack.c.l.b16 %v450
    %v1738 = vunpack.c.h.b16 %v450
    %v1739 = vunpack.c.l.b16 %v451
    %v1740 = vunpack.c.h.b16 %v451
    %v1741 = vunpack.c.l.b16 %v452
    %v1742 = vunpack.c.h.b16 %v452
    %v1743 = vunpack.c.l.b16 %v453
    %v1744 = vunpack.c.h.b16 %v453
    %v1745 = vunpack.c.l.b16 %v454
    %v1746 = vunpack.c.h.b16 %v454
    %v1747 = vunpack.c.l.b16 %v455
    %v1748 = vunpack.c.h.b16 %v455
    %v1749 = vunpack.c.l.b16 %v456
    %v1750 = vunpack.c.h.b16 %v456
    %v1751 = vunpack.c.l.b16 %v457
    %v1752 = vunpack.c.h.b16 %v457
    %v1753 = vunpack.c.l.b16 %v458
    %v1754 = vunpack.c.h.b16 %v458
    %v1755 = vunpack.c.l.b16 %v459
    %v1756 = vunpack.c.h.b16 %v459
    %v1757 = vunpack.c.l.b16 %v460
    %v1758 = vunpack.c.h.b16 %v460
    %v1759 = vunpack.c.l.b16 %v461
    %v1760 = vunpack.c.h.b16 %v461
    %v1761 = vunpack.c.l.b16 %v462
    %v1762 = vunpack.c.h.b16 %v462
    %v1763 = vunpack.c.l.b16 %v463
    %v1764 = vunpack.c.h.b16 %v463
    %v1765 = vunpack.c.l.b16 %v464
    %v1766 = vunpack.c.h.b16 %v464
    %v1767 = vunpack.c.l.b16 %v465
    %v1768 = vunpack.c.h.b16 %v465
    %v1769 = vunpack.c.l.b16 %v466
    %v1770 = vunpack.c.h.b16 %v466
    %v1771 = vunpack.c.l.b16 %v467
    %v1772 = vunpack.c.h.b16 %v467
    %v1773 = vunpack.c.l.b16 %v468
    %v1774 = vunpack.c.h.b16 %v468
    %v1775 = vunpack.c.l.b16 %v469
    %v1776 = vunpack.c.h.b16 %v469
    %v1777 = vunpack.c.l.b16 %v470
    %v1778 = vunpack.c.h.b16 %v470
    %v1779 = vunpack.c.l.b16 %v471
    %v1780 = vunpack.c.h.b16 %v471
    %v1781 = vunpack.c.l.b16 %v472
    %v1782 = vunpack.c.h.b16 %v472
    %v1783 = vunpack.c.l.b16 %v473
    %v1784 = vunpack.c.h.b16 %v473
    %v1785 = vunpack.c.l.b16 %v474
    %v1786 = vunpack.c.h.b16 %v474
    %v1787 = vunpack.c.l.b16 %v475
    %v1788 = vunpack.c.h.b16 %v475
    %v1789 = vunpack.c.l.b16 %v476
    %v1790 = vunpack.c.h.b16 %v476
    %v1791 = vunpack.c.l.b16 %v477
    %v1792 = vunpack.c.h.b16 %v477
    %v1793 = vunpack.c.l.b16 %v478
    %v1794 = vunpack.c.h.b16 %v478
    %v1795 = vunpack.c.l.b16 %v479
    %v1796 = vunpack.c.h.b16 %v479
    %v1797 = vunpack.c.l.b16 %v480
    %v1798 = vunpack.c.h.b16 %v480
    %v1799 = vunpack.c.l.b16 %v481
    %v1800 = vunpack.c.h.b16 %v481
    %v1801 = vunpack.c.l.b16 %v482
    %v1802 = vunpack.c.h.b16 %v482
    %v1803 = vunpack.c.l.b16 %v483
    %v1804 = vunpack.c.h.b16 %v483
    %v1805 = vunpack.c.l.b16 %v484
    %v1806 = vunpack.c.h.b16 %v484
    %v1807 = vunpack.c.l.b16 %v485
    %v1808 = vunpack.c.h.b16 %v485
    %v1809 = vunpack.c.l.b16 %v486
    %v1810 = vunpack.c.h.b16 %v486
    %v1811 = vunpack.c.l.b16 %v487
    %v1812 = vunpack.c.h.b16 %v487
    %v1813 = vunpack.c.l.b16 %v488
    %v1814 = vunpack.c.h.b16 %v488
    %v1815 = vunpack.c.l.b16 %v489
    %v1816 = vunpack.c.h.b16 %v489
    %v1817 = vunpack.c.l.b16 %v490
    %v1818 = vunpack.c.h.b16 %v490
    %v1819 = vunpack.c.l.b16 %v491
    %v1820 = vunpack.c.h.b16 %v491
    %v1821 = vunpack.c.l.b16 %v492
    %v1822 = vunpack.c.h.b16 %v492
    %v1823 = vunpack.c.l.b16 %v493
    %v1824 = vunpack.c.h.b16 %v493
    %v1825 = vunpack.c.l.b16 %v494
    %v1826 = vunpack.c.h.b16 %v494
    %v1827 = vunpack.c.l.b16 %v495
    %v1828 = vunpack.c.h.b16 %v495
    %v1829 = vunpack.c.l.b16 %v496
    %v1830 = vunpack.c.h.b16 %v496
    %v1831 = vunpack.c.l.b16 %v497
    %v1832 = vunpack.c.h.b16 %v497
    %v1833 = vunpack.c.l.b16 %v498
    %v1834 = vunpack.c.h.b16 %v498
    %v1835 = vunpack.c.l.b16 %v499
    %v1836 = vunpack.c.h.b16 %v499
    %v1837 = vunpack.c.l.b16 %v500
    %v1838 = vunpack.c.h.b16 %v500
    %v1839 = vunpack.c.l.b16 %v501
    %v1840 = vunpack.c.h.b16 %v501
    %v1841 = vunpack.c.l.b16 %v502
    %v1842 = vunpack.c.h.b16 %v502
    %v1843 = vunpack.c.l.b16 %v503
    %v1844 = vunpack.c.h.b16 %v503
    %v1845 = vunpack.c.l.b16 %v504
    %v1846 = vunpack.c.h.b16 %v504
    %v1847 = vunpack.c.l.b16 %v505
    %v1848 = vunpack.c.h.b16 %v505
    %v1849 = vunpack.c.l.b16 %v506
    %v1850 = vunpack.c.h.b16 %v506
    %v1851 = vunpack.c.l.b16 %v507
    %v1852 = vunpack.c.h.b16 %v507
    %v1853 = vunpack.c.l.b16 %v508
    %v1854 = vunpack.c.h.b16 %v508
    %v1855 = vunpack.c.l.b16 %v509
    %v1856 = vunpack.c.h.b16 %v509
    %v1857 = vunpack.c.l.b16 %v510
    %v1858 = vunpack.c.h.b16 %v510
    %v1859 = vunpack.c.l.b16 %v511
    %v1860 = vunpack.c.h.b16 %v511
    %v1861 = vunpack.c.l.b16 %v512
    %v1862 = vunpack.c.h.b16 %v512
    %v1863 = vunpack.c.l.b16 %v513
    %v1864 = vunpack.c.h.b16 %v513
    %v1865 = vunpack.c.l.b16 %v514
    %v1866 = vunpack.c.h.b16 %v514
    %v1867 = vunpack.c.l.b16 %v515
    %v1868 = vunpack.c.h.b16 %v515
    %v1869 = vunpack.c.l.b16 %v516
    %v1870 = vunpack.c.h.b16 %v516
    %v1871 = vunpack.c.l.b16 %v517
    %v1872 = vunpack.c.h.b16 %v517
    %v1873 = vunpack.c.l.b16 %v518
    %v1874 = vunpack.c.h.b16 %v518
    %v1875 = vunpack.c.l.b16 %v519
    %v1876 = vunpack.c.h.b16 %v519
    %v1877 = vunpack.c.l.b16 %v520
    %v1878 = vunpack.c.h.b16 %v520
    %v1879 = vunpack.c.l.b16 %v521
    %v1880 = vunpack.c.h.b16 %v521
    %v1881 = vunpack.c.l.b16 %v522
    %v1882 = vunpack.c.h.b16 %v522
    %v1883 = vunpack.c.l.b16 %v523
    %v1884 = vunpack.c.h.b16 %v523
    %v1885 = vunpack.c.l.b16 %v524
    %v1886 = vunpack.c.h.b16 %v524
    %v1887 = vunpack.c.l.b16 %v525
    %v1888 = vunpack.c.h.b16 %v525
    %v1889 = vunpack.c.l.b16 %v526
    %v1890 = vunpack.c.h.b16 %v526
    %v1891 = vunpack.c.l.b16 %v527
    %v1892 = vunpack.c.h.b16 %v527
    %v1893 = vunpack.c.l.b16 %v528
    %v1894 = vunpack.c.h.b16 %v528
    %v1895 = vunpack.c.l.b16 %v529
    %v1896 = vunpack.c.h.b16 %v529
    %v1897 = vunpack.c.l.b16 %v530
    %v1898 = vunpack.c.h.b16 %v530
    %v1899 = vunpack.c.l.b16 %v531
    %v1900 = vunpack.c.h.b16 %v531
    %v1901 = vunpack.c.l.b16 %v532
    %v1902 = vunpack.c.h.b16 %v532
    %v1903 = vunpack.c.l.b16 %v533
    %v1904 = vunpack.c.h.b16 %v533
    %v1905 = vunpack.c.l.b16 %v534
    %v1906 = vunpack.c.h.b16 %v534
    %v1907 = vunpack.c.l.b16 %v535
    %v1908 = vunpack.c.h.b16 %v535
    %v1909 = vunpack.c.l.b16 %v536
    %v1910 = vunpack.c.h.b16 %v536
    %v1911 = vunpack.c.l.b16 %v537
    %v1912 = vunpack.c.h.b16 %v537
    %v1913 = vunpack.c.l.b16 %v538
    %v1914 = vunpack.c.h.b16 %v538
    %v1915 = vunpack.c.l.b16 %v539
    %v1916 = vunpack.c.h.b16 %v539
    %v1917 = vunpack.c.l.b16 %v540
    %v1918 = vunpack.c.h.b16 %v540
    %v1919 = vunpack.c.l.b16 %v541
    %v1920 = vunpack.c.h.b16 %v541
    %v1921 = vunpack.c.l.b16 %v542
    %v1922 = vunpack.c.h.b16 %v542
    %v1923 = vunpack.c.l.b16 %v543
    %v1924 = vunpack.c.h.b16 %v543
    %v1925 = vunpack.c.l.b16 %v544
    %v1926 = vunpack.c.h.b16 %v544
    %v1927 = vunpack.c.l.b16 %v545
    %v1928 = vunpack.c.h.b16 %v545
    %v1929 = vunpack.c.l.b16 %v546
    %v1930 = vunpack.c.h.b16 %v546
    %v1931 = vunpack.c.l.b16 %v547
    %v1932 = vunpack.c.h.b16 %v547
    %v1933 = vunpack.c.l.b16 %v548
    %v1934 = vunpack.c.h.b16 %v548
    %v1935 = vunpack.c.l.b16 %v549
    %v1936 = vunpack.c.h.b16 %v549
    %v1937 = vunpack.c.l.b16 %v550
    %v1938 = vunpack.c.h.b16 %v550
    %v1939 = vunpack.c.l.b16 %v551
    %v1940 = vunpack.c.h.b16 %v551
    %v1941 = vunpack.c.l.b16 %v552
    %v1942 = vunpack.c.h.b16 %v552
    %v1943 = vunpack.c.l.b16 %v553
    %v1944 = vunpack.c.h.b16 %v553
    %v1945 = vunpack.c.l.b16 %v554
    %v1946 = vunpack.c.h.b16 %v554
    %v1947 = vunpack.c.l.b16 %v555
    %v1948 = vunpack.c.h.b16 %v555
    %v1949 = vunpack.c.l.b16 %v556
    %v1950 = vunpack.c.h.b16 %v556
    %v1951 = vunpack.c.l.b16 %v557
    %v1952 = vunpack.c.h.b16 %v557
    %v1953 = vunpack.c.l.b16 %v558
    %v1954 = vunpack.c.h.b16 %v558
    %v1955 = vunpack.c.l.b16 %v559
    %v1956 = vunpack.c.h.b16 %v559
    %v1957 = vunpack.c.l.b16 %v560
    %v1958 = vunpack.c.h.b16 %v560
    %v1959 = vunpack.c.l.b16 %v561
    %v1960 = vunpack.c.h.b16 %v561
    %v1961 = vunpack.c.l.b16 %v562
    %v1962 = vunpack.c.h.b16 %v562
    %v1963 = vunpack.c.l.b16 %v563
    %v1964 = vunpack.c.h.b16 %v563
    %v1965 = vunpack.c.l.b16 %v564
    %v1966 = vunpack.c.h.b16 %v564
    %v1967 = vunpack.c.l.b16 %v565
    %v1968 = vunpack.c.h.b16 %v565
    %v1969 = vunpack.c.l.b16 %v566
    %v1970 = vunpack.c.h.b16 %v566
    %v1971 = vunpack.c.l.b16 %v567
    %v1972 = vunpack.c.h.b16 %v567
    %v1973 = vunpack.c.l.b16 %v568
    %v1974 = vunpack.c.h.b16 %v568
    %v1975 = vunpack.c.l.b16 %v569
    %v1976 = vunpack.c.h.b16 %v569
    %v1977 = vunpack.c.l.b16 %v570
    %v1978 = vunpack.c.h.b16 %v570
    %v1979 = vunpack.c.l.b16 %v571
    %v1980 = vunpack.c.h.b16 %v571
    %v1981 = vunpack.c.l.b16 %v572
    %v1982 = vunpack.c.h.b16 %v572
    %v1983 = vunpack.c.l.b16 %v573
    %v1984 = vunpack.c.h.b16 %v573
    %v1985 = vunpack.c.l.b16 %v574
    %v1986 = vunpack.c.h.b16 %v574
    %v1987 = vunpack.c.l.b16 %v575
    %v1988 = vunpack.c.h.b16 %v575
    %v1989 = vunpack.c.l.b16 %v576
    %v1990 = vunpack.c.h.b16 %v576
    %v1991 = vunpack.c.l.b16 %v577
    %v1992 = vunpack.c.h.b16 %v577
    %v1993 = vunpack.c.l.b16 %v578
    %v1994 = vunpack.c.h.b16 %v578
    %v1995 = vunpack.c.l.b16 %v579
    %v1996 = vunpack.c.h.b16 %v579
    %v1997 = vunpack.c.l.b16 %v580
    %v1998 = vunpack.c.h.b16 %v580
    %v1999 = vunpack.c.l.b16 %v581
    %v2000 = vunpack.c.h.b16 %v581
    %v2001 = vunpack.c.l.b16 %v582
    %v2002 = vunpack.c.h.b16 %v582
    %v2003 = vunpack.c.l.b16 %v583
    %v2004 = vunpack.c.h.b16 %v583
    %v2005 = vunpack.c.l.b16 %v584
    %v2006 = vunpack.c.h.b16 %v584
    %v2007 = vunpack.c.l.b16 %v585
    %v2008 = vunpack.c.h.b16 %v585
    %v2009 = vunpack.c.l.b16 %v586
    %v2010 = vunpack.c.h.b16 %v586
    %v2011 = vunpack.c.l.b16 %v587
    %v2012 = vunpack.c.h.b16 %v587
    %v2013 = vunpack.c.l.b16 %v588
    %v2014 = vunpack.c.h.b16 %v588
    %v2015 = vunpack.c.l.b16 %v589
    %v2016 = vunpack.c.h.b16 %v589
    %v2017 = vunpack.c.l.b16 %v590
    %v2018 = vunpack.c.h.b16 %v590
    %v2019 = vunpack.c.l.b16 %v591
    %v2020 = vunpack.c.h.b16 %v591
    %v2021 = vunpack.c.l.b16 %v592
    %v2022 = vunpack.c.h.b16 %v592
    %v2023 = vunpack.c.l.b16 %v593
    %v2024 = vunpack.c.h.b16 %v593
    %v2025 = vunpack.c.l.b16 %v594
    %v2026 = vunpack.c.h.b16 %v594
    %v2027 = vunpack.c.l.b16 %v595
    %v2028 = vunpack.c.h.b16 %v595
    %v2029 = vunpack.c.l.b16 %v596
    %v2030 = vunpack.c.h.b16 %v596
    %v2031 = vunpack.c.l.b16 %v597
    %v2032 = vunpack.c.h.b16 %v597
    %v2033 = vunpack.c.l.b16 %v598
    %v2034 = vunpack.c.h.b16 %v598
    %v2035 = vunpack.c.l.b16 %v599
    %v2036 = vunpack.c.h.b16 %v599
    %v2037 = vunpack.c.l.b16 %v600
    %v2038 = vunpack.c.h.b16 %v600
    %v2039 = vunpack.c.l.b16 %v601
    %v2040 = vunpack.c.h.b16 %v601
    %v2041 = vunpack.c.l.b16 %v602
    %v2042 = vunpack.c.h.b16 %v602
    %v2043 = vunpack.c.l.b16 %v603
    %v2044 = vunpack.c.h.b16 %v603
    %v2045 = vunpack.c.l.b16 %v604
    %v2046 = vunpack.c.h.b16 %v604
    %v2047 = vunpack.c.l.b16 %v605
    %v2048 = vunpack.c.h.b16 %v605
    %v2049 = vunpack.c.l.b16 %v606
    %v2050 = vunpack.c.h.b16 %v606
    %v2051 = vunpack.c.l.b16 %v607
    %v2052 = vunpack.c.h.b16 %v607
    %v2053 = vunpack.c.l.b16 %v608
    %v2054 = vunpack.c.h.b16 %v608
    %v2055 = vunpack.c.l.b16 %v609
    %v2056 = vunpack.c.h.b16 %v609
    %v2057 = vunpack.c.l.b16 %v610
    %v2058 = vunpack.c.h.b16 %v610
    %v2059 = vunpack.c.l.b16 %v611
    %v2060 = vunpack.c.h.b16 %v611
    %v2061 = vunpack.c.l.b16 %v612
    %v2062 = vunpack.c.h.b16 %v612
    %v2063 = vunpack.c.l.b16 %v613
    %v2064 = vunpack.c.h.b16 %v613
    %v2065 = vunpack.c.l.b16 %v614
    %v2066 = vunpack.c.h.b16 %v614
    %v2067 = vunpack.c.l.b16 %v615
    %v2068 = vunpack.c.h.b16 %v615
    %v2069 = vunpack.c.l.b16 %v616
    %v2070 = vunpack.c.h.b16 %v616
    %v2071 = vunpack.c.l.b16 %v617
    %v2072 = vunpack.c.h.b16 %v617
    %v2073 = vunpack.c.l.b16 %v618
    %v2074 = vunpack.c.h.b16 %v618
    %v2075 = vunpack.c.l.b16 %v619
    %v2076 = vunpack.c.h.b16 %v619
    %v2077 = vunpack.c.l.b16 %v620
    %v2078 = vunpack.c.h.b16 %v620
    %v2079 = vunpack.c.l.b16 %v621
    %v2080 = vunpack.c.h.b16 %v621
    %v2081 = vunpack.c.l.b16 %v622
    %v2082 = vunpack.c.h.b16 %v622
    %v2083 = vunpack.c.l.b16 %v623
    %v2084 = vunpack.c.h.b16 %v623
    %v2085 = vunpack.c.l.b16 %v624
    %v2086 = vunpack.c.h.b16 %v624
    %v2087 = vunpack.c.l.b16 %v625
    %v2088 = vunpack.c.h.b16 %v625
    %v2089 = vunpack.c.l.b16 %v626
    %v2090 = vunpack.c.h.b16 %v626
    %v2091 = vunpack.c.l.b16 %v627
    %v2092 = vunpack.c.h.b16 %v627
    %v2093 = vunpack.c.l.b16 %v628
    %v2094 = vunpack.c.h.b16 %v628
    %v2095 = vunpack.c.l.b16 %v629
    %v2096 = vunpack.c.h.b16 %v629
    %v2097 = vunpack.c.l.b16 %v630
    %v2098 = vunpack.c.h.b16 %v630
    %v2099 = vunpack.c.l.b16 %v631
    %v2100 = vunpack.c.h.b16 %v631
    %v2101 = vunpack.c.l.b16 %v632
    %v2102 = vunpack.c.h.b16 %v632
    %v2103 = vunpack.c.l.b16 %v633
    %v2104 = vunpack.c.h.b16 %v633
    %v2105 = vunpack.c.l.b16 %v634
    %v2106 = vunpack.c.h.b16 %v634
    %v2107 = vunpack.c.l.b16 %v635
    %v2108 = vunpack.c.h.b16 %v635
    %v2109 = vunpack.c.l.b16 %v636
    %v2110 = vunpack.c.h.b16 %v636
    %v2111 = vunpack.c.l.b16 %v637
    %v2112 = vunpack.c.h.b16 %v637
    %v2113 = vunpack.c.l.b16 %v638
    %v2114 = vunpack.c.h.b16 %v638
    %v2115 = vunpack.c.l.b16 %v639
    %v2116 = vunpack.c.h.b16 %v639
    %v2117 = vunpack.c.l.b16 %v640
    %v2118 = vunpack.c.h.b16 %v640
    %v2119 = vunpack.c.l.b16 %v641
    %v2120 = vunpack.c.h.b16 %v641
    %v2121 = vunpack.c.l.b16 %v642
    %v2122 = vunpack.c.h.b16 %v642
    %v2123 = vunpack.c.l.b16 %v643
    %v2124 = vunpack.c.h.b16 %v643
    %v2125 = vunpack.c.l.b16 %v644
    %v2126 = vunpack.c.h.b16 %v644
    %v2127 = vunpack.c.l.b16 %v645
    %v2128 = vunpack.c.h.b16 %v645
    %v2129 = vunpack.c.l.b16 %v646
    %v2130 = vunpack.c.h.b16 %v646
    %v2131 = vunpack.c.l.b16 %v647
    %v2132 = vunpack.c.h.b16 %v647
    %v2133 = vunpack.c.l.b16 %v648
    %v2134 = vunpack.c.h.b16 %v648
    %v2135 = vunpack.c.l.b16 %v649
    %v2136 = vunpack.c.h.b16 %v649
    %v2137 = vunpack.c.l.b16 %v650
    %v2138 = vunpack.c.h.b16 %v650
    %v2139 = vunpack.c.l.b16 %v651
    %v2140 = vunpack.c.h.b16 %v651
    %v2141 = vunpack.c.l.b16 %v652
    %v2142 = vunpack.c.h.b16 %v652
    %v2143 = vunpack.c.l.b16 %v653
    %v2144 = vunpack.c.h.b16 %v653
    %v2145 = vunpack.c.l.b16 %v654
    %v2146 = vunpack.c.h.b16 %v654
    %v2147 = vunpack.c.l.b16 %v655
    %v2148 = vunpack.c.h.b16 %v655
    %v2149 = vunpack.c.l.b16 %v656
    %v2150 = vunpack.c.h.b16 %v656
    %v2151 = vunpack.c.l.b16 %v657
    %v2152 = vunpack.c.h.b16 %v657
    %v2153 = vunpack.c.l.b16 %v658
    %v2154 = vunpack.c.h.b16 %v658
    %v2155 = vunpack.c.l.b16 %v659
    %v2156 = vunpack.c.h.b16 %v659
    %v2157 = vunpack.c.l.b16 %v660
    %v2158 = vunpack.c.h.b16 %v660
    %v2159 = vunpack.c.l.b16 %v661
    %v2160 = vunpack.c.h.b16 %v661
    %v2161 = vunpack.c.l.b16 %v662
    %v2162 = vunpack.c.h.b16 %v662
    %v2163 = vunpack.c.l.b16 %v663
    %v2164 = vunpack.c.h.b16 %v663
    %v2165 = vunpack.c.l.b16 %v664
    %v2166 = vunpack.c.h.b16 %v664
    %v2167 = vunpack.c.l.b16 %v665
    %v2168 = vunpack.c.h.b16 %v665
    %v2169 = vunpack.c.l.b16 %v666
    %v2170 = vunpack.c.h.b16 %v666
    %v2171 = vunpack.c.l.b16 %v667
    %v2172 = vunpack.c.h.b16 %v667
    %v2173 = vunpack.c.l.b16 %v668
    %v2174 = vunpack.c.h.b16 %v668
    %v2175 = vunpack.c.l.b16 %v669
    %v2176 = vunpack.c.h.b16 %v669
    %v2177 = vunpack.c.l.b16 %v670
    %v2178 = vunpack.c.h.b16 %v670
    %v2179 = vunpack.c.l.b16 %v671
    %v2180 = vunpack.c.h.b16 %v671
    %v2181 = vunpack.c.l.b16 %v672
    %v2182 = vunpack.c.h.b16 %v672
    %v2183 = vunpack.c.l.b16 %v673
    %v2184 = vunpack.c.h.b16 %v673
    %v2185 = vunpack.c.l.b16 %v674
    %v2186 = vunpack.c.h.b16 %v674
    %v2187 = vunpack.c.l.b16 %v675
    %v2188 = vunpack.c.h.b16 %v675
    %v2189 = vunpack.c.l.b16 %v676
    %v2190 = vunpack.c.h.b16 %v676
    %v2191 = vunpack.c.l.b16 %v677
    %v2192 = vunpack.c.h.b16 %v677
    %v2193 = vunpack.c.l.b16 %v678
    %v2194 = vunpack.c.h.b16 %v678
    %v2195 = vunpack.c.l.b16 %v679
    %v2196 = vunpack.c.h.b16 %v679
    %v2197 = vunpack.c.l.b16 %v680
    %v2198 = vunpack.c.h.b16 %v680
    %v2199 = vunpack.c.l.b16 %v681
    %v2200 = vunpack.c.h.b16 %v681
    %v2201 = vunpack.c.l.b16 %v682
    %v2202 = vunpack.c.h.b16 %v682
    %v2203 = vunpack.c.l.b16 %v683
    %v2204 = vunpack.c.h.b16 %v683
    %v2205 = vunpack.c.l.b16 %v684
    %v2206 = vunpack.c.h.b16 %v684
    %v2207 = vunpack.c.l.b16 %v685
    %v2208 = vunpack.c.h.b16 %v685
    %v2209 = vunpack.c.l.b16 %v686
    %v2210 = vunpack.c.h.b16 %v686
    %v2211 = vunpack.c.l.b16 %v687
    %v2212 = vunpack.c.h.b16 %v687
    %v2213 = vunpack.c.l.b16 %v688
    %v2214 = vunpack.c.h.b16 %v688
    %v2215 = vunpack.c.l.b16 %v689
    %v2216 = vunpack.c.h.b16 %v689
    %v2217 = vunpack.c.l.b16 %v690
    %v2218 = vunpack.c.h.b16 %v690
    %v2219 = vunpack.c.l.b16 %v691
    %v2220 = vunpack.c.h.b16 %v691
    %v2221 = vunpack.c.l.b16 %v692
    %v2222 = vunpack.c.h.b16 %v692
    %v2223 = vunpack.c.l.b16 %v693
    %v2224 = vunpack.c.h.b16 %v693
    %v2225 = vunpack.c.l.b16 %v694
    %v2226 = vunpack.c.h.b16 %v694
    %v2227 = vunpack.c.l.b16 %v695
    %v2228 = vunpack.c.h.b16 %v695
    %v2229 = vunpack.c.l.b16 %v696
    %v2230 = vunpack.c.h.b16 %v696
    %v2231 = vunpack.c.l.b16 %v697
    %v2232 = vunpack.c.h.b16 %v697
    %v2233 = vunpack.c.l.b16 %v698
    %v2234 = vunpack.c.h.b16 %v698
    %v2235 = vpack.c.b16 %v1275, %v1211
    %v2236 = vpack.c.b16 %v1276, %v1212
    %v2237 = vpack.c.b16 %v1277, %v1213
    %v2238 = vpack.c.b16 %v1278, %v1214
    %v2239 = vpack.c.b16 %v1279, %v1215
    %v2240 = vpack.c.b16 %v1280, %v1216
    %v2241 = vpack.c.b16 %v1281, %v1217
    %v2242 = vpack.c.b16 %v1282, %v1218
    %v2243 = vpack.c.b16 %v1283, %v1219
    %v2244 = vpack.c.b16 %v1284, %v1220
    %v2245 = vpack.c.b16 %v1285, %v1221
    %v2246 = vpack.c.b16 %v1286, %v1222
    %v2247 = vpack.c.b16 %v1287, %v1223
    %v2248 = vpack.c.b16 %v1288, %v1224
    %v2249 = vpack.c.b16 %v1289, %v1225
    %v2250 = vpack.c.b16 %v1290, %v1226
    %v2251 = vpack.c.b16 %v1291, %v1227
    %v2252 = vpack.c.b16 %v1292, %v1228
    %v2253 = vpack.c.b16 %v1293, %v1229
    %v2254 = vpack.c.b16 %v1294, %v1230
    %v2255 = vpack.c.b16 %v1295, %v1231
    %v2256 = vpack.c.b16 %v1296, %v1232
    %v2257 = vpack.c.b16 %v1297, %v1233
    %v2258 = vpack.c.b16 %v1298, %v1234
    %v2259 = vpack.c.b16 %v1299, %v1235
    %v2260 = vpack.c.b16 %v1300, %v1236
    %v2261 = vpack.c.b16 %v1301, %v1237
    %v2262 = vpack.c.b16 %v1302, %v1238
    %v2263 = vpack.c.b16 %v1303, %v1239
    %v2264 = vpack.c.b16 %v1304, %v1240
    %v2265 = vpack.c.b16 %v1305, %v1241
    %v2266 = vpack.c.b16 %v1306, %v1242
    %v2267 = vpack.c.b16 %v1307, %v1243
    %v2268 = vpack.c.b16 %v1308, %v1244
    %v2269 = vpack.c.b16 %v1309, %v1245
    %v2270 = vpack.c.b16 %v1310, %v1246
    %v2271 = vpack.c.b16 %v1311, %v1247
    %v2272 = vpack.c.b16 %v1312, %v1248
    %v2273 = vpack.c.b16 %v1313, %v1249
    %v2274 = vpack.c.b16 %v1314, %v1250
    %v2275 = vpack.c.b16 %v1315, %v1251
    %v2276 = vpack.c.b16 %v1316, %v1252
    %v2277 = vpack.c.b16 %v1317, %v1253
    %v2278 = vpack.c.b16 %v1318, %v1254
    %v2279 = vpack.c.b16 %v1319, %v1255
    %v2280 = vpack.c.b16 %v1320, %v1256
    %v2281 = vpack.c.b16 %v1321, %v1257
    %v2282 = vpack.c.b16 %v1322, %v1258
    %v2283 = vpack.c.b16 %v1323, %v1259
    %v2284 = vpack.c.b16 %v1324, %v1260
    %v2285 = vpack.c.b16 %v1325, %v1261
    %v2286 = vpack.c.b16 %v1326, %v1262
    %v2287 = vpack.c.b16 %v1327, %v1263
    %v2288 = vpack.c.b16 %v1328, %v1264
    %v2289 = vpack.c.b16 %v1329, %v1265
    %v2290 = vpack.c.b16 %v1330, %v1266
    %v2291 = vpack.c.b16 %v1331, %v1267
    %v2292 = vpack.c.b16 %v1332, %v1268
    %v2293 = vpack.c.b16 %v1333, %v1269
    %v2294 = vpack.c.b16 %v1334, %v1270
    %v2295 = vpack.c.b16 %v1335, %v1271
    %v2296 = vpack.c.b16 %v1336, %v1272
    %v2297 = vpack.c.b16 %v1337, %v1273
    %v2298 = vpack.c.b16 %v1338, %v1274
    %v2299 = vpack.c.b16 %v1403, %v1339
    %v2300 = vpack.c.b16 %v1404, %v1340
    %v2301 = vpack.c.b16 %v1405, %v1341
    %v2302 = vpack.c.b16 %v1406, %v1342
    %v2303 = vpack.c.b16 %v1407, %v1343
    %v2304 = vpack.c.b16 %v1408, %v1344
    %v2305 = vpack.c.b16 %v1409, %v1345
    %v2306 = vpack.c.b16 %v1410, %v1346
    %v2307 = vpack.c.b16 %v1411, %v1347
    %v2308 = vpack.c.b16 %v1412, %v1348
    %v2309 = vpack.c.b16 %v1413, %v1349
    %v2310 = vpack.c.b16 %v1414, %v1350
    %v2311 = vpack.c.b16 %v1415, %v1351
    %v2312 = vpack.c.b16 %v1416, %v1352
    %v2313 = vpack.c.b16 %v1417, %v1353
    %v2314 = vpack.c.b16 %v1418, %v1354
    %v2315 = vpack.c.b16 %v1419, %v1355
    %v2316 = vpack.c.b16 %v1420, %v1356
    %v2317 = vpack.c.b16 %v1421, %v1357
    %v2318 = vpack.c.b16 %v1422, %v1358
    %v2319 = vpack.c.b16 %v1423, %v1359
    %v2320 = vpack.c.b16 %v1424, %v1360
    %v2321 = vpack.c.b16 %v1425, %v1361
    %v2322 = vpack.c.b16 %v1426, %v1362
    %v2323 = vpack.c.b16 %v1427, %v1363
    %v2324 = vpack.c.b16 %v1428, %v1364
    %v2325 = vpack.c.b16 %v1429, %v1365
    %v2326 = vpack.c.b16 %v1430, %v1366
    %v2327 = vpack.c.b16 %v1431, %v1367
    %v2328 = vpack.c.b16 %v1432, %v1368
    %v2329 = vpack.c.b16 %v1433, %v1369
    %v2330 = vpack.c.b16 %v1434, %v1370
    %v2331 = vpack.c.b16 %v1435, %v1371
    %v2332 = vpack.c.b16 %v1436, %v1372
    %v2333 = vpack.c.b16 %v1437, %v1373
    %v2334 = vpack.c.b16 %v1438, %v1374
    %v2335 = vpack.c.b16 %v1439, %v1375
    %v2336 = vpack.c.b16 %v1440, %v1376
    %v2337 = vpack.c.b16 %v1441, %v1377
    %v2338 = vpack.c.b16 %v1442, %v1378
    %v2339 = vpack.c.b16 %v1443, %v1379
    %v2340 = vpack.c.b16 %v1444, %v1380
    %v2341 = vpack.c.b16 %v1445, %v1381
    %v2342 = vpack.c.b16 %v1446, %v1382
    %v2343 = vpack.c.b16 %v1447, %v1383
    %v2344 = vpack.c.b16 %v1448, %v1384
    %v2345 = vpack.c.b16 %v1449, %v1385
    %v2346 = vpack.c.b16 %v1450, %v1386
    %v2347 = vpack.c.b16 %v1451, %v1387
    %v2348 = vpack.c.b16 %v1452, %v1388
    %v2349 = vpack.c.b16 %v1453, %v1389
    %v2350 = vpack.c.b16 %v1454, %v1390
    %v2351 = vpack.c.b16 %v1455, %v1391
    %v2352 = vpack.c.b16 %v1456, %v1392
    %v2353 = vpack.c.b16 %v1457, %v1393
    %v2354 = vpack.c.b16 %v1458, %v1394
    %v2355 = vpack.c.b16 %v1459, %v1395
    %v2356 = vpack.c.b16 %v1460, %v1396
    %v2357 = vpack.c.b16 %v1461, %v1397
    %v2358 = vpack.c.b16 %v1462, %v1398
    %v2359 = vpack.c.b16 %v1463, %v1399
    %v2360 = vpack.c.b16 %v1464, %v1400
    %v2361 = vpack.c.b16 %v1465, %v1401
    %v2362 = vpack.c.b16 %v1466, %v1402
    %v2363 = vpack.c.b16 %v1531, %v1467
    %v2364 = vpack.c.b16 %v1532, %v1468
    %v2365 = vpack.c.b16 %v1533, %v1469
    %v2366 = vpack.c.b16 %v1534, %v1470
    %v2367 = vpack.c.b16 %v1535, %v1471
    %v2368 = vpack.c.b16 %v1536, %v1472
    %v2369 = vpack.c.b16 %v1537, %v1473
    %v2370 = vpack.c.b16 %v1538, %v1474
    %v2371 = vpack.c.b16 %v1539, %v1475
    %v2372 = vpack.c.b16 %v1540, %v1476
    %v2373 = vpack.c.b16 %v1541, %v1477
    %v2374 = vpack.c.b16 %v1542, %v1478
    %v2375 = vpack.c.b16 %v1543, %v1479
    %v2376 = vpack.c.b16 %v1544, %v1480
    %v2377 = vpack.c.b16 %v1545, %v1481
    %v2378 = vpack.c.b16 %v1546, %v1482
    %v2379 = vpack.c.b16 %v1547, %v1483
    %v2380 = vpack.c.b16 %v1548, %v1484
    %v2381 = vpack.c.b16 %v1549, %v1485
    %v2382 = vpack.c.b16 %v1550, %v1486
    %v2383 = vpack.c.b16 %v1551, %v1487
    %v2384 = vpack.c.b16 %v1552, %v1488
    %v2385 = vpack.c.b16 %v1553, %v1489
    %v2386 = vpack.c.b16 %v1554, %v1490
    %v2387 = vpack.c.b16 %v1555, %v1491
    %v2388 = vpack.c.b16 %v1556, %v1492
    %v2389 = vpack.c.b16 %v1557, %v1493
    %v2390 = vpack.c.b16 %v1558, %v1494
    %v2391 = vpack.c.b16 %v1559, %v1495
    %v2392 = vpack.c.b16 %v1560, %v1496
    %v2393 = vpack.c.b16 %v1561, %v1497
    %v2394 = vpack.c.b16 %v1562, %v1498
    %v2395 = vpack.c.b16 %v1563, %v1499
    %v2396 = vpack.c.b16 %v1564, %v1500
    %v2397 = vpack.c.b16 %v1565, %v1501
    %v2398 = vpack.c.b16 %v1566, %v1502
    %v2399 = vpack.c.b16 %v1567, %v1503
    %v2400 = vpack.c.b16 %v1568, %v1504
    %v2401 = vpack.c.b16 %v1569, %v1505
    %v2402 = vpack.c.b16 %v1570, %v1506
    %v2403 = vpack.c.b16 %v1571, %v1507
    %v2404 = vpack.c.b16 %v1572, %v1508
    %v2405 = vpack.c.b16 %v1573, %v1509
    %v2406 = vpack.c.b16 %v1574, %v1510
    %v2407 = vpack.c.b16 %v1575, %v1511
    %v2408 = vpack.c.b16 %v1576, %v1512
    %v2409 = vpack.c.b16 %v1577, %v1513
    %v2410 = vpack.c.b16 %v1578, %v1514
    %v2411 = vpack.c.b16 %v1579, %v1515
    %v2412 = vpack.c.b16 %v1580, %v1516
    %v2413 = vpack.c.b16 %v1581, %v1517
    %v2414 = vpack.c.b16 %v1582, %v1518
    %v2415 = vpack.c.b16 %v1583, %v1519
    %v2416 = vpack.c.b16 %v1584, %v1520
    %v2417 = vpack.c.b16 %v1585, %v1521
    %v2418 = vpack.c.b16 %v1586, %v1522
    %v2419 = vpack.c.b16 %v1587, %v1523
    %v2420 = vpack.c.b16 %v1588, %v1524
    %v2421 = vpack.c.b16 %v1589, %v1525
    %v2422 = vpack.c.b16 %v1590, %v1526
    %v2423 = vpack.c.b16 %v1591, %v1527
    %v2424 = vpack.c.b16 %v1592, %v1528
    %v2425 = vpack.c.b16 %v1593, %v1529
    %v2426 = vpack.c.b16 %v1594, %v1530
    %v2427 = vpack.c.b16 %v1659, %v1595
    %v2428 = vpack.c.b16 %v1660, %v1596
    %v2429 = vpack.c.b16 %v1661, %v1597
    %v2430 = vpack.c.b16 %v1662, %v1598
    %v2431 = vpack.c.b16 %v1663, %v1599
    %v2432 = vpack.c.b16 %v1664, %v1600
    %v2433 = vpack.c.b16 %v1665, %v1601
    %v2434 = vpack.c.b16 %v1666, %v1602
    %v2435 = vpack.c.b16 %v1667, %v1603
    %v2436 = vpack.c.b16 %v1668, %v1604
    %v2437 = vpack.c.b16 %v1669, %v1605
    %v2438 = vpack.c.b16 %v1670, %v1606
    %v2439 = vpack.c.b16 %v1671, %v1607
    %v2440 = vpack.c.b16 %v1672, %v1608
    %v2441 = vpack.c.b16 %v1673, %v1609
    %v2442 = vpack.c.b16 %v1674, %v1610
    %v2443 = vpack.c.b16 %v1675, %v1611
    %v2444 = vpack.c.b16 %v1676, %v1612
    %v2445 = vpack.c.b16 %v1677, %v1613
    %v2446 = vpack.c.b16 %v1678, %v1614
    %v2447 = vpack.c.b16 %v1679, %v1615
    %v2448 = vpack.c.b16 %v1680, %v1616
    %v2449 = vpack.c.b16 %v1681, %v1617
    %v2450 = vpack.c.b16 %v1682, %v1618
    %v2451 = vpack.c.b16 %v1683, %v1619
    %v2452 = vpack.c.b16 %v1684, %v1620
    %v2453 = vpack.c.b16 %v1685, %v1621
    %v2454 = vpack.c.b16 %v1686, %v1622
    %v2455 = vpack.c.b16 %v1687, %v1623
    %v2456 = vpack.c.b16 %v1688, %v1624
    %v2457 = vpack.c.b16 %v1689, %v1625
    %v2458 = vpack.c.b16 %v1690, %v1626
    %v2459 = vpack.c.b16 %v1691, %v1627
    %v2460 = vpack.c.b16 %v1692, %v1628
    %v2461 = vpack.c.b16 %v1693, %v1629
    %v2462 = vpack.c.b16 %v1694, %v1630
    %v2463 = vpack.c.b16 %v1695, %v1631
    %v2464 = vpack.c.b16 %v1696, %v1632
    %v2465 = vpack.c.b16 %v1697, %v1633
    %v2466 = vpack.c.b16 %v1698, %v1634
    %v2467 = vpack.c.b16 %v1699, %v1635
    %v2468 = vpack.c.b16 %v1700, %v1636
    %v2469 = vpack.c.b16 %v1701, %v1637
    %v2470 = vpack.c.b16 %v1702, %v1638
    %v2471 = vpack.c.b16 %v1703, %v1639
    %v2472 = vpack.c.b16 %v1704, %v1640
    %v2473 = vpack.c.b16 %v1705, %v1641
    %v2474 = vpack.c.b16 %v1706, %v1642
    %v2475 = vpack.c.b16 %v1707, %v1643
    %v2476 = vpack.c.b16 %v1708, %v1644
    %v2477 = vpack.c.b16 %v1709, %v1645
    %v2478 = vpack.c.b16 %v1710, %v1646
    %v2479 = vpack.c.b16 %v1711, %v1647
    %v2480 = vpack.c.b16 %v1712, %v1648
    %v2481 = vpack.c.b16 %v1713, %v1649
    %v2482 = vpack.c.b16 %v1714, %v1650
    %v2483 = vpack.c.b16 %v1715, %v1651
    %v2484 = vpack.c.b16 %v1716, %v1652
    %v2485 = vpack.c.b16 %v1717, %v1653
    %v2486 = vpack.c.b16 %v1718, %v1654
    %v2487 = vpack.c.b16 %v1719, %v1655
    %v2488 = vpack.c.b16 %v1720, %v1656
    %v2489 = vpack.c.b16 %v1721, %v1657
    %v2490 = vpack.c.b16 %v1722, %v1658
    %v2491 = vpack.c.b16 %v1787, %v1723
    %v2492 = vpack.c.b16 %v1788, %v1724
    %v2493 = vpack.c.b16 %v1789, %v1725
    %v2494 = vpack.c.b16 %v1790, %v1726
    %v2495 = vpack.c.b16 %v1791, %v1727
    %v2496 = vpack.c.b16 %v1792, %v1728
    %v2497 = vpack.c.b16 %v1793, %v1729
    %v2498 = vpack.c.b16 %v1794, %v1730
    %v2499 = vpack.c.b16 %v1795, %v1731
    %v2500 = vpack.c.b16 %v1796, %v1732
    %v2501 = vpack.c.b16 %v1797, %v1733
    %v2502 = vpack.c.b16 %v1798, %v1734
    %v2503 = vpack.c.b16 %v1799, %v1735
    %v2504 = vpack.c.b16 %v1800, %v1736
    %v2505 = vpack.c.b16 %v1801, %v1737
    %v2506 = vpack.c.b16 %v1802, %v1738
    %v2507 = vpack.c.b16 %v1803, %v1739
    %v2508 = vpack.c.b16 %v1804, %v1740
    %v2509 = vpack.c.b16 %v1805, %v1741
    %v2510 = vpack.c.b16 %v1806, %v1742
    %v2511 = vpack.c.b16 %v1807, %v1743
    %v2512 = vpack.c.b16 %v1808, %v1744
    %v2513 = vpack.c.b16 %v1809, %v1745
    %v2514 = vpack.c.b16 %v1810, %v1746
    %v2515 = vpack.c.b16 %v1811, %v1747
    %v2516 = vpack.c.b16 %v1812, %v1748
    %v2517 = vpack.c.b16 %v1813, %v1749
    %v2518 = vpack.c.b16 %v1814, %v1750
    %v2519 = vpack.c.b16 %v1815, %v1751
    %v2520 = vpack.c.b16 %v1816, %v1752
    %v2521 = vpack.c.b16 %v1817, %v1753
    %v2522 = vpack.c.b16 %v1818, %v1754
    %v2523 = vpack.c.b16 %v1819, %v1755
    %v2524 = vpack.c.b16 %v1820, %v1756
    %v2525 = vpack.c.b16 %v1821, %v1757
    %v2526 = vpack.c.b16 %v1822, %v1758
    %v2527 = vpack.c.b16 %v1823, %v1759
    %v2528 = vpack.c.b16 %v1824, %v1760
    %v2529 = vpack.c.b16 %v1825, %v1761
    %v2530 = vpack.c.b16 %v1826, %v1762
    %v2531 = vpack.c.b16 %v1827, %v1763
    %v2532 = vpack.c.b16 %v1828, %v1764
    %v2533 = vpack.c.b16 %v1829, %v1765
    %v2534 = vpack.c.b16 %v1830, %v1766
    %v2535 = vpack.c.b16 %v1831, %v1767
    %v2536 = vpack.c.b16 %v1832, %v1768
    %v2537 = vpack.c.b16 %v1833, %v1769
    %v2538 = vpack.c.b16 %v1834, %v1770
    %v2539 = vpack.c.b16 %v1835, %v1771
    %v2540 = vpack.c.b16 %v1836, %v1772
    %v2541 = vpack.c.b16 %v1837, %v1773
    %v2542 = vpack.c.b16 %v1838, %v1774
    %v2543 = vpack.c.b16 %v1839, %v1775
    %v2544 = vpack.c.b16 %v1840, %v1776
    %v2545 = vpack.c.b16 %v1841, %v1777
    %v2546 = vpack.c.b16 %v1842, %v1778
    %v2547 = vpack.c.b16 %v1843, %v1779
    %v2548 = vpack.c.b16 %v1844, %v1780
    %v2549 = vpack.c.b16 %v1845, %v1781
    %v2550 = vpack.c.b16 %v1846, %v1782
    %v2551 = vpack.c.b16 %v1847, %v1783
    %v2552 = vpack.c.b16 %v1848, %v1784
    %v2553 = vpack.c.b16 %v1849, %v1785
    %v2554 = vpack.c.b16 %v1850, %v1786
    %v2555 = vpack.c.b16 %v1915, %v1851
    %v2556 = vpack.c.b16 %v1916, %v1852
    %v2557 = vpack.c.b16 %v1917, %v1853
    %v2558 = vpack.c.b16 %v1918, %v1854
    %v2559 = vpack.c.b16 %v1919, %v1855
    %v2560 = vpack.c.b16 %v1920, %v1856
    %v2561 = vpack.c.b16 %v1921, %v1857
    %v2562 = vpack.c.b16 %v1922, %v1858
    %v2563 = vpack.c.b16 %v1923, %v1859
    %v2564 = vpack.c.b16 %v1924, %v1860
    %v2565 = vpack.c.b16 %v1925, %v1861
    %v2566 = vpack.c.b16 %v1926, %v1862
    %v2567 = vpack.c.b16 %v1927, %v1863
    %v2568 = vpack.c.b16 %v1928, %v1864
    %v2569 = vpack.c.b16 %v1929, %v1865
    %v2570 = vpack.c.b16 %v1930, %v1866
    %v2571 = vpack.c.b16 %v1931, %v1867
    %v2572 = vpack.c.b16 %v1932, %v1868
    %v2573 = vpack.c.b16 %v1933, %v1869
    %v2574 = vpack.c.b16 %v1934, %v1870
    %v2575 = vpack.c.b16 %v1935, %v1871
    %v2576 = vpack.c.b16 %v1936, %v1872
    %v2577 = vpack.c.b16 %v1937, %v1873
    %v2578 = vpack.c.b16 %v1938, %v1874
    %v2579 = vpack.c.b16 %v1939, %v1875
    %v2580 = vpack.c.b16 %v1940, %v1876
    %v2581 = vpack.c.b16 %v1941, %v1877
    %v2582 = vpack.c.b16 %v1942, %v1878
    %v2583 = vpack.c.b16 %v1943, %v1879
    %v2584 = vpack.c.b16 %v1944, %v1880
    %v2585 = vpack.c.b16 %v1945, %v1881
    %v2586 = vpack.c.b16 %v1946, %v1882
    %v2587 = vpack.c.b16 %v1947, %v1883
    %v2588 = vpack.c.b16 %v1948, %v1884
    %v2589 = vpack.c.b16 %v1949, %v1885
    %v2590 = vpack.c.b16 %v1950, %v1886
    %v2591 = vpack.c.b16 %v1951, %v1887
    %v2592 = vpack.c.b16 %v1952, %v1888
    %v2593 = vpack.c.b16 %v1953, %v1889
    %v2594 = vpack.c.b16 %v1954, %v1890
    %v2595 = vpack.c.b16 %v1955, %v1891
    %v2596 = vpack.c.b16 %v1956, %v1892
    %v2597 = vpack.c.b16 %v1957, %v1893
    %v2598 = vpack.c.b16 %v1958, %v1894
    %v2599 = vpack.c.b16 %v1959, %v1895
    %v2600 = vpack.c.b16 %v1960, %v1896
    %v2601 = vpack.c.b16 %v1961, %v1897
    %v2602 = vpack.c.b16 %v1962, %v1898
    %v2603 = vpack.c.b16 %v1963, %v1899
    %v2604 = vpack.c.b16 %v1964, %v1900
    %v2605 = vpack.c.b16 %v1965, %v1901
    %v2606 = vpack.c.b16 %v1966, %v1902
    %v2607 = vpack.c.b16 %v1967, %v1903
    %v2608 = vpack.c.b16 %v1968, %v1904
    %v2609 = vpack.c.b16 %v1969, %v1905
    %v2610 = vpack.c.b16 %v1970, %v1906
    %v2611 = vpack.c.b16 %v1971, %v1907
    %v2612 = vpack.c.b16 %v1972, %v1908
    %v2613 = vpack.c.b16 %v1973, %v1909
    %v2614 = vpack.c.b16 %v1974, %v1910
    %v2615 = vpack.c.b16 %v1975, %v1911
    %v2616 = vpack.c.b16 %v1976, %v1912
    %v2617 = vpack.c.b16 %v1977, %v1913
    %v2618 = vpack.c.b16 %v1978, %v1914
    %v2619 = vpack.c.b16 %v2043, %v1979
    %v2620 = vpack.c.b16 %v2044, %v1980
    %v2621 = vpack.c.b16 %v2045, %v1981
    %v2622 = vpack.c.b16 %v2046, %v1982
    %v2623 = vpack.c.b16 %v2047, %v1983
    %v2624 = vpack.c.b16 %v2048, %v1984
    %v2625 = vpack.c.b16 %v2049, %v1985
    %v2626 = vpack.c.b16 %v2050, %v1986
    %v2627 = vpack.c.b16 %v2051, %v1987
    %v2628 = vpack.c.b16 %v2052, %v1988
    %v2629 = vpack.c.b16 %v2053, %v1989
    %v2630 = vpack.c.b16 %v2054, %v1990
    %v2631 = vpack.c.b16 %v2055, %v1991
    %v2632 = vpack.c.b16 %v2056, %v1992
    %v2633 = vpack.c.b16 %v2057, %v1993
    %v2634 = vpack.c.b16 %v2058, %v1994
    %v2635 = vpack.c.b16 %v2059, %v1995
    %v2636 = vpack.c.b16 %v2060, %v1996
    %v2637 = vpack.c.b16 %v2061, %v1997
    %v2638 = vpack.c.b16 %v2062, %v1998
    %v2639 = vpack.c.b16 %v2063, %v1999
    %v2640 = vpack.c.b16 %v2064, %v2000
    %v2641 = vpack.c.b16 %v2065, %v2001
    %v2642 = vpack.c.b16 %v2066, %v2002
    %v2643 = vpack.c.b16 %v2067, %v2003
    %v2644 = vpack.c.b16 %v2068, %v2004
    %v2645 = vpack.c.b16 %v2069, %v2005
    %v2646 = vpack.c.b16 %v2070, %v2006
    %v2647 = vpack.c.b16 %v2071, %v2007
    %v2648 = vpack.c.b16 %v2072, %v2008
    %v2649 = vpack.c.b16 %v2073, %v2009
    %v2650 = vpack.c.b16 %v2074, %v2010
    %v2651 = vpack.c.b16 %v2075, %v2011
    %v2652 = vpack.c.b16 %v2076, %v2012
    %v2653 = vpack.c.b16 %v2077, %v2013
    %v2654 = vpack.c.b16 %v2078, %v2014
    %v2655 = vpack.c.b16 %v2079, %v2015
    %v2656 = vpack.c.b16 %v2080, %v2016
    %v2657 = vpack.c.b16 %v2081, %v2017
    %v2658 = vpack.c.b16 %v2082, %v2018
    %v2659 = vpack.c.b16 %v2083, %v2019
    %v2660 = vpack.c.b16 %v2084, %v2020
    %v2661 = vpack.c.b16 %v2085, %v2021
    %v2662 = vpack.c.b16 %v2086, %v2022
    %v2663 = vpack.c.b16 %v2087, %v2023
    %v2664 = vpack.c.b16 %v2088, %v2024
    %v2665 = vpack.c.b16 %v2089, %v2025
    %v2666 = vpack.c.b16 %v2090, %v2026
    %v2667 = vpack.c.b16 %v2091, %v2027
    %v2668 = vpack.c.b16 %v2092, %v2028
    %v2669 = vpack.c.b16 %v2093, %v2029
    %v2670 = vpack.c.b16 %v2094, %v2030
    %v2671 = vpack.c.b16 %v2095, %v2031
    %v2672 = vpack.c.b16 %v2096, %v2032
    %v2673 = vpack.c.b16 %v2097, %v2033
    %v2674 = vpack.c.b16 %v2098, %v2034
    %v2675 = vpack.c.b16 %v2099, %v2035
    %v2676 = vpack.c.b16 %v2100, %v2036
    %v2677 = vpack.c.b16 %v2101, %v2037
    %v2678 = vpack.c.b16 %v2102, %v2038
    %v2679 = vpack.c.b16 %v2103, %v2039
    %v2680 = vpack.c.b16 %v2104, %v2040
    %v2681 = vpack.c.b16 %v2105, %v2041
    %v2682 = vpack.c.b16 %v2106, %v2042
    %v2683 = vpack.c.b16 %v2171, %v2107
    %v2684 = vpack.c.b16 %v2172, %v2108
    %v2685 = vpack.c.b16 %v2173, %v2109
    %v2686 = vpack.c.b16 %v2174, %v2110
    %v2687 = vpack.c.b16 %v2175, %v2111
    %v2688 = vpack.c.b16 %v2176, %v2112
    %v2689 = vpack.c.b16 %v2177, %v2113
    %v2690 = vpack.c.b16 %v2178, %v2114
    %v2691 = vpack.c.b16 %v2179, %v2115
    %v2692 = vpack.c.b16 %v2180, %v2116
    %v2693 = vpack.c.b16 %v2181, %v2117
    %v2694 = vpack.c.b16 %v2182, %v2118
    %v2695 = vpack.c.b16 %v2183, %v2119
    %v2696 = vpack.c.b16 %v2184, %v2120
    %v2697 = vpack.c.b16 %v2185, %v2121
    %v2698 = vpack.c.b16 %v2186, %v2122
    %v2699 = vpack.c.b16 %v2187, %v2123
    %v2700 = vpack.c.b16 %v2188, %v2124
    %v2701 = vpack.c.b16 %v2189, %v2125
    %v2702 = vpack.c.b16 %v2190, %v2126
    %v2703 = vpack.c.b16 %v2191, %v2127
    %v2704 = vpack.c.b16 %v2192, %v2128
    %v2705 = vpack.c.b16 %v2193, %v2129
    %v2706 = vpack.c.b16 %v2194, %v2130
    %v2707 = vpack.c.b16 %v2195, %v2131
    %v2708 = vpack.c.b16 %v2196, %v2132
    %v2709 = vpack.c.b16 %v2197, %v2133
    %v2710 = vpack.c.b16 %v2198, %v2134
    %v2711 = vpack.c.b16 %v2199, %v2135
    %v2712 = vpack.c.b16 %v2200, %v2136
    %v2713 = vpack.c.b16 %v2201, %v2137
    %v2714 = vpack.c.b16 %v2202, %v2138
    %v2715 = vpack.c.b16 %v2203, %v2139
    %v2716 = vpack.c.b16 %v2204, %v2140
    %v2717 = vpack.c.b16 %v2205, %v2141
    %v2718 = vpack.c.b16 %v2206, %v2142
    %v2719 = vpack.c.b16 %v2207, %v2143
    %v2720 = vpack.c.b16 %v2208, %v2144
    %v2721 = vpack.c.b16 %v2209, %v2145
    %v2722 = vpack.c.b16 %v2210, %v2146
    %v2723 = vpack.c.b16 %v2211, %v2147
    %v2724 = vpack.c.b16 %v2212, %v2148
    %v2725 = vpack.c.b16 %v2213, %v2149
    %v2726 = vpack.c.b16 %v2214, %v2150
    %v2727 = vpack.c.b16 %v2215, %v2151
    %v2728 = vpack.c.b16 %v2216, %v2152
    %v2729 = vpack.c.b16 %v2217, %v2153
    %v2730 = vpack.c.b16 %v2218, %v2154
    %v2731 = vpack.c.b16 %v2219, %v2155
    %v2732 = vpack.c.b16 %v2220, %v2156
    %v2733 = vpack.c.b16 %v2221, %v2157
    %v2734 = vpack.c.b16 %v2222, %v2158
    %v2735 = vpack.c.b16 %v2223, %v2159
    %v2736 = vpack.c.b16 %v2224, %v2160
    %v2737 = vpack.c.b16 %v2225, %v2161
    %v2738 = vpack.c.b16 %v2226, %v2162
    %v2739 = vpack.c.b16 %v2227, %v2163
    %v2740 = vpack.c.b16 %v2228, %v2164
    %v2741 = vpack.c.b16 %v2229, %v2165
    %v2742 = vpack.c.b16 %v2230, %v2166
    %v2743 = vpack.c.b16 %v2231, %v2167
    %v2744 = vpack.c.b16 %v2232, %v2168
    %v2745 = vpack.c.b16 %v2233, %v2169
    %v2746 = vpack.c.b16 %v2234, %v2170
    %3259 = vmatprep.subr.bf16.mxu0 %v2684
    %3260 = vmatpush1.bf16.msra.mxu0 %v2683
    %3261 = vmatprep.subr.bf16.mxu0 %v2620
    %3262 = vmatpush1.bf16.msra.mxu0 %v2619
    %3263 = vmatprep.subr.bf16.mxu0 %v2556
    %3264 = vmatpush1.bf16.msra.mxu0 %v2555
    %3265 = vmatprep.subr.bf16.mxu0 %v2492
    %3266 = vmatpush1.bf16.msra.mxu0 %v2491
    %3267 = vmatprep.subr.bf16.mxu0 %v2428
    %3268 = vmatpush1.bf16.msra.mxu0 %v2427
    %3269 = vmatprep.subr.bf16.mxu0 %v2364
    %3270 = vmatpush1.bf16.msra.mxu0 %v2363
    %3271 = vmatprep.subr.bf16.mxu0 %v2300
    %3272 = vmatpush1.bf16.msra.mxu0 %v2299
    %3273 = vmatprep.subr.bf16.mxu0 %v2236
    %3274 = vmatpush1.bf16.msra.mxu0 %v2235
    %3275 = vmatprep.subr.bf16.mxu0 0
    %3276 = vmatpush2.bf16.msra.mxu0 0
    %3277 = vmatprep.subr.bf16.mxu0 0
    %3278 = vmatpush2.bf16.msra.mxu0 0
    %3279 = vmatprep.subr.bf16.mxu0 0
    %3280 = vmatpush2.bf16.msra.mxu0 0
    %3281 = vmatprep.subr.bf16.mxu0 0
    %3282 = vmatpush2.bf16.msra.mxu0 0
    %3283 = vmatprep.subr.bf16.mxu0 0
    %3284 = vmatpush2.bf16.msra.mxu0 0
    %3285 = vmatprep.subr.bf16.mxu0 0
    %3286 = vmatpush2.bf16.msra.mxu0 0
    %3287 = vmatprep.subr.bf16.mxu0 0
    %3288 = vmatpush2.bf16.msra.mxu0 0
    %3289 = vmatprep.subr.bf16.mxu0 0
    %3290 = vmatpush2.bf16.msra.mxu0 0
    %3291 = vmatprep.mubr.bf16.mxu0 0
    %3292 = vmatmul.mubr.bf16.gmra.mxu0 %v186
    %v3293 = vpop.f32.mrf.mxu0
    %v3294 = vadd.f32 0.0, %v3293
    %v3295 = vpop.f32.mrf.mxu0
    %v3296 = vadd.f32 0.0, %v3295
    %v3297 = vpop.f32.mrf.mxu0
    %v3298 = vpop.f32.mrf.mxu0
    %3299 = vdwg.mxu0
    %3300 = vmatprep.subr.bf16.mxu0 %v2686
    %3301 = vmatpush1.bf16.msra.mxu0 %v2685
    %3302 = vmatprep.subr.bf16.mxu0 %v2622
    %3303 = vmatpush1.bf16.msra.mxu0 %v2621
    %3304 = vmatprep.subr.bf16.mxu0 %v2558
    %3305 = vmatpush1.bf16.msra.mxu0 %v2557
    %3306 = vmatprep.subr.bf16.mxu0 %v2494
    %3307 = vmatpush1.bf16.msra.mxu0 %v2493
    %3308 = vmatprep.subr.bf16.mxu0 %v2430
    %3309 = vmatpush1.bf16.msra.mxu0 %v2429
    %3310 = vmatprep.subr.bf16.mxu0 %v2366
    %3311 = vmatpush1.bf16.msra.mxu0 %v2365
    %3312 = vmatprep.subr.bf16.mxu0 %v2302
    %3313 = vmatpush1.bf16.msra.mxu0 %v2301
    %3314 = vmatprep.subr.bf16.mxu0 %v2238
    %3315 = vmatpush1.bf16.msra.mxu0 %v2237
    %3316 = vmatprep.subr.bf16.mxu0 0
    %3317 = vmatpush2.bf16.msra.mxu0 0
    %3318 = vmatprep.subr.bf16.mxu0 0
    %3319 = vmatpush2.bf16.msra.mxu0 0
    %3320 = vmatprep.subr.bf16.mxu0 0
    %3321 = vmatpush2.bf16.msra.mxu0 0
    %3322 = vmatprep.subr.bf16.mxu0 0
    %3323 = vmatpush2.bf16.msra.mxu0 0
    %3324 = vmatprep.subr.bf16.mxu0 0
    %3325 = vmatpush2.bf16.msra.mxu0 0
    %3326 = vmatprep.subr.bf16.mxu0 0
    %3327 = vmatpush2.bf16.msra.mxu0 0
    %3328 = vmatprep.subr.bf16.mxu0 0
    %3329 = vmatpush2.bf16.msra.mxu0 0
    %3330 = vmatprep.subr.bf16.mxu0 0
    %3331 = vmatpush2.bf16.msra.mxu0 0
    %3332 = vmatprep.mubr.bf16.mxu0 0
    %3333 = vmatmul.mubr.bf16.gmra.mxu0 %v186
    %v3334 = vpop.f32.mrf.mxu0
    %v3335 = vadd.f32 0.0, %v3334
    %v3336 = vpop.f32.mrf.mxu0
    %v3337 = vadd.f32 0.0, %v3336
    %v3338 = vpop.f32.mrf.mxu0
    %v3339 = vpop.f32.mrf.mxu0
    %3340 = vdwg.mxu0
    %3341 = vmatprep.subr.bf16.mxu0 %v2688
    %3342 = vmatpush1.bf16.msra.mxu0 %v2687
    %3343 = vmatprep.subr.bf16.mxu0 %v2624
    %3344 = vmatpush1.bf16.msra.mxu0 %v2623
    %3345 = vmatprep.subr.bf16.mxu0 %v2560
    %3346 = vmatpush1.bf16.msra.mxu0 %v2559
    %3347 = vmatprep.subr.bf16.mxu0 %v2496
    %3348 = vmatpush1.bf16.msra.mxu0 %v2495
    %3349 = vmatprep.subr.bf16.mxu0 %v2432
    %3350 = vmatpush1.bf16.msra.mxu0 %v2431
    %3351 = vmatprep.subr.bf16.mxu0 %v2368
    %3352 = vmatpush1.bf16.msra.mxu0 %v2367
    %3353 = vmatprep.subr.bf16.mxu0 %v2304
    %3354 = vmatpush1.bf16.msra.mxu0 %v2303
    %3355 = vmatprep.subr.bf16.mxu0 %v2240
    %3356 = vmatpush1.bf16.msra.mxu0 %v2239
    %3357 = vmatprep.subr.bf16.mxu0 0
    %3358 = vmatpush2.bf16.msra.mxu0 0
    %3359 = vmatprep.subr.bf16.mxu0 0
    %3360 = vmatpush2.bf16.msra.mxu0 0
    %3361 = vmatprep.subr.bf16.mxu0 0
    %3362 = vmatpush2.bf16.msra.mxu0 0
    %3363 = vmatprep.subr.bf16.mxu0 0
    %3364 = vmatpush2.bf16.msra.mxu0 0
    %3365 = vmatprep.subr.bf16.mxu0 0
    %3366 = vmatpush2.bf16.msra.mxu0 0
    %3367 = vmatprep.subr.bf16.mxu0 0
    %3368 = vmatpush2.bf16.msra.mxu0 0
    %3369 = vmatprep.subr.bf16.mxu0 0
    %3370 = vmatpush2.bf16.msra.mxu0 0
    %3371 = vmatprep.subr.bf16.mxu0 0
    %3372 = vmatpush2.bf16.msra.mxu0 0
    %3373 = vmatprep.mubr.bf16.mxu0 0
    %3374 = vmatmul.mubr.bf16.gmra.mxu0 %v186
    %v3375 = vpop.f32.mrf.mxu0
    %v3376 = vadd.f32 0.0, %v3375
    %v3377 = vpop.f32.mrf.mxu0
    %v3378 = vadd.f32 0.0, %v3377
    %v3379 = vpop.f32.mrf.mxu0
    %v3380 = vpop.f32.mrf.mxu0
    %3381 = vdwg.mxu0
    %3382 = vmatprep.subr.bf16.mxu0 %v2690
    %3383 = vmatpush1.bf16.msra.mxu0 %v2689
    %3384 = vmatprep.subr.bf16.mxu0 %v2626
    %3385 = vmatpush1.bf16.msra.mxu0 %v2625
    %3386 = vmatprep.subr.bf16.mxu0 %v2562
    %3387 = vmatpush1.bf16.msra.mxu0 %v2561
    %3388 = vmatprep.subr.bf16.mxu0 %v2498
    %3389 = vmatpush1.bf16.msra.mxu0 %v2497
    %3390 = vmatprep.subr.bf16.mxu0 %v2434
    %3391 = vmatpush1.bf16.msra.mxu0 %v2433
    %3392 = vmatprep.subr.bf16.mxu0 %v2370
    %3393 = vmatpush1.bf16.msra.mxu0 %v2369
    %3394 = vmatprep.subr.bf16.mxu0 %v2306
    %3395 = vmatpush1.bf16.msra.mxu0 %v2305
    %3396 = vmatprep.subr.bf16.mxu0 %v2242
    %3397 = vmatpush1.bf16.msra.mxu0 %v2241
    %3398 = vmatprep.subr.bf16.mxu0 0
    %3399 = vmatpush2.bf16.msra.mxu0 0
    %3400 = vmatprep.subr.bf16.mxu0 0
    %3401 = vmatpush2.bf16.msra.mxu0 0
    %3402 = vmatprep.subr.bf16.mxu0 0
    %3403 = vmatpush2.bf16.msra.mxu0 0
    %3404 = vmatprep.subr.bf16.mxu0 0
    %3405 = vmatpush2.bf16.msra.mxu0 0
    %3406 = vmatprep.subr.bf16.mxu0 0
    %3407 = vmatpush2.bf16.msra.mxu0 0
    %3408 = vmatprep.subr.bf16.mxu0 0
    %3409 = vmatpush2.bf16.msra.mxu0 0
    %3410 = vmatprep.subr.bf16.mxu0 0
    %3411 = vmatpush2.bf16.msra.mxu0 0
    %3412 = vmatprep.subr.bf16.mxu0 0
    %3413 = vmatpush2.bf16.msra.mxu0 0
    %3414 = vmatprep.mubr.bf16.mxu0 0
    %3415 = vmatmul.mubr.bf16.gmra.mxu0 %v186
    %v3416 = vpop.f32.mrf.mxu0
    %v3417 = vadd.f32 0.0, %v3416
    %v3418 = vpop.f32.mrf.mxu0
    %v3419 = vadd.f32 0.0, %v3418
    %v3420 = vpop.f32.mrf.mxu0
    %v3421 = vpop.f32.mrf.mxu0
    %3422 = vdwg.mxu0
    %3423 = vmatprep.subr.bf16.mxu0 %v2692
    %3424 = vmatpush1.bf16.msra.mxu0 %v2691
    %3425 = vmatprep.subr.bf16.mxu0 %v2628
    %3426 = vmatpush1.bf16.msra.mxu0 %v2627
    %3427 = vmatprep.subr.bf16.mxu0 %v2564
    %3428 = vmatpush1.bf16.msra.mxu0 %v2563
    %3429 = vmatprep.subr.bf16.mxu0 %v2500
    %3430 = vmatpush1.bf16.msra.mxu0 %v2499
    %3431 = vmatprep.subr.bf16.mxu0 %v2436
    %3432 = vmatpush1.bf16.msra.mxu0 %v2435
    %3433 = vmatprep.subr.bf16.mxu0 %v2372
    %3434 = vmatpush1.bf16.msra.mxu0 %v2371
    %3435 = vmatprep.subr.bf16.mxu0 %v2308
    %3436 = vmatpush1.bf16.msra.mxu0 %v2307
    %3437 = vmatprep.subr.bf16.mxu0 %v2244
    %3438 = vmatpush1.bf16.msra.mxu0 %v2243
    %3439 = vmatprep.subr.bf16.mxu0 0
    %3440 = vmatpush2.bf16.msra.mxu0 0
    %3441 = vmatprep.subr.bf16.mxu0 0
    %3442 = vmatpush2.bf16.msra.mxu0 0
    %3443 = vmatprep.subr.bf16.mxu0 0
    %3444 = vmatpush2.bf16.msra.mxu0 0
    %3445 = vmatprep.subr.bf16.mxu0 0
    %3446 = vmatpush2.bf16.msra.mxu0 0
    %3447 = vmatprep.subr.bf16.mxu0 0
    %3448 = vmatpush2.bf16.msra.mxu0 0
    %3449 = vmatprep.subr.bf16.mxu0 0
    %3450 = vmatpush2.bf16.msra.mxu0 0
    %3451 = vmatprep.subr.bf16.mxu0 0
    %3452 = vmatpush2.bf16.msra.mxu0 0
    %3453 = vmatprep.subr.bf16.mxu0 0
    %3454 = vmatpush2.bf16.msra.mxu0 0
    %3455 = vmatprep.mubr.bf16.mxu0 0
    %3456 = vmatmul.mubr.bf16.gmra.mxu0 %v186
    %v3457 = vpop.f32.mrf.mxu0
    %v3458 = vadd.f32 0.0, %v3457
    %v3459 = vpop.f32.mrf.mxu0
    %v3460 = vadd.f32 0.0, %v3459
    %v3461 = vpop.f32.mrf.mxu0
    %v3462 = vpop.f32.mrf.mxu0
    %3463 = vdwg.mxu0
    %3464 = vmatprep.subr.bf16.mxu0 %v2694
    %3465 = vmatpush1.bf16.msra.mxu0 %v2693
    %3466 = vmatprep.subr.bf16.mxu0 %v2630
    %3467 = vmatpush1.bf16.msra.mxu0 %v2629
    %3468 = vmatprep.subr.bf16.mxu0 %v2566
    %3469 = vmatpush1.bf16.msra.mxu0 %v2565
    %3470 = vmatprep.subr.bf16.mxu0 %v2502
    %3471 = vmatpush1.bf16.msra.mxu0 %v2501
    %3472 = vmatprep.subr.bf16.mxu0 %v2438
    %3473 = vmatpush1.bf16.msra.mxu0 %v2437
    %3474 = vmatprep.subr.bf16.mxu0 %v2374
    %3475 = vmatpush1.bf16.msra.mxu0 %v2373
    %3476 = vmatprep.subr.bf16.mxu0 %v2310
    %3477 = vmatpush1.bf16.msra.mxu0 %v2309
    %3478 = vmatprep.subr.bf16.mxu0 %v2246
    %3479 = vmatpush1.bf16.msra.mxu0 %v2245
    %3480 = vmatprep.subr.bf16.mxu0 0
    %3481 = vmatpush2.bf16.msra.mxu0 0
    %3482 = vmatprep.subr.bf16.mxu0 0
    %3483 = vmatpush2.bf16.msra.mxu0 0
    %3484 = vmatprep.subr.bf16.mxu0 0
    %3485 = vmatpush2.bf16.msra.mxu0 0
    %3486 = vmatprep.subr.bf16.mxu0 0
    %3487 = vmatpush2.bf16.msra.mxu0 0
    %3488 = vmatprep.subr.bf16.mxu0 0
    %3489 = vmatpush2.bf16.msra.mxu0 0
    %3490 = vmatprep.subr.bf16.mxu0 0
    %3491 = vmatpush2.bf16.msra.mxu0 0
    %3492 = vmatprep.subr.bf16.mxu0 0
    %3493 = vmatpush2.bf16.msra.mxu0 0
    %3494 = vmatprep.subr.bf16.mxu0 0
    %3495 = vmatpush2.bf16.msra.mxu0 0
    %3496 = vmatprep.mubr.bf16.mxu0 0
    %3497 = vmatmul.mubr.bf16.gmra.mxu0 %v186
    %v3498 = vpop.f32.mrf.mxu0
    %v3499 = vadd.f32 0.0, %v3498
    %v3500 = vpop.f32.mrf.mxu0
    %v3501 = vadd.f32 0.0, %v3500
    %v3502 = vpop.f32.mrf.mxu0
    %v3503 = vpop.f32.mrf.mxu0
    %3504 = vdwg.mxu0
    %3505 = vmatprep.subr.bf16.mxu0 %v2696
    %3506 = vmatpush1.bf16.msra.mxu0 %v2695
    %3507 = vmatprep.subr.bf16.mxu0 %v2632
    %3508 = vmatpush1.bf16.msra.mxu0 %v2631
    %3509 = vmatprep.subr.bf16.mxu0 %v2568
    %3510 = vmatpush1.bf16.msra.mxu0 %v2567
    %3511 = vmatprep.subr.bf16.mxu0 %v2504
    %3512 = vmatpush1.bf16.msra.mxu0 %v2503
    %3513 = vmatprep.subr.bf16.mxu0 %v2440
    %3514 = vmatpush1.bf16.msra.mxu0 %v2439
    %3515 = vmatprep.subr.bf16.mxu0 %v2376
    %3516 = vmatpush1.bf16.msra.mxu0 %v2375
    %3517 = vmatprep.subr.bf16.mxu0 %v2312
    %3518 = vmatpush1.bf16.msra.mxu0 %v2311
    %3519 = vmatprep.subr.bf16.mxu0 %v2248
    %3520 = vmatpush1.bf16.msra.mxu0 %v2247
    %3521 = vmatprep.subr.bf16.mxu0 0
    %3522 = vmatpush2.bf16.msra.mxu0 0
    %3523 = vmatprep.subr.bf16.mxu0 0
    %3524 = vmatpush2.bf16.msra.mxu0 0
    %3525 = vmatprep.subr.bf16.mxu0 0
    %3526 = vmatpush2.bf16.msra.mxu0 0
    %3527 = vmatprep.subr.bf16.mxu0 0
    %3528 = vmatpush2.bf16.msra.mxu0 0
    %3529 = vmatprep.subr.bf16.mxu0 0
    %3530 = vmatpush2.bf16.msra.mxu0 0
    %3531 = vmatprep.subr.bf16.mxu0 0
    %3532 = vmatpush2.bf16.msra.mxu0 0
    %3533 = vmatprep.subr.bf16.mxu0 0
    %3534 = vmatpush2.bf16.msra.mxu0 0
    %3535 = vmatprep.subr.bf16.mxu0 0
    %3536 = vmatpush2.bf16.msra.mxu0 0
    %3537 = vmatprep.mubr.bf16.mxu0 0
    %3538 = vmatmul.mubr.bf16.gmra.mxu0 %v186
    %v3539 = vpop.f32.mrf.mxu0
    %v3540 = vadd.f32 0.0, %v3539
    %v3541 = vpop.f32.mrf.mxu0
    %v3542 = vadd.f32 0.0, %v3541
    %v3543 = vpop.f32.mrf.mxu0
    %v3544 = vpop.f32.mrf.mxu0
    %3545 = vdwg.mxu0
    %3546 = vmatprep.subr.bf16.mxu0 %v2698
    %3547 = vmatpush1.bf16.msra.mxu0 %v2697
    %3548 = vmatprep.subr.bf16.mxu0 %v2634
    %3549 = vmatpush1.bf16.msra.mxu0 %v2633
    %3550 = vmatprep.subr.bf16.mxu0 %v2570
    %3551 = vmatpush1.bf16.msra.mxu0 %v2569
    %3552 = vmatprep.subr.bf16.mxu0 %v2506
    %3553 = vmatpush1.bf16.msra.mxu0 %v2505
    %3554 = vmatprep.subr.bf16.mxu0 %v2442
    %3555 = vmatpush1.bf16.msra.mxu0 %v2441
    %3556 = vmatprep.subr.bf16.mxu0 %v2378
    %3557 = vmatpush1.bf16.msra.mxu0 %v2377
    %3558 = vmatprep.subr.bf16.mxu0 %v2314
    %3559 = vmatpush1.bf16.msra.mxu0 %v2313
    %3560 = vmatprep.subr.bf16.mxu0 %v2250
    %3561 = vmatpush1.bf16.msra.mxu0 %v2249
    %3562 = vmatprep.subr.bf16.mxu0 0
    %3563 = vmatpush2.bf16.msra.mxu0 0
    %3564 = vmatprep.subr.bf16.mxu0 0
    %3565 = vmatpush2.bf16.msra.mxu0 0
    %3566 = vmatprep.subr.bf16.mxu0 0
    %3567 = vmatpush2.bf16.msra.mxu0 0
    %3568 = vmatprep.subr.bf16.mxu0 0
    %3569 = vmatpush2.bf16.msra.mxu0 0
    %3570 = vmatprep.subr.bf16.mxu0 0
    %3571 = vmatpush2.bf16.msra.mxu0 0
    %3572 = vmatprep.subr.bf16.mxu0 0
    %3573 = vmatpush2.bf16.msra.mxu0 0
    %3574 = vmatprep.subr.bf16.mxu0 0
    %3575 = vmatpush2.bf16.msra.mxu0 0
    %3576 = vmatprep.subr.bf16.mxu0 0
    %3577 = vmatpush2.bf16.msra.mxu0 0
    %3578 = vmatprep.mubr.bf16.mxu0 0
    %3579 = vmatmul.mubr.bf16.gmra.mxu0 %v186
    %v3580 = vpop.f32.mrf.mxu0
    %v3581 = vadd.f32 0.0, %v3580
    %v3582 = vpop.f32.mrf.mxu0
    %v3583 = vadd.f32 0.0, %v3582
    %v3584 = vpop.f32.mrf.mxu0
    %v3585 = vpop.f32.mrf.mxu0
    %3586 = vdwg.mxu0
    %3587 = vmatprep.subr.bf16.mxu0 %v2700
    %3588 = vmatpush1.bf16.msra.mxu0 %v2699
    %3589 = vmatprep.subr.bf16.mxu0 %v2636
    %3590 = vmatpush1.bf16.msra.mxu0 %v2635
    %3591 = vmatprep.subr.bf16.mxu0 %v2572
    %3592 = vmatpush1.bf16.msra.mxu0 %v2571
    %3593 = vmatprep.subr.bf16.mxu0 %v2508
    %3594 = vmatpush1.bf16.msra.mxu0 %v2507
    %3595 = vmatprep.subr.bf16.mxu0 %v2444
    %3596 = vmatpush1.bf16.msra.mxu0 %v2443
    %3597 = vmatprep.subr.bf16.mxu0 %v2380
    %3598 = vmatpush1.bf16.msra.mxu0 %v2379
    %3599 = vmatprep.subr.bf16.mxu0 %v2316
    %3600 = vmatpush1.bf16.msra.mxu0 %v2315
    %3601 = vmatprep.subr.bf16.mxu0 %v2252
    %3602 = vmatpush1.bf16.msra.mxu0 %v2251
    %3603 = vmatprep.subr.bf16.mxu0 0
    %3604 = vmatpush2.bf16.msra.mxu0 0
    %3605 = vmatprep.subr.bf16.mxu0 0
    %3606 = vmatpush2.bf16.msra.mxu0 0
    %3607 = vmatprep.subr.bf16.mxu0 0
    %3608 = vmatpush2.bf16.msra.mxu0 0
    %3609 = vmatprep.subr.bf16.mxu0 0
    %3610 = vmatpush2.bf16.msra.mxu0 0
    %3611 = vmatprep.subr.bf16.mxu0 0
    %3612 = vmatpush2.bf16.msra.mxu0 0
    %3613 = vmatprep.subr.bf16.mxu0 0
    %3614 = vmatpush2.bf16.msra.mxu0 0
    %3615 = vmatprep.subr.bf16.mxu0 0
    %3616 = vmatpush2.bf16.msra.mxu0 0
    %3617 = vmatprep.subr.bf16.mxu0 0
    %3618 = vmatpush2.bf16.msra.mxu0 0
    %3619 = vmatprep.mubr.bf16.mxu0 0
    %3620 = vmatmul.mubr.bf16.gmra.mxu0 %v186
    %v3621 = vpop.f32.mrf.mxu0
    %v3622 = vadd.f32 0.0, %v3621
    %v3623 = vpop.f32.mrf.mxu0
    %v3624 = vadd.f32 0.0, %v3623
    %v3625 = vpop.f32.mrf.mxu0
    %v3626 = vpop.f32.mrf.mxu0
    %3627 = vdwg.mxu0
    %3628 = vmatprep.subr.bf16.mxu0 %v2702
    %3629 = vmatpush1.bf16.msra.mxu0 %v2701
    %3630 = vmatprep.subr.bf16.mxu0 %v2638
    %3631 = vmatpush1.bf16.msra.mxu0 %v2637
    %3632 = vmatprep.subr.bf16.mxu0 %v2574
    %3633 = vmatpush1.bf16.msra.mxu0 %v2573
    %3634 = vmatprep.subr.bf16.mxu0 %v2510
    %3635 = vmatpush1.bf16.msra.mxu0 %v2509
    %3636 = vmatprep.subr.bf16.mxu0 %v2446
    %3637 = vmatpush1.bf16.msra.mxu0 %v2445
    %3638 = vmatprep.subr.bf16.mxu0 %v2382
    %3639 = vmatpush1.bf16.msra.mxu0 %v2381
    %3640 = vmatprep.subr.bf16.mxu0 %v2318
    %3641 = vmatpush1.bf16.msra.mxu0 %v2317
    %3642 = vmatprep.subr.bf16.mxu0 %v2254
    %3643 = vmatpush1.bf16.msra.mxu0 %v2253
    %3644 = vmatprep.subr.bf16.mxu0 0
    %3645 = vmatpush2.bf16.msra.mxu0 0
    %3646 = vmatprep.subr.bf16.mxu0 0
    %3647 = vmatpush2.bf16.msra.mxu0 0
    %3648 = vmatprep.subr.bf16.mxu0 0
    %3649 = vmatpush2.bf16.msra.mxu0 0
    %3650 = vmatprep.subr.bf16.mxu0 0
    %3651 = vmatpush2.bf16.msra.mxu0 0
    %3652 = vmatprep.subr.bf16.mxu0 0
    %3653 = vmatpush2.bf16.msra.mxu0 0
    %3654 = vmatprep.subr.bf16.mxu0 0
    %3655 = vmatpush2.bf16.msra.mxu0 0
    %3656 = vmatprep.subr.bf16.mxu0 0
    %3657 = vmatpush2.bf16.msra.mxu0 0
    %3658 = vmatprep.subr.bf16.mxu0 0
    %3659 = vmatpush2.bf16.msra.mxu0 0
    %3660 = vmatprep.mubr.bf16.mxu0 0
    %3661 = vmatmul.mubr.bf16.gmra.mxu0 %v186
    %v3662 = vpop.f32.mrf.mxu0
    %v3663 = vadd.f32 0.0, %v3662
    %v3664 = vpop.f32.mrf.mxu0
    %v3665 = vadd.f32 0.0, %v3664
    %v3666 = vpop.f32.mrf.mxu0
    %v3667 = vpop.f32.mrf.mxu0
    %3668 = vdwg.mxu0
    %3669 = vmatprep.subr.bf16.mxu0 %v2704
    %3670 = vmatpush1.bf16.msra.mxu0 %v2703
    %3671 = vmatprep.subr.bf16.mxu0 %v2640
    %3672 = vmatpush1.bf16.msra.mxu0 %v2639
    %3673 = vmatprep.subr.bf16.mxu0 %v2576
    %3674 = vmatpush1.bf16.msra.mxu0 %v2575
    %3675 = vmatprep.subr.bf16.mxu0 %v2512
    %3676 = vmatpush1.bf16.msra.mxu0 %v2511
    %3677 = vmatprep.subr.bf16.mxu0 %v2448
    %3678 = vmatpush1.bf16.msra.mxu0 %v2447
    %3679 = vmatprep.subr.bf16.mxu0 %v2384
    %3680 = vmatpush1.bf16.msra.mxu0 %v2383
    %3681 = vmatprep.subr.bf16.mxu0 %v2320
    %3682 = vmatpush1.bf16.msra.mxu0 %v2319
    %3683 = vmatprep.subr.bf16.mxu0 %v2256
    %3684 = vmatpush1.bf16.msra.mxu0 %v2255
    %3685 = vmatprep.subr.bf16.mxu0 0
    %3686 = vmatpush2.bf16.msra.mxu0 0
    %3687 = vmatprep.subr.bf16.mxu0 0
    %3688 = vmatpush2.bf16.msra.mxu0 0
    %3689 = vmatprep.subr.bf16.mxu0 0
    %3690 = vmatpush2.bf16.msra.mxu0 0
    %3691 = vmatprep.subr.bf16.mxu0 0
    %3692 = vmatpush2.bf16.msra.mxu0 0
    %3693 = vmatprep.subr.bf16.mxu0 0
    %3694 = vmatpush2.bf16.msra.mxu0 0
    %3695 = vmatprep.subr.bf16.mxu0 0
    %3696 = vmatpush2.bf16.msra.mxu0 0
    %3697 = vmatprep.subr.bf16.mxu0 0
    %3698 = vmatpush2.bf16.msra.mxu0 0
    %3699 = vmatprep.subr.bf16.mxu0 0
    %3700 = vmatpush2.bf16.msra.mxu0 0
    %3701 = vmatprep.mubr.bf16.mxu0 0
    %3702 = vmatmul.mubr.bf16.gmra.mxu0 %v186
    %v3703 = vpop.f32.mrf.mxu0
    %v3704 = vadd.f32 0.0, %v3703
    %v3705 = vpop.f32.mrf.mxu0
    %v3706 = vadd.f32 0.0, %v3705
    %v3707 = vpop.f32.mrf.mxu0
    %v3708 = vpop.f32.mrf.mxu0
    %3709 = vdwg.mxu0
    %3710 = vmatprep.subr.bf16.mxu0 %v2706
    %3711 = vmatpush1.bf16.msra.mxu0 %v2705
    %3712 = vmatprep.subr.bf16.mxu0 %v2642
    %3713 = vmatpush1.bf16.msra.mxu0 %v2641
    %3714 = vmatprep.subr.bf16.mxu0 %v2578
    %3715 = vmatpush1.bf16.msra.mxu0 %v2577
    %3716 = vmatprep.subr.bf16.mxu0 %v2514
    %3717 = vmatpush1.bf16.msra.mxu0 %v2513
    %3718 = vmatprep.subr.bf16.mxu0 %v2450
    %3719 = vmatpush1.bf16.msra.mxu0 %v2449
    %3720 = vmatprep.subr.bf16.mxu0 %v2386
    %3721 = vmatpush1.bf16.msra.mxu0 %v2385
    %3722 = vmatprep.subr.bf16.mxu0 %v2322
    %3723 = vmatpush1.bf16.msra.mxu0 %v2321
    %3724 = vmatprep.subr.bf16.mxu0 %v2258
    %3725 = vmatpush1.bf16.msra.mxu0 %v2257
    %3726 = vmatprep.subr.bf16.mxu0 0
    %3727 = vmatpush2.bf16.msra.mxu0 0
    %3728 = vmatprep.subr.bf16.mxu0 0
    %3729 = vmatpush2.bf16.msra.mxu0 0
    %3730 = vmatprep.subr.bf16.mxu0 0
    %3731 = vmatpush2.bf16.msra.mxu0 0
    %3732 = vmatprep.subr.bf16.mxu0 0
    %3733 = vmatpush2.bf16.msra.mxu0 0
    %3734 = vmatprep.subr.bf16.mxu0 0
    %3735 = vmatpush2.bf16.msra.mxu0 0
    %3736 = vmatprep.subr.bf16.mxu0 0
    %3737 = vmatpush2.bf16.msra.mxu0 0
    %3738 = vmatprep.subr.bf16.mxu0 0
    %3739 = vmatpush2.bf16.msra.mxu0 0
    %3740 = vmatprep.subr.bf16.mxu0 0
    %3741 = vmatpush2.bf16.msra.mxu0 0
    %3742 = vmatprep.mubr.bf16.mxu0 0
    %3743 = vmatmul.mubr.bf16.gmra.mxu0 %v186
    %v3744 = vpop.f32.mrf.mxu0
    %v3745 = vadd.f32 0.0, %v3744
    %v3746 = vpop.f32.mrf.mxu0
    %v3747 = vadd.f32 0.0, %v3746
    %v3748 = vpop.f32.mrf.mxu0
    %v3749 = vpop.f32.mrf.mxu0
    %3750 = vdwg.mxu0
    %3751 = vmatprep.subr.bf16.mxu0 %v2708
    %3752 = vmatpush1.bf16.msra.mxu0 %v2707
    %3753 = vmatprep.subr.bf16.mxu0 %v2644
    %3754 = vmatpush1.bf16.msra.mxu0 %v2643
    %3755 = vmatprep.subr.bf16.mxu0 %v2580
    %3756 = vmatpush1.bf16.msra.mxu0 %v2579
    %3757 = vmatprep.subr.bf16.mxu0 %v2516
    %3758 = vmatpush1.bf16.msra.mxu0 %v2515
    %3759 = vmatprep.subr.bf16.mxu0 %v2452
    %3760 = vmatpush1.bf16.msra.mxu0 %v2451
    %3761 = vmatprep.subr.bf16.mxu0 %v2388
    %3762 = vmatpush1.bf16.msra.mxu0 %v2387
    %3763 = vmatprep.subr.bf16.mxu0 %v2324
    %3764 = vmatpush1.bf16.msra.mxu0 %v2323
    %3765 = vmatprep.subr.bf16.mxu0 %v2260
    %3766 = vmatpush1.bf16.msra.mxu0 %v2259
    %3767 = vmatprep.subr.bf16.mxu0 0
    %3768 = vmatpush2.bf16.msra.mxu0 0
    %3769 = vmatprep.subr.bf16.mxu0 0
    %3770 = vmatpush2.bf16.msra.mxu0 0
    %3771 = vmatprep.subr.bf16.mxu0 0
    %3772 = vmatpush2.bf16.msra.mxu0 0
    %3773 = vmatprep.subr.bf16.mxu0 0
    %3774 = vmatpush2.bf16.msra.mxu0 0
    %3775 = vmatprep.subr.bf16.mxu0 0
    %3776 = vmatpush2.bf16.msra.mxu0 0
    %3777 = vmatprep.subr.bf16.mxu0 0
    %3778 = vmatpush2.bf16.msra.mxu0 0
    %3779 = vmatprep.subr.bf16.mxu0 0
    %3780 = vmatpush2.bf16.msra.mxu0 0
    %3781 = vmatprep.subr.bf16.mxu0 0
    %3782 = vmatpush2.bf16.msra.mxu0 0
    %3783 = vmatprep.mubr.bf16.mxu0 0
    %3784 = vmatmul.mubr.bf16.gmra.mxu0 %v186
    %v3785 = vpop.f32.mrf.mxu0
    %v3786 = vadd.f32 0.0, %v3785
    %v3787 = vpop.f32.mrf.mxu0
    %v3788 = vadd.f32 0.0, %v3787
    %v3789 = vpop.f32.mrf.mxu0
    %v3790 = vpop.f32.mrf.mxu0
    %3791 = vdwg.mxu0
    %3792 = vmatprep.subr.bf16.mxu0 %v2710
    %3793 = vmatpush1.bf16.msra.mxu0 %v2709
    %3794 = vmatprep.subr.bf16.mxu0 %v2646
    %3795 = vmatpush1.bf16.msra.mxu0 %v2645
    %3796 = vmatprep.subr.bf16.mxu0 %v2582
    %3797 = vmatpush1.bf16.msra.mxu0 %v2581
    %3798 = vmatprep.subr.bf16.mxu0 %v2518
    %3799 = vmatpush1.bf16.msra.mxu0 %v2517
    %3800 = vmatprep.subr.bf16.mxu0 %v2454
    %3801 = vmatpush1.bf16.msra.mxu0 %v2453
    %3802 = vmatprep.subr.bf16.mxu0 %v2390
    %3803 = vmatpush1.bf16.msra.mxu0 %v2389
    %3804 = vmatprep.subr.bf16.mxu0 %v2326
    %3805 = vmatpush1.bf16.msra.mxu0 %v2325
    %3806 = vmatprep.subr.bf16.mxu0 %v2262
    %3807 = vmatpush1.bf16.msra.mxu0 %v2261
    %3808 = vmatprep.subr.bf16.mxu0 0
    %3809 = vmatpush2.bf16.msra.mxu0 0
    %3810 = vmatprep.subr.bf16.mxu0 0
    %3811 = vmatpush2.bf16.msra.mxu0 0
    %3812 = vmatprep.subr.bf16.mxu0 0
    %3813 = vmatpush2.bf16.msra.mxu0 0
    %3814 = vmatprep.subr.bf16.mxu0 0
    %3815 = vmatpush2.bf16.msra.mxu0 0
    %3816 = vmatprep.subr.bf16.mxu0 0
    %3817 = vmatpush2.bf16.msra.mxu0 0
    %3818 = vmatprep.subr.bf16.mxu0 0
    %3819 = vmatpush2.bf16.msra.mxu0 0
    %3820 = vmatprep.subr.bf16.mxu0 0
    %3821 = vmatpush2.bf16.msra.mxu0 0
    %3822 = vmatprep.subr.bf16.mxu0 0
    %3823 = vmatpush2.bf16.msra.mxu0 0
    %3824 = vmatprep.mubr.bf16.mxu0 0
    %3825 = vmatmul.mubr.bf16.gmra.mxu0 %v186
    %v3826 = vpop.f32.mrf.mxu0
    %v3827 = vadd.f32 0.0, %v3826
    %v3828 = vpop.f32.mrf.mxu0
    %v3829 = vadd.f32 0.0, %v3828
    %v3830 = vpop.f32.mrf.mxu0
    %v3831 = vpop.f32.mrf.mxu0
    %3832 = vdwg.mxu0
    %3833 = vmatprep.subr.bf16.mxu0 %v2712
    %3834 = vmatpush1.bf16.msra.mxu0 %v2711
    %3835 = vmatprep.subr.bf16.mxu0 %v2648
    %3836 = vmatpush1.bf16.msra.mxu0 %v2647
    %3837 = vmatprep.subr.bf16.mxu0 %v2584
    %3838 = vmatpush1.bf16.msra.mxu0 %v2583
    %3839 = vmatprep.subr.bf16.mxu0 %v2520
    %3840 = vmatpush1.bf16.msra.mxu0 %v2519
    %3841 = vmatprep.subr.bf16.mxu0 %v2456
    %3842 = vmatpush1.bf16.msra.mxu0 %v2455
    %3843 = vmatprep.subr.bf16.mxu0 %v2392
    %3844 = vmatpush1.bf16.msra.mxu0 %v2391
    %3845 = vmatprep.subr.bf16.mxu0 %v2328
    %3846 = vmatpush1.bf16.msra.mxu0 %v2327
    %3847 = vmatprep.subr.bf16.mxu0 %v2264
    %3848 = vmatpush1.bf16.msra.mxu0 %v2263
    %3849 = vmatprep.subr.bf16.mxu0 0
    %3850 = vmatpush2.bf16.msra.mxu0 0
    %3851 = vmatprep.subr.bf16.mxu0 0
    %3852 = vmatpush2.bf16.msra.mxu0 0
    %3853 = vmatprep.subr.bf16.mxu0 0
    %3854 = vmatpush2.bf16.msra.mxu0 0
    %3855 = vmatprep.subr.bf16.mxu0 0
    %3856 = vmatpush2.bf16.msra.mxu0 0
    %3857 = vmatprep.subr.bf16.mxu0 0
    %3858 = vmatpush2.bf16.msra.mxu0 0
    %3859 = vmatprep.subr.bf16.mxu0 0
    %3860 = vmatpush2.bf16.msra.mxu0 0
    %3861 = vmatprep.subr.bf16.mxu0 0
    %3862 = vmatpush2.bf16.msra.mxu0 0
    %3863 = vmatprep.subr.bf16.mxu0 0
    %3864 = vmatpush2.bf16.msra.mxu0 0
    %3865 = vmatprep.mubr.bf16.mxu0 0
    %3866 = vmatmul.mubr.bf16.gmra.mxu0 %v186
    %v3867 = vpop.f32.mrf.mxu0
    %v3868 = vadd.f32 0.0, %v3867
    %v3869 = vpop.f32.mrf.mxu0
    %v3870 = vadd.f32 0.0, %v3869
    %v3871 = vpop.f32.mrf.mxu0
    %v3872 = vpop.f32.mrf.mxu0
    %3873 = vdwg.mxu0
    %3874 = vmatprep.subr.bf16.mxu0 %v2714
    %3875 = vmatpush1.bf16.msra.mxu0 %v2713
    %3876 = vmatprep.subr.bf16.mxu0 %v2650
    %3877 = vmatpush1.bf16.msra.mxu0 %v2649
    %3878 = vmatprep.subr.bf16.mxu0 %v2586
    %3879 = vmatpush1.bf16.msra.mxu0 %v2585
    %3880 = vmatprep.subr.bf16.mxu0 %v2522
    %3881 = vmatpush1.bf16.msra.mxu0 %v2521
    %3882 = vmatprep.subr.bf16.mxu0 %v2458
    %3883 = vmatpush1.bf16.msra.mxu0 %v2457
    %3884 = vmatprep.subr.bf16.mxu0 %v2394
    %3885 = vmatpush1.bf16.msra.mxu0 %v2393
    %3886 = vmatprep.subr.bf16.mxu0 %v2330
    %3887 = vmatpush1.bf16.msra.mxu0 %v2329
    %3888 = vmatprep.subr.bf16.mxu0 %v2266
    %3889 = vmatpush1.bf16.msra.mxu0 %v2265
    %3890 = vmatprep.subr.bf16.mxu0 0
    %3891 = vmatpush2.bf16.msra.mxu0 0
    %3892 = vmatprep.subr.bf16.mxu0 0
    %3893 = vmatpush2.bf16.msra.mxu0 0
    %3894 = vmatprep.subr.bf16.mxu0 0
    %3895 = vmatpush2.bf16.msra.mxu0 0
    %3896 = vmatprep.subr.bf16.mxu0 0
    %3897 = vmatpush2.bf16.msra.mxu0 0
    %3898 = vmatprep.subr.bf16.mxu0 0
    %3899 = vmatpush2.bf16.msra.mxu0 0
    %3900 = vmatprep.subr.bf16.mxu0 0
    %3901 = vmatpush2.bf16.msra.mxu0 0
    %3902 = vmatprep.subr.bf16.mxu0 0
    %3903 = vmatpush2.bf16.msra.mxu0 0
    %3904 = vmatprep.subr.bf16.mxu0 0
    %3905 = vmatpush2.bf16.msra.mxu0 0
    %3906 = vmatprep.mubr.bf16.mxu0 0
    %3907 = vmatmul.mubr.bf16.gmra.mxu0 %v186
    %v3908 = vpop.f32.mrf.mxu0
    %v3909 = vadd.f32 0.0, %v3908
    %v3910 = vpop.f32.mrf.mxu0
    %v3911 = vadd.f32 0.0, %v3910
    %v3912 = vpop.f32.mrf.mxu0
    %v3913 = vpop.f32.mrf.mxu0
    %3914 = vdwg.mxu0
    %3915 = vmatprep.subr.bf16.mxu0 %v2716
    %3916 = vmatpush1.bf16.msra.mxu0 %v2715
    %3917 = vmatprep.subr.bf16.mxu0 %v2652
    %3918 = vmatpush1.bf16.msra.mxu0 %v2651
    %3919 = vmatprep.subr.bf16.mxu0 %v2588
    %3920 = vmatpush1.bf16.msra.mxu0 %v2587
    %3921 = vmatprep.subr.bf16.mxu0 %v2524
    %3922 = vmatpush1.bf16.msra.mxu0 %v2523
    %3923 = vmatprep.subr.bf16.mxu0 %v2460
    %3924 = vmatpush1.bf16.msra.mxu0 %v2459
    %3925 = vmatprep.subr.bf16.mxu0 %v2396
    %3926 = vmatpush1.bf16.msra.mxu0 %v2395
    %3927 = vmatprep.subr.bf16.mxu0 %v2332
    %3928 = vmatpush1.bf16.msra.mxu0 %v2331
    %3929 = vmatprep.subr.bf16.mxu0 %v2268
    %3930 = vmatpush1.bf16.msra.mxu0 %v2267
    %3931 = vmatprep.subr.bf16.mxu0 0
    %3932 = vmatpush2.bf16.msra.mxu0 0
    %3933 = vmatprep.subr.bf16.mxu0 0
    %3934 = vmatpush2.bf16.msra.mxu0 0
    %3935 = vmatprep.subr.bf16.mxu0 0
    %3936 = vmatpush2.bf16.msra.mxu0 0
    %3937 = vmatprep.subr.bf16.mxu0 0
    %3938 = vmatpush2.bf16.msra.mxu0 0
    %3939 = vmatprep.subr.bf16.mxu0 0
    %3940 = vmatpush2.bf16.msra.mxu0 0
    %3941 = vmatprep.subr.bf16.mxu0 0
    %3942 = vmatpush2.bf16.msra.mxu0 0
    %3943 = vmatprep.subr.bf16.mxu0 0
    %3944 = vmatpush2.bf16.msra.mxu0 0
    %3945 = vmatprep.subr.bf16.mxu0 0
    %3946 = vmatpush2.bf16.msra.mxu0 0
    %3947 = vmatprep.mubr.bf16.mxu0 0
    %3948 = vmatmul.mubr.bf16.gmra.mxu0 %v186
    %v3949 = vpop.f32.mrf.mxu0
    %v3950 = vadd.f32 0.0, %v3949
    %v3951 = vpop.f32.mrf.mxu0
    %v3952 = vadd.f32 0.0, %v3951
    %v3953 = vpop.f32.mrf.mxu0
    %v3954 = vpop.f32.mrf.mxu0
    %3955 = vdwg.mxu0
    %3956 = vmatprep.subr.bf16.mxu0 %v2718
    %3957 = vmatpush1.bf16.msra.mxu0 %v2717
    %3958 = vmatprep.subr.bf16.mxu0 %v2654
    %3959 = vmatpush1.bf16.msra.mxu0 %v2653
    %3960 = vmatprep.subr.bf16.mxu0 %v2590
    %3961 = vmatpush1.bf16.msra.mxu0 %v2589
    %3962 = vmatprep.subr.bf16.mxu0 %v2526
    %3963 = vmatpush1.bf16.msra.mxu0 %v2525
    %3964 = vmatprep.subr.bf16.mxu0 %v2462
    %3965 = vmatpush1.bf16.msra.mxu0 %v2461
    %3966 = vmatprep.subr.bf16.mxu0 %v2398
    %3967 = vmatpush1.bf16.msra.mxu0 %v2397
    %3968 = vmatprep.subr.bf16.mxu0 %v2334
    %3969 = vmatpush1.bf16.msra.mxu0 %v2333
    %3970 = vmatprep.subr.bf16.mxu0 %v2270
    %3971 = vmatpush1.bf16.msra.mxu0 %v2269
    %3972 = vmatprep.subr.bf16.mxu0 0
    %3973 = vmatpush2.bf16.msra.mxu0 0
    %3974 = vmatprep.subr.bf16.mxu0 0
    %3975 = vmatpush2.bf16.msra.mxu0 0
    %3976 = vmatprep.subr.bf16.mxu0 0
    %3977 = vmatpush2.bf16.msra.mxu0 0
    %3978 = vmatprep.subr.bf16.mxu0 0
    %3979 = vmatpush2.bf16.msra.mxu0 0
    %3980 = vmatprep.subr.bf16.mxu0 0
    %3981 = vmatpush2.bf16.msra.mxu0 0
    %3982 = vmatprep.subr.bf16.mxu0 0
    %3983 = vmatpush2.bf16.msra.mxu0 0
    %3984 = vmatprep.subr.bf16.mxu0 0
    %3985 = vmatpush2.bf16.msra.mxu0 0
    %3986 = vmatprep.subr.bf16.mxu0 0
    %3987 = vmatpush2.bf16.msra.mxu0 0
    %3988 = vmatprep.mubr.bf16.mxu0 0
    %3989 = vmatmul.mubr.bf16.gmra.mxu0 %v186
    %v3990 = vpop.f32.mrf.mxu0
    %v3991 = vadd.f32 0.0, %v3990
    %v3992 = vpop.f32.mrf.mxu0
    %v3993 = vadd.f32 0.0, %v3992
    %v3994 = vpop.f32.mrf.mxu0
    %v3995 = vpop.f32.mrf.mxu0
    %3996 = vdwg.mxu0
    %3997 = vmatprep.subr.bf16.mxu0 %v2720
    %3998 = vmatpush1.bf16.msra.mxu0 %v2719
    %3999 = vmatprep.subr.bf16.mxu0 %v2656
    %4000 = vmatpush1.bf16.msra.mxu0 %v2655
    %4001 = vmatprep.subr.bf16.mxu0 %v2592
    %4002 = vmatpush1.bf16.msra.mxu0 %v2591
    %4003 = vmatprep.subr.bf16.mxu0 %v2528
    %4004 = vmatpush1.bf16.msra.mxu0 %v2527
    %4005 = vmatprep.subr.bf16.mxu0 %v2464
    %4006 = vmatpush1.bf16.msra.mxu0 %v2463
    %4007 = vmatprep.subr.bf16.mxu0 %v2400
    %4008 = vmatpush1.bf16.msra.mxu0 %v2399
    %4009 = vmatprep.subr.bf16.mxu0 %v2336
    %4010 = vmatpush1.bf16.msra.mxu0 %v2335
    %4011 = vmatprep.subr.bf16.mxu0 %v2272
    %4012 = vmatpush1.bf16.msra.mxu0 %v2271
    %4013 = vmatprep.subr.bf16.mxu0 0
    %4014 = vmatpush2.bf16.msra.mxu0 0
    %4015 = vmatprep.subr.bf16.mxu0 0
    %4016 = vmatpush2.bf16.msra.mxu0 0
    %4017 = vmatprep.subr.bf16.mxu0 0
    %4018 = vmatpush2.bf16.msra.mxu0 0
    %4019 = vmatprep.subr.bf16.mxu0 0
    %4020 = vmatpush2.bf16.msra.mxu0 0
    %4021 = vmatprep.subr.bf16.mxu0 0
    %4022 = vmatpush2.bf16.msra.mxu0 0
    %4023 = vmatprep.subr.bf16.mxu0 0
    %4024 = vmatpush2.bf16.msra.mxu0 0
    %4025 = vmatprep.subr.bf16.mxu0 0
    %4026 = vmatpush2.bf16.msra.mxu0 0
    %4027 = vmatprep.subr.bf16.mxu0 0
    %4028 = vmatpush2.bf16.msra.mxu0 0
    %4029 = vmatprep.mubr.bf16.mxu0 0
    %4030 = vmatmul.mubr.bf16.gmra.mxu0 %v186
    %v4031 = vpop.f32.mrf.mxu0
    %v4032 = vadd.f32 0.0, %v4031
    %v4033 = vpop.f32.mrf.mxu0
    %v4034 = vadd.f32 0.0, %v4033
    %v4035 = vpop.f32.mrf.mxu0
    %v4036 = vpop.f32.mrf.mxu0
    %4037 = vdwg.mxu0
    %4038 = vmatprep.subr.bf16.mxu0 %v2722
    %4039 = vmatpush1.bf16.msra.mxu0 %v2721
    %4040 = vmatprep.subr.bf16.mxu0 %v2658
    %4041 = vmatpush1.bf16.msra.mxu0 %v2657
    %4042 = vmatprep.subr.bf16.mxu0 %v2594
    %4043 = vmatpush1.bf16.msra.mxu0 %v2593
    %4044 = vmatprep.subr.bf16.mxu0 %v2530
    %4045 = vmatpush1.bf16.msra.mxu0 %v2529
    %4046 = vmatprep.subr.bf16.mxu0 %v2466
    %4047 = vmatpush1.bf16.msra.mxu0 %v2465
    %4048 = vmatprep.subr.bf16.mxu0 %v2402
    %4049 = vmatpush1.bf16.msra.mxu0 %v2401
    %4050 = vmatprep.subr.bf16.mxu0 %v2338
    %4051 = vmatpush1.bf16.msra.mxu0 %v2337
    %4052 = vmatprep.subr.bf16.mxu0 %v2274
    %4053 = vmatpush1.bf16.msra.mxu0 %v2273
    %4054 = vmatprep.subr.bf16.mxu0 0
    %4055 = vmatpush2.bf16.msra.mxu0 0
    %4056 = vmatprep.subr.bf16.mxu0 0
    %4057 = vmatpush2.bf16.msra.mxu0 0
    %4058 = vmatprep.subr.bf16.mxu0 0
    %4059 = vmatpush2.bf16.msra.mxu0 0
    %4060 = vmatprep.subr.bf16.mxu0 0
    %4061 = vmatpush2.bf16.msra.mxu0 0
    %4062 = vmatprep.subr.bf16.mxu0 0
    %4063 = vmatpush2.bf16.msra.mxu0 0
    %4064 = vmatprep.subr.bf16.mxu0 0
    %4065 = vmatpush2.bf16.msra.mxu0 0
    %4066 = vmatprep.subr.bf16.mxu0 0
    %4067 = vmatpush2.bf16.msra.mxu0 0
    %4068 = vmatprep.subr.bf16.mxu0 0
    %4069 = vmatpush2.bf16.msra.mxu0 0
    %4070 = vmatprep.mubr.bf16.mxu0 0
    %4071 = vmatmul.mubr.bf16.gmra.mxu0 %v186
    %v4072 = vpop.f32.mrf.mxu0
    %v4073 = vadd.f32 0.0, %v4072
    %v4074 = vpop.f32.mrf.mxu0
    %v4075 = vadd.f32 0.0, %v4074
    %v4076 = vpop.f32.mrf.mxu0
    %v4077 = vpop.f32.mrf.mxu0
    %4078 = vdwg.mxu0
    %4079 = vmatprep.subr.bf16.mxu0 %v2724
    %4080 = vmatpush1.bf16.msra.mxu0 %v2723
    %4081 = vmatprep.subr.bf16.mxu0 %v2660
    %4082 = vmatpush1.bf16.msra.mxu0 %v2659
    %4083 = vmatprep.subr.bf16.mxu0 %v2596
    %4084 = vmatpush1.bf16.msra.mxu0 %v2595
    %4085 = vmatprep.subr.bf16.mxu0 %v2532
    %4086 = vmatpush1.bf16.msra.mxu0 %v2531
    %4087 = vmatprep.subr.bf16.mxu0 %v2468
    %4088 = vmatpush1.bf16.msra.mxu0 %v2467
    %4089 = vmatprep.subr.bf16.mxu0 %v2404
    %4090 = vmatpush1.bf16.msra.mxu0 %v2403
    %4091 = vmatprep.subr.bf16.mxu0 %v2340
    %4092 = vmatpush1.bf16.msra.mxu0 %v2339
    %4093 = vmatprep.subr.bf16.mxu0 %v2276
    %4094 = vmatpush1.bf16.msra.mxu0 %v2275
    %4095 = vmatprep.subr.bf16.mxu0 0
    %4096 = vmatpush2.bf16.msra.mxu0 0
    %4097 = vmatprep.subr.bf16.mxu0 0
    %4098 = vmatpush2.bf16.msra.mxu0 0
    %4099 = vmatprep.subr.bf16.mxu0 0
    %4100 = vmatpush2.bf16.msra.mxu0 0
    %4101 = vmatprep.subr.bf16.mxu0 0
    %4102 = vmatpush2.bf16.msra.mxu0 0
    %4103 = vmatprep.subr.bf16.mxu0 0
    %4104 = vmatpush2.bf16.msra.mxu0 0
    %4105 = vmatprep.subr.bf16.mxu0 0
    %4106 = vmatpush2.bf16.msra.mxu0 0
    %4107 = vmatprep.subr.bf16.mxu0 0
    %4108 = vmatpush2.bf16.msra.mxu0 0
    %4109 = vmatprep.subr.bf16.mxu0 0
    %4110 = vmatpush2.bf16.msra.mxu0 0
    %4111 = vmatprep.mubr.bf16.mxu0 0
    %4112 = vmatmul.mubr.bf16.gmra.mxu0 %v186
    %v4113 = vpop.f32.mrf.mxu0
    %v4114 = vadd.f32 0.0, %v4113
    %v4115 = vpop.f32.mrf.mxu0
    %v4116 = vadd.f32 0.0, %v4115
    %v4117 = vpop.f32.mrf.mxu0
    %v4118 = vpop.f32.mrf.mxu0
    %4119 = vdwg.mxu0
    %4120 = vmatprep.subr.bf16.mxu0 %v2726
    %4121 = vmatpush1.bf16.msra.mxu0 %v2725
    %4122 = vmatprep.subr.bf16.mxu0 %v2662
    %4123 = vmatpush1.bf16.msra.mxu0 %v2661
    %4124 = vmatprep.subr.bf16.mxu0 %v2598
    %4125 = vmatpush1.bf16.msra.mxu0 %v2597
    %4126 = vmatprep.subr.bf16.mxu0 %v2534
    %4127 = vmatpush1.bf16.msra.mxu0 %v2533
    %4128 = vmatprep.subr.bf16.mxu0 %v2470
    %4129 = vmatpush1.bf16.msra.mxu0 %v2469
    %4130 = vmatprep.subr.bf16.mxu0 %v2406
    %4131 = vmatpush1.bf16.msra.mxu0 %v2405
    %4132 = vmatprep.subr.bf16.mxu0 %v2342
    %4133 = vmatpush1.bf16.msra.mxu0 %v2341
    %4134 = vmatprep.subr.bf16.mxu0 %v2278
    %4135 = vmatpush1.bf16.msra.mxu0 %v2277
    %4136 = vmatprep.subr.bf16.mxu0 0
    %4137 = vmatpush2.bf16.msra.mxu0 0
    %4138 = vmatprep.subr.bf16.mxu0 0
    %4139 = vmatpush2.bf16.msra.mxu0 0
    %4140 = vmatprep.subr.bf16.mxu0 0
    %4141 = vmatpush2.bf16.msra.mxu0 0
    %4142 = vmatprep.subr.bf16.mxu0 0
    %4143 = vmatpush2.bf16.msra.mxu0 0
    %4144 = vmatprep.subr.bf16.mxu0 0
    %4145 = vmatpush2.bf16.msra.mxu0 0
    %4146 = vmatprep.subr.bf16.mxu0 0
    %4147 = vmatpush2.bf16.msra.mxu0 0
    %4148 = vmatprep.subr.bf16.mxu0 0
    %4149 = vmatpush2.bf16.msra.mxu0 0
    %4150 = vmatprep.subr.bf16.mxu0 0
    %4151 = vmatpush2.bf16.msra.mxu0 0
    %4152 = vmatprep.mubr.bf16.mxu0 0
    %4153 = vmatmul.mubr.bf16.gmra.mxu0 %v186
    %v4154 = vpop.f32.mrf.mxu0
    %v4155 = vadd.f32 0.0, %v4154
    %v4156 = vpop.f32.mrf.mxu0
    %v4157 = vadd.f32 0.0, %v4156
    %v4158 = vpop.f32.mrf.mxu0
    %v4159 = vpop.f32.mrf.mxu0
    %4160 = vdwg.mxu0
    %4161 = vmatprep.subr.bf16.mxu0 %v2728
    %4162 = vmatpush1.bf16.msra.mxu0 %v2727
    %4163 = vmatprep.subr.bf16.mxu0 %v2664
    %4164 = vmatpush1.bf16.msra.mxu0 %v2663
    %4165 = vmatprep.subr.bf16.mxu0 %v2600
    %4166 = vmatpush1.bf16.msra.mxu0 %v2599
    %4167 = vmatprep.subr.bf16.mxu0 %v2536
    %4168 = vmatpush1.bf16.msra.mxu0 %v2535
    %4169 = vmatprep.subr.bf16.mxu0 %v2472
    %4170 = vmatpush1.bf16.msra.mxu0 %v2471
    %4171 = vmatprep.subr.bf16.mxu0 %v2408
    %4172 = vmatpush1.bf16.msra.mxu0 %v2407
    %4173 = vmatprep.subr.bf16.mxu0 %v2344
    %4174 = vmatpush1.bf16.msra.mxu0 %v2343
    %4175 = vmatprep.subr.bf16.mxu0 %v2280
    %4176 = vmatpush1.bf16.msra.mxu0 %v2279
    %4177 = vmatprep.subr.bf16.mxu0 0
    %4178 = vmatpush2.bf16.msra.mxu0 0
    %4179 = vmatprep.subr.bf16.mxu0 0
    %4180 = vmatpush2.bf16.msra.mxu0 0
    %4181 = vmatprep.subr.bf16.mxu0 0
    %4182 = vmatpush2.bf16.msra.mxu0 0
    %4183 = vmatprep.subr.bf16.mxu0 0
    %4184 = vmatpush2.bf16.msra.mxu0 0
    %4185 = vmatprep.subr.bf16.mxu0 0
    %4186 = vmatpush2.bf16.msra.mxu0 0
    %4187 = vmatprep.subr.bf16.mxu0 0
    %4188 = vmatpush2.bf16.msra.mxu0 0
    %4189 = vmatprep.subr.bf16.mxu0 0
    %4190 = vmatpush2.bf16.msra.mxu0 0
    %4191 = vmatprep.subr.bf16.mxu0 0
    %4192 = vmatpush2.bf16.msra.mxu0 0
    %4193 = vmatprep.mubr.bf16.mxu0 0
    %4194 = vmatmul.mubr.bf16.gmra.mxu0 %v186
    %v4195 = vpop.f32.mrf.mxu0
    %v4196 = vadd.f32 0.0, %v4195
    %v4197 = vpop.f32.mrf.mxu0
    %v4198 = vadd.f32 0.0, %v4197
    %v4199 = vpop.f32.mrf.mxu0
    %v4200 = vpop.f32.mrf.mxu0
    %4201 = vdwg.mxu0
    %4202 = vmatprep.subr.bf16.mxu0 %v2730
    %4203 = vmatpush1.bf16.msra.mxu0 %v2729
    %4204 = vmatprep.subr.bf16.mxu0 %v2666
    %4205 = vmatpush1.bf16.msra.mxu0 %v2665
    %4206 = vmatprep.subr.bf16.mxu0 %v2602
    %4207 = vmatpush1.bf16.msra.mxu0 %v2601
    %4208 = vmatprep.subr.bf16.mxu0 %v2538
    %4209 = vmatpush1.bf16.msra.mxu0 %v2537
    %4210 = vmatprep.subr.bf16.mxu0 %v2474
    %4211 = vmatpush1.bf16.msra.mxu0 %v2473
    %4212 = vmatprep.subr.bf16.mxu0 %v2410
    %4213 = vmatpush1.bf16.msra.mxu0 %v2409
    %4214 = vmatprep.subr.bf16.mxu0 %v2346
    %4215 = vmatpush1.bf16.msra.mxu0 %v2345
    %4216 = vmatprep.subr.bf16.mxu0 %v2282
    %4217 = vmatpush1.bf16.msra.mxu0 %v2281
    %4218 = vmatprep.subr.bf16.mxu0 0
    %4219 = vmatpush2.bf16.msra.mxu0 0
    %4220 = vmatprep.subr.bf16.mxu0 0
    %4221 = vmatpush2.bf16.msra.mxu0 0
    %4222 = vmatprep.subr.bf16.mxu0 0
    %4223 = vmatpush2.bf16.msra.mxu0 0
    %4224 = vmatprep.subr.bf16.mxu0 0
    %4225 = vmatpush2.bf16.msra.mxu0 0
    %4226 = vmatprep.subr.bf16.mxu0 0
    %4227 = vmatpush2.bf16.msra.mxu0 0
    %4228 = vmatprep.subr.bf16.mxu0 0
    %4229 = vmatpush2.bf16.msra.mxu0 0
    %4230 = vmatprep.subr.bf16.mxu0 0
    %4231 = vmatpush2.bf16.msra.mxu0 0
    %4232 = vmatprep.subr.bf16.mxu0 0
    %4233 = vmatpush2.bf16.msra.mxu0 0
    %4234 = vmatprep.mubr.bf16.mxu0 0
    %4235 = vmatmul.mubr.bf16.gmra.mxu0 %v186
    %v4236 = vpop.f32.mrf.mxu0
    %v4237 = vadd.f32 0.0, %v4236
    %v4238 = vpop.f32.mrf.mxu0
    %v4239 = vadd.f32 0.0, %v4238
    %v4240 = vpop.f32.mrf.mxu0
    %v4241 = vpop.f32.mrf.mxu0
    %4242 = vdwg.mxu0
    %4243 = vmatprep.subr.bf16.mxu0 %v2732
    %4244 = vmatpush1.bf16.msra.mxu0 %v2731
    %4245 = vmatprep.subr.bf16.mxu0 %v2668
    %4246 = vmatpush1.bf16.msra.mxu0 %v2667
    %4247 = vmatprep.subr.bf16.mxu0 %v2604
    %4248 = vmatpush1.bf16.msra.mxu0 %v2603
    %4249 = vmatprep.subr.bf16.mxu0 %v2540
    %4250 = vmatpush1.bf16.msra.mxu0 %v2539
    %4251 = vmatprep.subr.bf16.mxu0 %v2476
    %4252 = vmatpush1.bf16.msra.mxu0 %v2475
    %4253 = vmatprep.subr.bf16.mxu0 %v2412
    %4254 = vmatpush1.bf16.msra.mxu0 %v2411
    %4255 = vmatprep.subr.bf16.mxu0 %v2348
    %4256 = vmatpush1.bf16.msra.mxu0 %v2347
    %4257 = vmatprep.subr.bf16.mxu0 %v2284
    %4258 = vmatpush1.bf16.msra.mxu0 %v2283
    %4259 = vmatprep.subr.bf16.mxu0 0
    %4260 = vmatpush2.bf16.msra.mxu0 0
    %4261 = vmatprep.subr.bf16.mxu0 0
    %4262 = vmatpush2.bf16.msra.mxu0 0
    %4263 = vmatprep.subr.bf16.mxu0 0
    %4264 = vmatpush2.bf16.msra.mxu0 0
    %4265 = vmatprep.subr.bf16.mxu0 0
    %4266 = vmatpush2.bf16.msra.mxu0 0
    %4267 = vmatprep.subr.bf16.mxu0 0
    %4268 = vmatpush2.bf16.msra.mxu0 0
    %4269 = vmatprep.subr.bf16.mxu0 0
    %4270 = vmatpush2.bf16.msra.mxu0 0
    %4271 = vmatprep.subr.bf16.mxu0 0
    %4272 = vmatpush2.bf16.msra.mxu0 0
    %4273 = vmatprep.subr.bf16.mxu0 0
    %4274 = vmatpush2.bf16.msra.mxu0 0
    %4275 = vmatprep.mubr.bf16.mxu0 0
    %4276 = vmatmul.mubr.bf16.gmra.mxu0 %v186
    %v4277 = vpop.f32.mrf.mxu0
    %v4278 = vadd.f32 0.0, %v4277
    %v4279 = vpop.f32.mrf.mxu0
    %v4280 = vadd.f32 0.0, %v4279
    %v4281 = vpop.f32.mrf.mxu0
    %v4282 = vpop.f32.mrf.mxu0
    %4283 = vdwg.mxu0
    %4284 = vmatprep.subr.bf16.mxu0 %v2734
    %4285 = vmatpush1.bf16.msra.mxu0 %v2733
    %4286 = vmatprep.subr.bf16.mxu0 %v2670
    %4287 = vmatpush1.bf16.msra.mxu0 %v2669
    %4288 = vmatprep.subr.bf16.mxu0 %v2606
    %4289 = vmatpush1.bf16.msra.mxu0 %v2605
    %4290 = vmatprep.subr.bf16.mxu0 %v2542
    %4291 = vmatpush1.bf16.msra.mxu0 %v2541
    %4292 = vmatprep.subr.bf16.mxu0 %v2478
    %4293 = vmatpush1.bf16.msra.mxu0 %v2477
    %4294 = vmatprep.subr.bf16.mxu0 %v2414
    %4295 = vmatpush1.bf16.msra.mxu0 %v2413
    %4296 = vmatprep.subr.bf16.mxu0 %v2350
    %4297 = vmatpush1.bf16.msra.mxu0 %v2349
    %4298 = vmatprep.subr.bf16.mxu0 %v2286
    %4299 = vmatpush1.bf16.msra.mxu0 %v2285
    %4300 = vmatprep.subr.bf16.mxu0 0
    %4301 = vmatpush2.bf16.msra.mxu0 0
    %4302 = vmatprep.subr.bf16.mxu0 0
    %4303 = vmatpush2.bf16.msra.mxu0 0
    %4304 = vmatprep.subr.bf16.mxu0 0
    %4305 = vmatpush2.bf16.msra.mxu0 0
    %4306 = vmatprep.subr.bf16.mxu0 0
    %4307 = vmatpush2.bf16.msra.mxu0 0
    %4308 = vmatprep.subr.bf16.mxu0 0
    %4309 = vmatpush2.bf16.msra.mxu0 0
    %4310 = vmatprep.subr.bf16.mxu0 0
    %4311 = vmatpush2.bf16.msra.mxu0 0
    %4312 = vmatprep.subr.bf16.mxu0 0
    %4313 = vmatpush2.bf16.msra.mxu0 0
    %4314 = vmatprep.subr.bf16.mxu0 0
    %4315 = vmatpush2.bf16.msra.mxu0 0
    %4316 = vmatprep.mubr.bf16.mxu0 0
    %4317 = vmatmul.mubr.bf16.gmra.mxu0 %v186
    %v4318 = vpop.f32.mrf.mxu0
    %v4319 = vadd.f32 0.0, %v4318
    %v4320 = vpop.f32.mrf.mxu0
    %v4321 = vadd.f32 0.0, %v4320
    %v4322 = vpop.f32.mrf.mxu0
    %v4323 = vpop.f32.mrf.mxu0
    %4324 = vdwg.mxu0
    %4325 = vmatprep.subr.bf16.mxu0 %v2736
    %4326 = vmatpush1.bf16.msra.mxu0 %v2735
    %4327 = vmatprep.subr.bf16.mxu0 %v2672
    %4328 = vmatpush1.bf16.msra.mxu0 %v2671
    %4329 = vmatprep.subr.bf16.mxu0 %v2608
    %4330 = vmatpush1.bf16.msra.mxu0 %v2607
    %4331 = vmatprep.subr.bf16.mxu0 %v2544
    %4332 = vmatpush1.bf16.msra.mxu0 %v2543
    %4333 = vmatprep.subr.bf16.mxu0 %v2480
    %4334 = vmatpush1.bf16.msra.mxu0 %v2479
    %4335 = vmatprep.subr.bf16.mxu0 %v2416
    %4336 = vmatpush1.bf16.msra.mxu0 %v2415
    %4337 = vmatprep.subr.bf16.mxu0 %v2352
    %4338 = vmatpush1.bf16.msra.mxu0 %v2351
    %4339 = vmatprep.subr.bf16.mxu0 %v2288
    %4340 = vmatpush1.bf16.msra.mxu0 %v2287
    %4341 = vmatprep.subr.bf16.mxu0 0
    %4342 = vmatpush2.bf16.msra.mxu0 0
    %4343 = vmatprep.subr.bf16.mxu0 0
    %4344 = vmatpush2.bf16.msra.mxu0 0
    %4345 = vmatprep.subr.bf16.mxu0 0
    %4346 = vmatpush2.bf16.msra.mxu0 0
    %4347 = vmatprep.subr.bf16.mxu0 0
    %4348 = vmatpush2.bf16.msra.mxu0 0
    %4349 = vmatprep.subr.bf16.mxu0 0
    %4350 = vmatpush2.bf16.msra.mxu0 0
    %4351 = vmatprep.subr.bf16.mxu0 0
    %4352 = vmatpush2.bf16.msra.mxu0 0
    %4353 = vmatprep.subr.bf16.mxu0 0
    %4354 = vmatpush2.bf16.msra.mxu0 0
    %4355 = vmatprep.subr.bf16.mxu0 0
    %4356 = vmatpush2.bf16.msra.mxu0 0
    %4357 = vmatprep.mubr.bf16.mxu0 0
    %4358 = vmatmul.mubr.bf16.gmra.mxu0 %v186
    %v4359 = vpop.f32.mrf.mxu0
    %v4360 = vadd.f32 0.0, %v4359
    %v4361 = vpop.f32.mrf.mxu0
    %v4362 = vadd.f32 0.0, %v4361
    %v4363 = vpop.f32.mrf.mxu0
    %v4364 = vpop.f32.mrf.mxu0
    %4365 = vdwg.mxu0
    %4366 = vmatprep.subr.bf16.mxu0 %v2738
    %4367 = vmatpush1.bf16.msra.mxu0 %v2737
    %4368 = vmatprep.subr.bf16.mxu0 %v2674
    %4369 = vmatpush1.bf16.msra.mxu0 %v2673
    %4370 = vmatprep.subr.bf16.mxu0 %v2610
    %4371 = vmatpush1.bf16.msra.mxu0 %v2609
    %4372 = vmatprep.subr.bf16.mxu0 %v2546
    %4373 = vmatpush1.bf16.msra.mxu0 %v2545
    %4374 = vmatprep.subr.bf16.mxu0 %v2482
    %4375 = vmatpush1.bf16.msra.mxu0 %v2481
    %4376 = vmatprep.subr.bf16.mxu0 %v2418
    %4377 = vmatpush1.bf16.msra.mxu0 %v2417
    %4378 = vmatprep.subr.bf16.mxu0 %v2354
    %4379 = vmatpush1.bf16.msra.mxu0 %v2353
    %4380 = vmatprep.subr.bf16.mxu0 %v2290
    %4381 = vmatpush1.bf16.msra.mxu0 %v2289
    %4382 = vmatprep.subr.bf16.mxu0 0
    %4383 = vmatpush2.bf16.msra.mxu0 0
    %4384 = vmatprep.subr.bf16.mxu0 0
    %4385 = vmatpush2.bf16.msra.mxu0 0
    %4386 = vmatprep.subr.bf16.mxu0 0
    %4387 = vmatpush2.bf16.msra.mxu0 0
    %4388 = vmatprep.subr.bf16.mxu0 0
    %4389 = vmatpush2.bf16.msra.mxu0 0
    %4390 = vmatprep.subr.bf16.mxu0 0
    %4391 = vmatpush2.bf16.msra.mxu0 0
    %4392 = vmatprep.subr.bf16.mxu0 0
    %4393 = vmatpush2.bf16.msra.mxu0 0
    %4394 = vmatprep.subr.bf16.mxu0 0
    %4395 = vmatpush2.bf16.msra.mxu0 0
    %4396 = vmatprep.subr.bf16.mxu0 0
    %4397 = vmatpush2.bf16.msra.mxu0 0
    %4398 = vmatprep.mubr.bf16.mxu0 0
    %4399 = vmatmul.mubr.bf16.gmra.mxu0 %v186
    %v4400 = vpop.f32.mrf.mxu0
    %v4401 = vadd.f32 0.0, %v4400
    %v4402 = vpop.f32.mrf.mxu0
    %v4403 = vadd.f32 0.0, %v4402
    %v4404 = vpop.f32.mrf.mxu0
    %v4405 = vpop.f32.mrf.mxu0
    %4406 = vdwg.mxu0
    %4407 = vmatprep.subr.bf16.mxu0 %v2740
    %4408 = vmatpush1.bf16.msra.mxu0 %v2739
    %4409 = vmatprep.subr.bf16.mxu0 %v2676
    %4410 = vmatpush1.bf16.msra.mxu0 %v2675
    %4411 = vmatprep.subr.bf16.mxu0 %v2612
    %4412 = vmatpush1.bf16.msra.mxu0 %v2611
    %4413 = vmatprep.subr.bf16.mxu0 %v2548
    %4414 = vmatpush1.bf16.msra.mxu0 %v2547
    %4415 = vmatprep.subr.bf16.mxu0 %v2484
    %4416 = vmatpush1.bf16.msra.mxu0 %v2483
    %4417 = vmatprep.subr.bf16.mxu0 %v2420
    %4418 = vmatpush1.bf16.msra.mxu0 %v2419
    %4419 = vmatprep.subr.bf16.mxu0 %v2356
    %4420 = vmatpush1.bf16.msra.mxu0 %v2355
    %4421 = vmatprep.subr.bf16.mxu0 %v2292
    %4422 = vmatpush1.bf16.msra.mxu0 %v2291
    %4423 = vmatprep.subr.bf16.mxu0 0
    %4424 = vmatpush2.bf16.msra.mxu0 0
    %4425 = vmatprep.subr.bf16.mxu0 0
    %4426 = vmatpush2.bf16.msra.mxu0 0
    %4427 = vmatprep.subr.bf16.mxu0 0
    %4428 = vmatpush2.bf16.msra.mxu0 0
    %4429 = vmatprep.subr.bf16.mxu0 0
    %4430 = vmatpush2.bf16.msra.mxu0 0
    %4431 = vmatprep.subr.bf16.mxu0 0
    %4432 = vmatpush2.bf16.msra.mxu0 0
    %4433 = vmatprep.subr.bf16.mxu0 0
    %4434 = vmatpush2.bf16.msra.mxu0 0
    %4435 = vmatprep.subr.bf16.mxu0 0
    %4436 = vmatpush2.bf16.msra.mxu0 0
    %4437 = vmatprep.subr.bf16.mxu0 0
    %4438 = vmatpush2.bf16.msra.mxu0 0
    %4439 = vmatprep.mubr.bf16.mxu0 0
    %4440 = vmatmul.mubr.bf16.gmra.mxu0 %v186
    %v4441 = vpop.f32.mrf.mxu0
    %v4442 = vadd.f32 0.0, %v4441
    %v4443 = vpop.f32.mrf.mxu0
    %v4444 = vadd.f32 0.0, %v4443
    %v4445 = vpop.f32.mrf.mxu0
    %v4446 = vpop.f32.mrf.mxu0
    %4447 = vdwg.mxu0
    %4448 = vmatprep.subr.bf16.mxu0 %v2742
    %4449 = vmatpush1.bf16.msra.mxu0 %v2741
    %4450 = vmatprep.subr.bf16.mxu0 %v2678
    %4451 = vmatpush1.bf16.msra.mxu0 %v2677
    %4452 = vmatprep.subr.bf16.mxu0 %v2614
    %4453 = vmatpush1.bf16.msra.mxu0 %v2613
    %4454 = vmatprep.subr.bf16.mxu0 %v2550
    %4455 = vmatpush1.bf16.msra.mxu0 %v2549
    %4456 = vmatprep.subr.bf16.mxu0 %v2486
    %4457 = vmatpush1.bf16.msra.mxu0 %v2485
    %4458 = vmatprep.subr.bf16.mxu0 %v2422
    %4459 = vmatpush1.bf16.msra.mxu0 %v2421
    %4460 = vmatprep.subr.bf16.mxu0 %v2358
    %4461 = vmatpush1.bf16.msra.mxu0 %v2357
    %4462 = vmatprep.subr.bf16.mxu0 %v2294
    %4463 = vmatpush1.bf16.msra.mxu0 %v2293
    %4464 = vmatprep.subr.bf16.mxu0 0
    %4465 = vmatpush2.bf16.msra.mxu0 0
    %4466 = vmatprep.subr.bf16.mxu0 0
    %4467 = vmatpush2.bf16.msra.mxu0 0
    %4468 = vmatprep.subr.bf16.mxu0 0
    %4469 = vmatpush2.bf16.msra.mxu0 0
    %4470 = vmatprep.subr.bf16.mxu0 0
    %4471 = vmatpush2.bf16.msra.mxu0 0
    %4472 = vmatprep.subr.bf16.mxu0 0
    %4473 = vmatpush2.bf16.msra.mxu0 0
    %4474 = vmatprep.subr.bf16.mxu0 0
    %4475 = vmatpush2.bf16.msra.mxu0 0
    %4476 = vmatprep.subr.bf16.mxu0 0
    %4477 = vmatpush2.bf16.msra.mxu0 0
    %4478 = vmatprep.subr.bf16.mxu0 0
    %4479 = vmatpush2.bf16.msra.mxu0 0
    %4480 = vmatprep.mubr.bf16.mxu0 0
    %4481 = vmatmul.mubr.bf16.gmra.mxu0 %v186
    %v4482 = vpop.f32.mrf.mxu0
    %v4483 = vadd.f32 0.0, %v4482
    %v4484 = vpop.f32.mrf.mxu0
    %v4485 = vadd.f32 0.0, %v4484
    %v4486 = vpop.f32.mrf.mxu0
    %v4487 = vpop.f32.mrf.mxu0
    %4488 = vdwg.mxu0
    %4489 = vmatprep.subr.bf16.mxu0 %v2744
    %4490 = vmatpush1.bf16.msra.mxu0 %v2743
    %4491 = vmatprep.subr.bf16.mxu0 %v2680
    %4492 = vmatpush1.bf16.msra.mxu0 %v2679
    %4493 = vmatprep.subr.bf16.mxu0 %v2616
    %4494 = vmatpush1.bf16.msra.mxu0 %v2615
    %4495 = vmatprep.subr.bf16.mxu0 %v2552
    %4496 = vmatpush1.bf16.msra.mxu0 %v2551
    %4497 = vmatprep.subr.bf16.mxu0 %v2488
    %4498 = vmatpush1.bf16.msra.mxu0 %v2487
    %4499 = vmatprep.subr.bf16.mxu0 %v2424
    %4500 = vmatpush1.bf16.msra.mxu0 %v2423
    %4501 = vmatprep.subr.bf16.mxu0 %v2360
    %4502 = vmatpush1.bf16.msra.mxu0 %v2359
    %4503 = vmatprep.subr.bf16.mxu0 %v2296
    %4504 = vmatpush1.bf16.msra.mxu0 %v2295
    %4505 = vmatprep.subr.bf16.mxu0 0
    %4506 = vmatpush2.bf16.msra.mxu0 0
    %4507 = vmatprep.subr.bf16.mxu0 0
    %4508 = vmatpush2.bf16.msra.mxu0 0
    %4509 = vmatprep.subr.bf16.mxu0 0
    %4510 = vmatpush2.bf16.msra.mxu0 0
    %4511 = vmatprep.subr.bf16.mxu0 0
    %4512 = vmatpush2.bf16.msra.mxu0 0
    %4513 = vmatprep.subr.bf16.mxu0 0
    %4514 = vmatpush2.bf16.msra.mxu0 0
    %4515 = vmatprep.subr.bf16.mxu0 0
    %4516 = vmatpush2.bf16.msra.mxu0 0
    %4517 = vmatprep.subr.bf16.mxu0 0
    %4518 = vmatpush2.bf16.msra.mxu0 0
    %4519 = vmatprep.subr.bf16.mxu0 0
    %4520 = vmatpush2.bf16.msra.mxu0 0
    %4521 = vmatprep.mubr.bf16.mxu0 0
    %4522 = vmatmul.mubr.bf16.gmra.mxu0 %v186
    %v4523 = vpop.f32.mrf.mxu0
    %v4524 = vadd.f32 0.0, %v4523
    %v4525 = vpop.f32.mrf.mxu0
    %v4526 = vadd.f32 0.0, %v4525
    %v4527 = vpop.f32.mrf.mxu0
    %v4528 = vpop.f32.mrf.mxu0
    %4529 = vdwg.mxu0
    %4530 = vmatprep.subr.bf16.mxu0 %v2746
    %4531 = vmatpush1.bf16.msra.mxu0 %v2745
    %4532 = vmatprep.subr.bf16.mxu0 %v2682
    %4533 = vmatpush1.bf16.msra.mxu0 %v2681
    %4534 = vmatprep.subr.bf16.mxu0 %v2618
    %4535 = vmatpush1.bf16.msra.mxu0 %v2617
    %4536 = vmatprep.subr.bf16.mxu0 %v2554
    %4537 = vmatpush1.bf16.msra.mxu0 %v2553
    %4538 = vmatprep.subr.bf16.mxu0 %v2490
    %4539 = vmatpush1.bf16.msra.mxu0 %v2489
    %4540 = vmatprep.subr.bf16.mxu0 %v2426
    %4541 = vmatpush1.bf16.msra.mxu0 %v2425
    %4542 = vmatprep.subr.bf16.mxu0 %v2362
    %4543 = vmatpush1.bf16.msra.mxu0 %v2361
    %4544 = vmatprep.subr.bf16.mxu0 %v2298
    %4545 = vmatpush1.bf16.msra.mxu0 %v2297
    %4546 = vmatprep.subr.bf16.mxu0 0
    %4547 = vmatpush2.bf16.msra.mxu0 0
    %4548 = vmatprep.subr.bf16.mxu0 0
    %4549 = vmatpush2.bf16.msra.mxu0 0
    %4550 = vmatprep.subr.bf16.mxu0 0
    %4551 = vmatpush2.bf16.msra.mxu0 0
    %4552 = vmatprep.subr.bf16.mxu0 0
    %4553 = vmatpush2.bf16.msra.mxu0 0
    %4554 = vmatprep.subr.bf16.mxu0 0
    %4555 = vmatpush2.bf16.msra.mxu0 0
    %4556 = vmatprep.subr.bf16.mxu0 0
    %4557 = vmatpush2.bf16.msra.mxu0 0
    %4558 = vmatprep.subr.bf16.mxu0 0
    %4559 = vmatpush2.bf16.msra.mxu0 0
    %4560 = vmatprep.subr.bf16.mxu0 0
    %4561 = vmatpush2.bf16.msra.mxu0 0
    %4562 = vmatprep.mubr.bf16.mxu0 0
    %4563 = vmatmul.mubr.bf16.gmra.mxu0 %v186
    %v4564 = vpop.f32.mrf.mxu0
    %v4565 = vadd.f32 0.0, %v4564
    %v4566 = vpop.f32.mrf.mxu0
    %v4567 = vadd.f32 0.0, %v4566
    %v4568 = vpop.f32.mrf.mxu0
    %v4569 = vpop.f32.mrf.mxu0
    %4570 = vdwg.mxu0
    %v4571 = vadd.f32 %v121, %v3294
    %v4572 = vadd.f32 %v122, %v3296
    %v4573 = vadd.f32 %v123, %v3335
    %v4574 = vadd.f32 %v124, %v3337
    %v4575 = vadd.f32 %v125, %v3376
    %v4576 = vadd.f32 %v126, %v3378
    %v4577 = vadd.f32 %v127, %v3417
    %v4578 = vadd.f32 %v128, %v3419
    %v4579 = vadd.f32 %v129, %v3458
    %v4580 = vadd.f32 %v130, %v3460
    %v4581 = vadd.f32 %v131, %v3499
    %v4582 = vadd.f32 %v132, %v3501
    %v4583 = vadd.f32 %v133, %v3540
    %v4584 = vadd.f32 %v134, %v3542
    %v4585 = vadd.f32 %v135, %v3581
    %v4586 = vadd.f32 %v136, %v3583
    %v4587 = vadd.f32 %v137, %v3622
    %v4588 = vadd.f32 %v138, %v3624
    %v4589 = vadd.f32 %v139, %v3663
    %v4590 = vadd.f32 %v140, %v3665
    %v4591 = vadd.f32 %v141, %v3704
    %v4592 = vadd.f32 %v142, %v3706
    %v4593 = vadd.f32 %v143, %v3745
    %v4594 = vadd.f32 %v144, %v3747
    %v4595 = vadd.f32 %v145, %v3786
    %v4596 = vadd.f32 %v146, %v3788
    %v4597 = vadd.f32 %v147, %v3827
    %v4598 = vadd.f32 %v148, %v3829
    %v4599 = vadd.f32 %v149, %v3868
    %v4600 = vadd.f32 %v150, %v3870
    %v4601 = vadd.f32 %v151, %v3909
    %v4602 = vadd.f32 %v152, %v3911
    %v4603 = vadd.f32 %v153, %v3950
    %v4604 = vadd.f32 %v154, %v3952
    %v4605 = vadd.f32 %v155, %v3991
    %v4606 = vadd.f32 %v156, %v3993
    %v4607 = vadd.f32 %v157, %v4032
    %v4608 = vadd.f32 %v158, %v4034
    %v4609 = vadd.f32 %v159, %v4073
    %v4610 = vadd.f32 %v160, %v4075
    %v4611 = vadd.f32 %v161, %v4114
    %v4612 = vadd.f32 %v162, %v4116
    %v4613 = vadd.f32 %v163, %v4155
    %v4614 = vadd.f32 %v164, %v4157
    %v4615 = vadd.f32 %v165, %v4196
    %v4616 = vadd.f32 %v166, %v4198
    %v4617 = vadd.f32 %v167, %v4237
    %v4618 = vadd.f32 %v168, %v4239
    %v4619 = vadd.f32 %v169, %v4278
    %v4620 = vadd.f32 %v170, %v4280
    %v4621 = vadd.f32 %v171, %v4319
    %v4622 = vadd.f32 %v172, %v4321
    %v4623 = vadd.f32 %v173, %v4360
    %v4624 = vadd.f32 %v174, %v4362
    %v4625 = vadd.f32 %v175, %v4401
    %v4626 = vadd.f32 %v176, %v4403
    %v4627 = vadd.f32 %v177, %v4442
    %v4628 = vadd.f32 %v178, %v4444
    %v4629 = vadd.f32 %v179, %v4483
    %v4630 = vadd.f32 %v180, %v4485
    %v4631 = vadd.f32 %v181, %v4524
    %v4632 = vadd.f32 %v182, %v4526
    %v4633 = vadd.f32 %v183, %v4565
    %v4634 = vadd.f32 %v184, %v4567
    %4635 = vst [vmem:[#allocation2] sm:$0xff] %v4571
    %4636 = vst [vmem:[#allocation2 + $0x8] sm:$0xff] %v4572
    %4637 = vst [vmem:[#allocation2 + $0x10] sm:$0xff] %v4573
    %4638 = vst [vmem:[#allocation2 + $0x18] sm:$0xff] %v4574
    %4639 = vst [vmem:[#allocation2 + $0x20] sm:$0xff] %v4575
    %4640 = vst [vmem:[#allocation2 + $0x28] sm:$0xff] %v4576
    %4641 = vst [vmem:[#allocation2 + $0x30] sm:$0xff] %v4577
    %4642 = vst [vmem:[#allocation2 + $0x38] sm:$0xff] %v4578
    %4643 = vst [vmem:[#allocation2 + $0x40] sm:$0xff] %v4579
    %4644 = vst [vmem:[#allocation2 + $0x48] sm:$0xff] %v4580
    %4645 = vst [vmem:[#allocation2 + $0x50] sm:$0xff] %v4581
    %4646 = vst [vmem:[#allocation2 + $0x58] sm:$0xff] %v4582
    %4647 = vst [vmem:[#allocation2 + $0x60] sm:$0xff] %v4583
    %4648 = vst [vmem:[#allocation2 + $0x68] sm:$0xff] %v4584
    %4649 = vst [vmem:[#allocation2 + $0x70] sm:$0xff] %v4585
    %4650 = vst [vmem:[#allocation2 + $0x78] sm:$0xff] %v4586
    %4651 = vst [vmem:[#allocation2 + $0x80] sm:$0xff] %v4587
    %4652 = vst [vmem:[#allocation2 + $0x88] sm:$0xff] %v4588
    %4653 = vst [vmem:[#allocation2 + $0x90] sm:$0xff] %v4589
    %4654 = vst [vmem:[#allocation2 + $0x98] sm:$0xff] %v4590
    %4655 = vst [vmem:[#allocation2 + $0xa0] sm:$0xff] %v4591
    %4656 = vst [vmem:[#allocation2 + $0xa8] sm:$0xff] %v4592
    %4657 = vst [vmem:[#allocation2 + $0xb0] sm:$0xff] %v4593
    %4658 = vst [vmem:[#allocation2 + $0xb8] sm:$0xff] %v4594
    %4659 = vst [vmem:[#allocation2 + $0xc0] sm:$0xff] %v4595
    %4660 = vst [vmem:[#allocation2 + $0xc8] sm:$0xff] %v4596
    %4661 = vst [vmem:[#allocation2 + $0xd0] sm:$0xff] %v4597
    %4662 = vst [vmem:[#allocation2 + $0xd8] sm:$0xff] %v4598
    %4663 = vst [vmem:[#allocation2 + $0xe0] sm:$0xff] %v4599
    %4664 = vst [vmem:[#allocation2 + $0xe8] sm:$0xff] %v4600
    %4665 = vst [vmem:[#allocation2 + $0xf0] sm:$0xff] %v4601
    %4666 = vst [vmem:[#allocation2 + $0xf8] sm:$0xff] %v4602
    %4667 = vst [vmem:[#allocation2 + $0x100] sm:$0xff] %v4603
    %4668 = vst [vmem:[#allocation2 + $0x108] sm:$0xff] %v4604
    %4669 = vst [vmem:[#allocation2 + $0x110] sm:$0xff] %v4605
    %4670 = vst [vmem:[#allocation2 + $0x118] sm:$0xff] %v4606
    %4671 = vst [vmem:[#allocation2 + $0x120] sm:$0xff] %v4607
    %4672 = vst [vmem:[#allocation2 + $0x128] sm:$0xff] %v4608
    %4673 = vst [vmem:[#allocation2 + $0x130] sm:$0xff] %v4609
    %4674 = vst [vmem:[#allocation2 + $0x138] sm:$0xff] %v4610
    %4675 = vst [vmem:[#allocation2 + $0x140] sm:$0xff] %v4611
    %4676 = vst [vmem:[#allocation2 + $0x148] sm:$0xff] %v4612
    %4677 = vst [vmem:[#allocation2 + $0x150] sm:$0xff] %v4613
    %4678 = vst [vmem:[#allocation2 + $0x158] sm:$0xff] %v4614
    %4679 = vst [vmem:[#allocation2 + $0x160] sm:$0xff] %v4615
    %4680 = vst [vmem:[#allocation2 + $0x168] sm:$0xff] %v4616
    %4681 = vst [vmem:[#allocation2 + $0x170] sm:$0xff] %v4617
    %4682 = vst [vmem:[#allocation2 + $0x178] sm:$0xff] %v4618
    %4683 = vst [vmem:[#allocation2 + $0x180] sm:$0xff] %v4619
    %4684 = vst [vmem:[#allocation2 + $0x188] sm:$0xff] %v4620
    %4685 = vst [vmem:[#allocation2 + $0x190] sm:$0xff] %v4621
    %4686 = vst [vmem:[#allocation2 + $0x198] sm:$0xff] %v4622
    %4687 = vst [vmem:[#allocation2 + $0x1a0] sm:$0xff] %v4623
    %4688 = vst [vmem:[#allocation2 + $0x1a8] sm:$0xff] %v4624
    %4689 = vst [vmem:[#allocation2 + $0x1b0] sm:$0xff] %v4625
    %4690 = vst [vmem:[#allocation2 + $0x1b8] sm:$0xff] %v4626
    %4691 = vst [vmem:[#allocation2 + $0x1c0] sm:$0xff] %v4627
    %4692 = vst [vmem:[#allocation2 + $0x1c8] sm:$0xff] %v4628
    %4693 = vst [vmem:[#allocation2 + $0x1d0] sm:$0xff] %v4629
    %4694 = vst [vmem:[#allocation2 + $0x1d8] sm:$0xff] %v4630
    %4695 = vst [vmem:[#allocation2 + $0x1e0] sm:$0xff] %v4631
    %4696 = vst [vmem:[#allocation2 + $0x1e8] sm:$0xff] %v4632
    %4697 = vst [vmem:[#allocation2 + $0x1f0] sm:$0xff] %v4633
    %4698 = vst [vmem:[#allocation2 + $0x1f8] sm:$0xff] %v4634
    // Predicated region
    $region30: #{tpu_custom_call.1} parent=1 // pred_check
      %p4699 = pneg %p53
    $region31: #{tpu_custom_call.1} parent=1 // pred_check_branch
      %4701 = sbr.rel (%p4699) target = $region33
    $region32: #{tpu_custom_call.1} parent=1 // pred_region
      %v4702 = vld [vmem:[#allocation2] sm:$0xff]
      %v4703 = vld [vmem:[#allocation2 + $0x8] sm:$0xff]
      %v4704 = vld [vmem:[#allocation2 + $0x10] sm:$0xff]
      %v4705 = vld [vmem:[#allocation2 + $0x18] sm:$0xff]
      %v4706 = vld [vmem:[#allocation2 + $0x20] sm:$0xff]
      %v4707 = vld [vmem:[#allocation2 + $0x28] sm:$0xff]
      %v4708 = vld [vmem:[#allocation2 + $0x30] sm:$0xff]
      %v4709 = vld [vmem:[#allocation2 + $0x38] sm:$0xff]
      %v4710 = vld [vmem:[#allocation2 + $0x40] sm:$0xff]
      %v4711 = vld [vmem:[#allocation2 + $0x48] sm:$0xff]
      %v4712 = vld [vmem:[#allocation2 + $0x50] sm:$0xff]
      %v4713 = vld [vmem:[#allocation2 + $0x58] sm:$0xff]
      %v4714 = vld [vmem:[#allocation2 + $0x60] sm:$0xff]
      %v4715 = vld [vmem:[#allocation2 + $0x68] sm:$0xff]
      %v4716 = vld [vmem:[#allocation2 + $0x70] sm:$0xff]
      %v4717 = vld [vmem:[#allocation2 + $0x78] sm:$0xff]
      %v4718 = vld [vmem:[#allocation2 + $0x80] sm:$0xff]
      %v4719 = vld [vmem:[#allocation2 + $0x88] sm:$0xff]
      %v4720 = vld [vmem:[#allocation2 + $0x90] sm:$0xff]
      %v4721 = vld [vmem:[#allocation2 + $0x98] sm:$0xff]
      %v4722 = vld [vmem:[#allocation2 + $0xa0] sm:$0xff]
      %v4723 = vld [vmem:[#allocation2 + $0xa8] sm:$0xff]
      %v4724 = vld [vmem:[#allocation2 + $0xb0] sm:$0xff]
      %v4725 = vld [vmem:[#allocation2 + $0xb8] sm:$0xff]
      %v4726 = vld [vmem:[#allocation2 + $0xc0] sm:$0xff]
      %v4727 = vld [vmem:[#allocation2 + $0xc8] sm:$0xff]
      %v4728 = vld [vmem:[#allocation2 + $0xd0] sm:$0xff]
      %v4729 = vld [vmem:[#allocation2 + $0xd8] sm:$0xff]
      %v4730 = vld [vmem:[#allocation2 + $0xe0] sm:$0xff]
      %v4731 = vld [vmem:[#allocation2 + $0xe8] sm:$0xff]
      %v4732 = vld [vmem:[#allocation2 + $0xf0] sm:$0xff]
      %v4733 = vld [vmem:[#allocation2 + $0xf8] sm:$0xff]
      %v4734 = vld [vmem:[#allocation2 + $0x100] sm:$0xff]
      %v4735 = vld [vmem:[#allocation2 + $0x108] sm:$0xff]
      %v4736 = vld [vmem:[#allocation2 + $0x110] sm:$0xff]
      %v4737 = vld [vmem:[#allocation2 + $0x118] sm:$0xff]
      %v4738 = vld [vmem:[#allocation2 + $0x120] sm:$0xff]
      %v4739 = vld [vmem:[#allocation2 + $0x128] sm:$0xff]
      %v4740 = vld [vmem:[#allocation2 + $0x130] sm:$0xff]
      %v4741 = vld [vmem:[#allocation2 + $0x138] sm:$0xff]
      %v4742 = vld [vmem:[#allocation2 + $0x140] sm:$0xff]
      %v4743 = vld [vmem:[#allocation2 + $0x148] sm:$0xff]
      %v4744 = vld [vmem:[#allocation2 + $0x150] sm:$0xff]
      %v4745 = vld [vmem:[#allocation2 + $0x158] sm:$0xff]
      %v4746 = vld [vmem:[#allocation2 + $0x160] sm:$0xff]
      %v4747 = vld [vmem:[#allocation2 + $0x168] sm:$0xff]
      %v4748 = vld [vmem:[#allocation2 + $0x170] sm:$0xff]
      %v4749 = vld [vmem:[#allocation2 + $0x178] sm:$0xff]
      %v4750 = vld [vmem:[#allocation2 + $0x180] sm:$0xff]
      %v4751 = vld [vmem:[#allocation2 + $0x188] sm:$0xff]
      %v4752 = vld [vmem:[#allocation2 + $0x190] sm:$0xff]
      %v4753 = vld [vmem:[#allocation2 + $0x198] sm:$0xff]
      %v4754 = vld [vmem:[#allocation2 + $0x1a0] sm:$0xff]
      %v4755 = vld [vmem:[#allocation2 + $0x1a8] sm:$0xff]
      %v4756 = vld [vmem:[#allocation2 + $0x1b0] sm:$0xff]
      %v4757 = vld [vmem:[#allocation2 + $0x1b8] sm:$0xff]
      %v4758 = vld [vmem:[#allocation2 + $0x1c0] sm:$0xff]
      %v4759 = vld [vmem:[#allocation2 + $0x1c8] sm:$0xff]
      %v4760 = vld [vmem:[#allocation2 + $0x1d0] sm:$0xff]
      %v4761 = vld [vmem:[#allocation2 + $0x1d8] sm:$0xff]
      %v4762 = vld [vmem:[#allocation2 + $0x1e0] sm:$0xff]
      %v4763 = vld [vmem:[#allocation2 + $0x1e8] sm:$0xff]
      %v4764 = vld [vmem:[#allocation2 + $0x1f0] sm:$0xff]
      %v4765 = vld [vmem:[#allocation2 + $0x1f8] sm:$0xff]
      %v4766 = vld [vmem:[#allocation8] sm:$0xff]
      %v4767 = vld [vmem:[#allocation8 + $0x8] sm:$0xff]
      %v4768 = vld [vmem:[#allocation8 + $0x10] sm:$0xff]
      %v4769 = vld [vmem:[#allocation8 + $0x18] sm:$0xff]
      %v4770 = vld [vmem:[#allocation8 + $0x20] sm:$0xff]
      %v4771 = vld [vmem:[#allocation8 + $0x28] sm:$0xff]
      %v4772 = vld [vmem:[#allocation8 + $0x30] sm:$0xff]
      %v4773 = vld [vmem:[#allocation8 + $0x38] sm:$0xff]
      %v4782 = vlaneseq
      %v4783 = vshrl.u32 %v4782, 7
      %v4784 = vsub.s32 0, %v4783
      %v4785 = vrot.slane %v4766, %v4784
      %v4786 = vlaneseq
      %v4787 = vshrl.u32 %v4786, 7
      %v4788 = vsub.s32 1, %v4787
      %v4789 = vrot.slane %v4766, %v4788
      %v4790 = vlaneseq
      %v4791 = vshrl.u32 %v4790, 7
      %v4792 = vsub.s32 2, %v4791
      %v4793 = vrot.slane %v4766, %v4792
      %v4794 = vlaneseq
      %v4795 = vshrl.u32 %v4794, 7
      %v4796 = vsub.s32 3, %v4795
      %v4797 = vrot.slane %v4766, %v4796
      %v4798 = vlaneseq
      %v4799 = vshrl.u32 %v4798, 7
      %v4800 = vsub.s32 4, %v4799
      %v4801 = vrot.slane %v4766, %v4800
      %v4802 = vlaneseq
      %v4803 = vshrl.u32 %v4802, 7
      %v4804 = vsub.s32 5, %v4803
      %v4805 = vrot.slane %v4766, %v4804
      %v4806 = vlaneseq
      %v4807 = vshrl.u32 %v4806, 7
      %v4808 = vsub.s32 6, %v4807
      %v4809 = vrot.slane %v4766, %v4808
      %v4810 = vlaneseq
      %v4811 = vshrl.u32 %v4810, 7
      %v4812 = vsub.s32 7, %v4811
      %v4813 = vrot.slane %v4766, %v4812
      %v4814 = vlaneseq
      %v4815 = vshrl.u32 %v4814, 7
      %v4816 = vsub.s32 0, %v4815
      %v4817 = vrot.slane %v4767, %v4816
      %v4818 = vlaneseq
      %v4819 = vshrl.u32 %v4818, 7
      %v4820 = vsub.s32 1, %v4819
      %v4821 = vrot.slane %v4767, %v4820
      %v4822 = vlaneseq
      %v4823 = vshrl.u32 %v4822, 7
      %v4824 = vsub.s32 2, %v4823
      %v4825 = vrot.slane %v4767, %v4824
      %v4826 = vlaneseq
      %v4827 = vshrl.u32 %v4826, 7
      %v4828 = vsub.s32 3, %v4827
      %v4829 = vrot.slane %v4767, %v4828
      %v4830 = vlaneseq
      %v4831 = vshrl.u32 %v4830, 7
      %v4832 = vsub.s32 4, %v4831
      %v4833 = vrot.slane %v4767, %v4832
      %v4834 = vlaneseq
      %v4835 = vshrl.u32 %v4834, 7
      %v4836 = vsub.s32 5, %v4835
      %v4837 = vrot.slane %v4767, %v4836
      %v4838 = vlaneseq
      %v4839 = vshrl.u32 %v4838, 7
      %v4840 = vsub.s32 6, %v4839
      %v4841 = vrot.slane %v4767, %v4840
      %v4842 = vlaneseq
      %v4843 = vshrl.u32 %v4842, 7
      %v4844 = vsub.s32 7, %v4843
      %v4845 = vrot.slane %v4767, %v4844
      %v4846 = vlaneseq
      %v4847 = vshrl.u32 %v4846, 7
      %v4848 = vsub.s32 0, %v4847
      %v4849 = vrot.slane %v4768, %v4848
      %v4850 = vlaneseq
      %v4851 = vshrl.u32 %v4850, 7
      %v4852 = vsub.s32 1, %v4851
      %v4853 = vrot.slane %v4768, %v4852
      %v4854 = vlaneseq
      %v4855 = vshrl.u32 %v4854, 7
      %v4856 = vsub.s32 2, %v4855
      %v4857 = vrot.slane %v4768, %v4856
      %v4858 = vlaneseq
      %v4859 = vshrl.u32 %v4858, 7
      %v4860 = vsub.s32 3, %v4859
      %v4861 = vrot.slane %v4768, %v4860
      %v4862 = vlaneseq
      %v4863 = vshrl.u32 %v4862, 7
      %v4864 = vsub.s32 4, %v4863
      %v4865 = vrot.slane %v4768, %v4864
      %v4866 = vlaneseq
      %v4867 = vshrl.u32 %v4866, 7
      %v4868 = vsub.s32 5, %v4867
      %v4869 = vrot.slane %v4768, %v4868
      %v4870 = vlaneseq
      %v4871 = vshrl.u32 %v4870, 7
      %v4872 = vsub.s32 6, %v4871
      %v4873 = vrot.slane %v4768, %v4872
      %v4874 = vlaneseq
      %v4875 = vshrl.u32 %v4874, 7
      %v4876 = vsub.s32 7, %v4875
      %v4877 = vrot.slane %v4768, %v4876
      %v4878 = vlaneseq
      %v4879 = vshrl.u32 %v4878, 7
      %v4880 = vsub.s32 0, %v4879
      %v4881 = vrot.slane %v4769, %v4880
      %v4882 = vlaneseq
      %v4883 = vshrl.u32 %v4882, 7
      %v4884 = vsub.s32 1, %v4883
      %v4885 = vrot.slane %v4769, %v4884
      %v4886 = vlaneseq
      %v4887 = vshrl.u32 %v4886, 7
      %v4888 = vsub.s32 2, %v4887
      %v4889 = vrot.slane %v4769, %v4888
      %v4890 = vlaneseq
      %v4891 = vshrl.u32 %v4890, 7
      %v4892 = vsub.s32 3, %v4891
      %v4893 = vrot.slane %v4769, %v4892
      %v4894 = vlaneseq
      %v4895 = vshrl.u32 %v4894, 7
      %v4896 = vsub.s32 4, %v4895
      %v4897 = vrot.slane %v4769, %v4896
      %v4898 = vlaneseq
      %v4899 = vshrl.u32 %v4898, 7
      %v4900 = vsub.s32 5, %v4899
      %v4901 = vrot.slane %v4769, %v4900
      %v4902 = vlaneseq
      %v4903 = vshrl.u32 %v4902, 7
      %v4904 = vsub.s32 6, %v4903
      %v4905 = vrot.slane %v4769, %v4904
      %v4906 = vlaneseq
      %v4907 = vshrl.u32 %v4906, 7
      %v4908 = vsub.s32 7, %v4907
      %v4909 = vrot.slane %v4769, %v4908
      %v4910 = vlaneseq
      %v4911 = vshrl.u32 %v4910, 7
      %v4912 = vsub.s32 0, %v4911
      %v4913 = vrot.slane %v4770, %v4912
      %v4914 = vlaneseq
      %v4915 = vshrl.u32 %v4914, 7
      %v4916 = vsub.s32 1, %v4915
      %v4917 = vrot.slane %v4770, %v4916
      %v4918 = vlaneseq
      %v4919 = vshrl.u32 %v4918, 7
      %v4920 = vsub.s32 2, %v4919
      %v4921 = vrot.slane %v4770, %v4920
      %v4922 = vlaneseq
      %v4923 = vshrl.u32 %v4922, 7
      %v4924 = vsub.s32 3, %v4923
      %v4925 = vrot.slane %v4770, %v4924
      %v4926 = vlaneseq
      %v4927 = vshrl.u32 %v4926, 7
      %v4928 = vsub.s32 4, %v4927
      %v4929 = vrot.slane %v4770, %v4928
      %v4930 = vlaneseq
      %v4931 = vshrl.u32 %v4930, 7
      %v4932 = vsub.s32 5, %v4931
      %v4933 = vrot.slane %v4770, %v4932
      %v4934 = vlaneseq
      %v4935 = vshrl.u32 %v4934, 7
      %v4936 = vsub.s32 6, %v4935
      %v4937 = vrot.slane %v4770, %v4936
      %v4938 = vlaneseq
      %v4939 = vshrl.u32 %v4938, 7
      %v4940 = vsub.s32 7, %v4939
      %v4941 = vrot.slane %v4770, %v4940
      %v4942 = vlaneseq
      %v4943 = vshrl.u32 %v4942, 7
      %v4944 = vsub.s32 0, %v4943
      %v4945 = vrot.slane %v4771, %v4944
      %v4946 = vlaneseq
      %v4947 = vshrl.u32 %v4946, 7
      %v4948 = vsub.s32 1, %v4947
      %v4949 = vrot.slane %v4771, %v4948
      %v4950 = vlaneseq
      %v4951 = vshrl.u32 %v4950, 7
      %v4952 = vsub.s32 2, %v4951
      %v4953 = vrot.slane %v4771, %v4952
      %v4954 = vlaneseq
      %v4955 = vshrl.u32 %v4954, 7
      %v4956 = vsub.s32 3, %v4955
      %v4957 = vrot.slane %v4771, %v4956
      %v4958 = vlaneseq
      %v4959 = vshrl.u32 %v4958, 7
      %v4960 = vsub.s32 4, %v4959
      %v4961 = vrot.slane %v4771, %v4960
      %v4962 = vlaneseq
      %v4963 = vshrl.u32 %v4962, 7
      %v4964 = vsub.s32 5, %v4963
      %v4965 = vrot.slane %v4771, %v4964
      %v4966 = vlaneseq
      %v4967 = vshrl.u32 %v4966, 7
      %v4968 = vsub.s32 6, %v4967
      %v4969 = vrot.slane %v4771, %v4968
      %v4970 = vlaneseq
      %v4971 = vshrl.u32 %v4970, 7
      %v4972 = vsub.s32 7, %v4971
      %v4973 = vrot.slane %v4771, %v4972
      %v4974 = vlaneseq
      %v4975 = vshrl.u32 %v4974, 7
      %v4976 = vsub.s32 0, %v4975
      %v4977 = vrot.slane %v4772, %v4976
      %v4978 = vlaneseq
      %v4979 = vshrl.u32 %v4978, 7
      %v4980 = vsub.s32 1, %v4979
      %v4981 = vrot.slane %v4772, %v4980
      %v4982 = vlaneseq
      %v4983 = vshrl.u32 %v4982, 7
      %v4984 = vsub.s32 2, %v4983
      %v4985 = vrot.slane %v4772, %v4984
      %v4986 = vlaneseq
      %v4987 = vshrl.u32 %v4986, 7
      %v4988 = vsub.s32 3, %v4987
      %v4989 = vrot.slane %v4772, %v4988
      %v4990 = vlaneseq
      %v4991 = vshrl.u32 %v4990, 7
      %v4992 = vsub.s32 4, %v4991
      %v4993 = vrot.slane %v4772, %v4992
      %v4994 = vlaneseq
      %v4995 = vshrl.u32 %v4994, 7
      %v4996 = vsub.s32 5, %v4995
      %v4997 = vrot.slane %v4772, %v4996
      %v4998 = vlaneseq
      %v4999 = vshrl.u32 %v4998, 7
      %v5000 = vsub.s32 6, %v4999
      %v5001 = vrot.slane %v4772, %v5000
      %v5002 = vlaneseq
      %v5003 = vshrl.u32 %v5002, 7
      %v5004 = vsub.s32 7, %v5003
      %v5005 = vrot.slane %v4772, %v5004
      %v5006 = vlaneseq
      %v5007 = vshrl.u32 %v5006, 7
      %v5008 = vsub.s32 0, %v5007
      %v5009 = vrot.slane %v4773, %v5008
      %v5010 = vlaneseq
      %v5011 = vshrl.u32 %v5010, 7
      %v5012 = vsub.s32 1, %v5011
      %v5013 = vrot.slane %v4773, %v5012
      %v5014 = vlaneseq
      %v5015 = vshrl.u32 %v5014, 7
      %v5016 = vsub.s32 2, %v5015
      %v5017 = vrot.slane %v4773, %v5016
      %v5018 = vlaneseq
      %v5019 = vshrl.u32 %v5018, 7
      %v5020 = vsub.s32 3, %v5019
      %v5021 = vrot.slane %v4773, %v5020
      %v5022 = vlaneseq
      %v5023 = vshrl.u32 %v5022, 7
      %v5024 = vsub.s32 4, %v5023
      %v5025 = vrot.slane %v4773, %v5024
      %v5026 = vlaneseq
      %v5027 = vshrl.u32 %v5026, 7
      %v5028 = vsub.s32 5, %v5027
      %v5029 = vrot.slane %v4773, %v5028
      %v5030 = vlaneseq
      %v5031 = vshrl.u32 %v5030, 7
      %v5032 = vsub.s32 6, %v5031
      %v5033 = vrot.slane %v4773, %v5032
      %v5034 = vlaneseq
      %v5035 = vshrl.u32 %v5034, 7
      %v5036 = vsub.s32 7, %v5035
      %v5037 = vrot.slane %v4773, %v5036
      %v5102 = vadd.f32 %v4702, %v4785
      %v5103 = vadd.f32 %v4703, %v4789
      %v5104 = vadd.f32 %v4704, %v4793
      %v5105 = vadd.f32 %v4705, %v4797
      %v5106 = vadd.f32 %v4706, %v4801
      %v5107 = vadd.f32 %v4707, %v4805
      %v5108 = vadd.f32 %v4708, %v4809
      %v5109 = vadd.f32 %v4709, %v4813
      %v5110 = vadd.f32 %v4710, %v4817
      %v5111 = vadd.f32 %v4711, %v4821
      %v5112 = vadd.f32 %v4712, %v4825
      %v5113 = vadd.f32 %v4713, %v4829
      %v5114 = vadd.f32 %v4714, %v4833
      %v5115 = vadd.f32 %v4715, %v4837
      %v5116 = vadd.f32 %v4716, %v4841
      %v5117 = vadd.f32 %v4717, %v4845
      %v5118 = vadd.f32 %v4718, %v4849
      %v5119 = vadd.f32 %v4719, %v4853
      %v5120 = vadd.f32 %v4720, %v4857
      %v5121 = vadd.f32 %v4721, %v4861
      %v5122 = vadd.f32 %v4722, %v4865
      %v5123 = vadd.f32 %v4723, %v4869
      %v5124 = vadd.f32 %v4724, %v4873
      %v5125 = vadd.f32 %v4725, %v4877
      %v5126 = vadd.f32 %v4726, %v4881
      %v5127 = vadd.f32 %v4727, %v4885
      %v5128 = vadd.f32 %v4728, %v4889
      %v5129 = vadd.f32 %v4729, %v4893
      %v5130 = vadd.f32 %v4730, %v4897
      %v5131 = vadd.f32 %v4731, %v4901
      %v5132 = vadd.f32 %v4732, %v4905
      %v5133 = vadd.f32 %v4733, %v4909
      %v5134 = vadd.f32 %v4734, %v4913
      %v5135 = vadd.f32 %v4735, %v4917
      %v5136 = vadd.f32 %v4736, %v4921
      %v5137 = vadd.f32 %v4737, %v4925
      %v5138 = vadd.f32 %v4738, %v4929
      %v5139 = vadd.f32 %v4739, %v4933
      %v5140 = vadd.f32 %v4740, %v4937
      %v5141 = vadd.f32 %v4741, %v4941
      %v5142 = vadd.f32 %v4742, %v4945
      %v5143 = vadd.f32 %v4743, %v4949
      %v5144 = vadd.f32 %v4744, %v4953
      %v5145 = vadd.f32 %v4745, %v4957
      %v5146 = vadd.f32 %v4746, %v4961
      %v5147 = vadd.f32 %v4747, %v4965
      %v5148 = vadd.f32 %v4748, %v4969
      %v5149 = vadd.f32 %v4749, %v4973
      %v5150 = vadd.f32 %v4750, %v4977
      %v5151 = vadd.f32 %v4751, %v4981
      %v5152 = vadd.f32 %v4752, %v4985
      %v5153 = vadd.f32 %v4753, %v4989
      %v5154 = vadd.f32 %v4754, %v4993
      %v5155 = vadd.f32 %v4755, %v4997
      %v5156 = vadd.f32 %v4756, %v5001
      %v5157 = vadd.f32 %v4757, %v5005
      %v5158 = vadd.f32 %v4758, %v5009
      %v5159 = vadd.f32 %v4759, %v5013
      %v5160 = vadd.f32 %v4760, %v5017
      %v5161 = vadd.f32 %v4761, %v5021
      %v5162 = vadd.f32 %v4762, %v5025
      %v5163 = vadd.f32 %v4763, %v5029
      %v5164 = vadd.f32 %v4764, %v5033
      %v5165 = vadd.f32 %v4765, %v5037
      %v5166 = vmax.f32 %v5102, 0.0
      %v5167 = vmax.f32 %v5103, 0.0
      %v5168 = vmax.f32 %v5104, 0.0
      %v5169 = vmax.f32 %v5105, 0.0
      %v5170 = vmax.f32 %v5106, 0.0
      %v5171 = vmax.f32 %v5107, 0.0
      %v5172 = vmax.f32 %v5108, 0.0
      %v5173 = vmax.f32 %v5109, 0.0
      %v5174 = vmax.f32 %v5110, 0.0
      %v5175 = vmax.f32 %v5111, 0.0
      %v5176 = vmax.f32 %v5112, 0.0
      %v5177 = vmax.f32 %v5113, 0.0
      %v5178 = vmax.f32 %v5114, 0.0
      %v5179 = vmax.f32 %v5115, 0.0
      %v5180 = vmax.f32 %v5116, 0.0
      %v5181 = vmax.f32 %v5117, 0.0
      %v5182 = vmax.f32 %v5118, 0.0
      %v5183 = vmax.f32 %v5119, 0.0
      %v5184 = vmax.f32 %v5120, 0.0
      %v5185 = vmax.f32 %v5121, 0.0
      %v5186 = vmax.f32 %v5122, 0.0
      %v5187 = vmax.f32 %v5123, 0.0
      %v5188 = vmax.f32 %v5124, 0.0
      %v5189 = vmax.f32 %v5125, 0.0
      %v5190 = vmax.f32 %v5126, 0.0
      %v5191 = vmax.f32 %v5127, 0.0
      %v5192 = vmax.f32 %v5128, 0.0
      %v5193 = vmax.f32 %v5129, 0.0
      %v5194 = vmax.f32 %v5130, 0.0
      %v5195 = vmax.f32 %v5131, 0.0
      %v5196 = vmax.f32 %v5132, 0.0
      %v5197 = vmax.f32 %v5133, 0.0
      %v5198 = vmax.f32 %v5134, 0.0
      %v5199 = vmax.f32 %v5135, 0.0
      %v5200 = vmax.f32 %v5136, 0.0
      %v5201 = vmax.f32 %v5137, 0.0
      %v5202 = vmax.f32 %v5138, 0.0
      %v5203 = vmax.f32 %v5139, 0.0
      %v5204 = vmax.f32 %v5140, 0.0
      %v5205 = vmax.f32 %v5141, 0.0
      %v5206 = vmax.f32 %v5142, 0.0
      %v5207 = vmax.f32 %v5143, 0.0
      %v5208 = vmax.f32 %v5144, 0.0
      %v5209 = vmax.f32 %v5145, 0.0
      %v5210 = vmax.f32 %v5146, 0.0
      %v5211 = vmax.f32 %v5147, 0.0
      %v5212 = vmax.f32 %v5148, 0.0
      %v5213 = vmax.f32 %v5149, 0.0
      %v5214 = vmax.f32 %v5150, 0.0
      %v5215 = vmax.f32 %v5151, 0.0
      %v5216 = vmax.f32 %v5152, 0.0
      %v5217 = vmax.f32 %v5153, 0.0
      %v5218 = vmax.f32 %v5154, 0.0
      %v5219 = vmax.f32 %v5155, 0.0
      %v5220 = vmax.f32 %v5156, 0.0
      %v5221 = vmax.f32 %v5157, 0.0
      %v5222 = vmax.f32 %v5158, 0.0
      %v5223 = vmax.f32 %v5159, 0.0
      %v5224 = vmax.f32 %v5160, 0.0
      %v5225 = vmax.f32 %v5161, 0.0
      %v5226 = vmax.f32 %v5162, 0.0
      %v5227 = vmax.f32 %v5163, 0.0
      %v5228 = vmax.f32 %v5164, 0.0
      %v5229 = vmax.f32 %v5165, 0.0
      %5230 = vst [vmem:[#allocation9] sm:$0xff] %v5166
      %5231 = vst [vmem:[#allocation9 + $0x8] sm:$0xff] %v5167
      %5232 = vst [vmem:[#allocation9 + $0x10] sm:$0xff] %v5168
      %5233 = vst [vmem:[#allocation9 + $0x18] sm:$0xff] %v5169
      %5234 = vst [vmem:[#allocation9 + $0x20] sm:$0xff] %v5170
      %5235 = vst [vmem:[#allocation9 + $0x28] sm:$0xff] %v5171
      %5236 = vst [vmem:[#allocation9 + $0x30] sm:$0xff] %v5172
      %5237 = vst [vmem:[#allocation9 + $0x38] sm:$0xff] %v5173
      %5238 = vst [vmem:[#allocation9 + $0x40] sm:$0xff] %v5174
      %5239 = vst [vmem:[#allocation9 + $0x48] sm:$0xff] %v5175
      %5240 = vst [vmem:[#allocation9 + $0x50] sm:$0xff] %v5176
      %5241 = vst [vmem:[#allocation9 + $0x58] sm:$0xff] %v5177
      %5242 = vst [vmem:[#allocation9 + $0x60] sm:$0xff] %v5178
      %5243 = vst [vmem:[#allocation9 + $0x68] sm:$0xff] %v5179
      %5244 = vst [vmem:[#allocation9 + $0x70] sm:$0xff] %v5180
      %5245 = vst [vmem:[#allocation9 + $0x78] sm:$0xff] %v5181
      %5246 = vst [vmem:[#allocation9 + $0x80] sm:$0xff] %v5182
      %5247 = vst [vmem:[#allocation9 + $0x88] sm:$0xff] %v5183
      %5248 = vst [vmem:[#allocation9 + $0x90] sm:$0xff] %v5184
      %5249 = vst [vmem:[#allocation9 + $0x98] sm:$0xff] %v5185
      %5250 = vst [vmem:[#allocation9 + $0xa0] sm:$0xff] %v5186
      %5251 = vst [vmem:[#allocation9 + $0xa8] sm:$0xff] %v5187
      %5252 = vst [vmem:[#allocation9 + $0xb0] sm:$0xff] %v5188
      %5253 = vst [vmem:[#allocation9 + $0xb8] sm:$0xff] %v5189
      %5254 = vst [vmem:[#allocation9 + $0xc0] sm:$0xff] %v5190
      %5255 = vst [vmem:[#allocation9 + $0xc8] sm:$0xff] %v5191
      %5256 = vst [vmem:[#allocation9 + $0xd0] sm:$0xff] %v5192
      %5257 = vst [vmem:[#allocation9 + $0xd8] sm:$0xff] %v5193
      %5258 = vst [vmem:[#allocation9 + $0xe0] sm:$0xff] %v5194
      %5259 = vst [vmem:[#allocation9 + $0xe8] sm:$0xff] %v5195
      %5260 = vst [vmem:[#allocation9 + $0xf0] sm:$0xff] %v5196
      %5261 = vst [vmem:[#allocation9 + $0xf8] sm:$0xff] %v5197
      %5262 = vst [vmem:[#allocation9 + $0x100] sm:$0xff] %v5198
      %5263 = vst [vmem:[#allocation9 + $0x108] sm:$0xff] %v5199
      %5264 = vst [vmem:[#allocation9 + $0x110] sm:$0xff] %v5200
      %5265 = vst [vmem:[#allocation9 + $0x118] sm:$0xff] %v5201
      %5266 = vst [vmem:[#allocation9 + $0x120] sm:$0xff] %v5202
      %5267 = vst [vmem:[#allocation9 + $0x128] sm:$0xff] %v5203
      %5268 = vst [vmem:[#allocation9 + $0x130] sm:$0xff] %v5204
      %5269 = vst [vmem:[#allocation9 + $0x138] sm:$0xff] %v5205
      %5270 = vst [vmem:[#allocation9 + $0x140] sm:$0xff] %v5206
      %5271 = vst [vmem:[#allocation9 + $0x148] sm:$0xff] %v5207
      %5272 = vst [vmem:[#allocation9 + $0x150] sm:$0xff] %v5208
      %5273 = vst [vmem:[#allocation9 + $0x158] sm:$0xff] %v5209
      %5274 = vst [vmem:[#allocation9 + $0x160] sm:$0xff] %v5210
      %5275 = vst [vmem:[#allocation9 + $0x168] sm:$0xff] %v5211
      %5276 = vst [vmem:[#allocation9 + $0x170] sm:$0xff] %v5212
      %5277 = vst [vmem:[#allocation9 + $0x178] sm:$0xff] %v5213
      %5278 = vst [vmem:[#allocation9 + $0x180] sm:$0xff] %v5214
      %5279 = vst [vmem:[#allocation9 + $0x188] sm:$0xff] %v5215
      %5280 = vst [vmem:[#allocation9 + $0x190] sm:$0xff] %v5216
      %5281 = vst [vmem:[#allocation9 + $0x198] sm:$0xff] %v5217
      %5282 = vst [vmem:[#allocation9 + $0x1a0] sm:$0xff] %v5218
      %5283 = vst [vmem:[#allocation9 + $0x1a8] sm:$0xff] %v5219
      %5284 = vst [vmem:[#allocation9 + $0x1b0] sm:$0xff] %v5220
      %5285 = vst [vmem:[#allocation9 + $0x1b8] sm:$0xff] %v5221
      %5286 = vst [vmem:[#allocation9 + $0x1c0] sm:$0xff] %v5222
      %5287 = vst [vmem:[#allocation9 + $0x1c8] sm:$0xff] %v5223
      %5288 = vst [vmem:[#allocation9 + $0x1d0] sm:$0xff] %v5224
      %5289 = vst [vmem:[#allocation9 + $0x1d8] sm:$0xff] %v5225
      %5290 = vst [vmem:[#allocation9 + $0x1e0] sm:$0xff] %v5226
      %5291 = vst [vmem:[#allocation9 + $0x1e8] sm:$0xff] %v5227
      %5292 = vst [vmem:[#allocation9 + $0x1f0] sm:$0xff] %v5228
      %5293 = vst [vmem:[#allocation9 + $0x1f8] sm:$0xff] %v5229
    $region33: #{tpu_custom_call.1} parent=1 // pred_fallthru
      _
    // Predicated region
    $region34: #{tpu_custom_call.1} parent=1 // pred_check
      _
    $region35: #{tpu_custom_call.1} parent=1 // pred_check_branch
      %5295 = sbr.rel (0) target = $region37
    $region36: #{tpu_custom_call.1} parent=1 // pred_region
      %s5297 = ssub.s32 8192, 8192
      %5298 = vsyncadd [#allocation5], %s5297
      %s5300 = sshll.u32 [#allocation9], 4
      %s5301 = int_to_ptr.vmem [resolvable:$true] %s5300
      %5303 = dma.vmem_to_hbm [thread:$0]  %s5301, 8192, %s3, [#allocation5]
    $region37: #{tpu_custom_call.1} parent=1 // pred_fallthru
      _
    // Predicated region
    $region38: #{tpu_custom_call.1} parent=1 // pred_check
      _
    $region39: #{tpu_custom_call.1} parent=1 // pred_check_branch
      %5305 = sbr.rel (0) target = $region41
    $region40: #{tpu_custom_call.1} parent=1 // pred_region
      %5306 = dma.done [#allocation5], 8192
    $region41: #{tpu_custom_call.1} parent=1 // pred_fallthru
      _
    %5307 = vsyncpa [#allocation4], 1
    %5308 = vsyncpa [#allocation7], 1
    %5309 = vsyncpa [#allocation5], 1

</llo_original>
